<compile_context>
chip_gen: v6e
topology: v6e:2x2x1
jax: 0.10.0
libtpu: 0.0.40
codegen_flags: <defaults>
</compile_context>

<pallas_src>
import functools
import numpy as np
import jax
import jax.numpy as jnp
from jax.experimental import pallas as pl
from jax.experimental.pallas import tpu as pltpu

EPS = 1e-5
LANE = 128


def _round_up(x, m):
    return (x + m - 1) // m * m


def _largest_divisor_le(n, cap):
    cap = max(1, min(n, cap))
    for d in range(cap, 0, -1):
        if n % d == 0:
            return d
    return 1


def _pick_row_tile(H, W):
    # Target <= ~1024 output rows per tile (small per-block VMEM, multi-step
    # pipeline), but prefer >=2 row tiles so the grid can be pipelined / split
    # across cores.
    cap = max(1, 1024 // max(W, 1))
    th = _largest_divisor_le(H, cap)
    if th == H and H > 1:
        th = _largest_divisor_le(H, max(1, H // 2))
    return th


# ---------------------------------------------------------------------------
# Bilinear 2x upsample (nn.Upsample(scale_factor=2, mode='bilinear')), NHWC
# ---------------------------------------------------------------------------
def _upsample2x_kernel(x_ref, o_ref):
    # x_ref: (1, h, w, C); o_ref: (4, h, w, C)  -- four output parity planes
    x = x_ref[0]
    xp = jnp.concatenate([x[:1], x[:-1]], axis=0)        # x[i-1], edge-clamped
    xn = jnp.concatenate([x[1:], x[-1:]], axis=0)        # x[i+1], edge-clamped
    rows = (0.25 * xp + 0.75 * x,                        # even output rows
            0.75 * x + 0.25 * xn)                        # odd output rows
    for a in range(2):
        r = rows[a]
        cl = jnp.concatenate([r[:, :1], r[:, :-1]], axis=1)   # left, clamped
        cr = jnp.concatenate([r[:, 1:], r[:, -1:]], axis=1)   # right, clamped
        o_ref[2 * a + 0] = (0.25 * cl + 0.75 * r).astype(o_ref.dtype)
        o_ref[2 * a + 1] = (0.75 * r + 0.25 * cr).astype(o_ref.dtype)


def upsample_bilinear_2x_nhwc(x):
    # x: (N, h, w, C) -> (N, 2h, 2w, C); PyTorch align_corners=False semantics.
    N, h, w, C = x.shape
    parity = pl.pallas_call(
        _upsample2x_kernel,
        out_shape=jax.ShapeDtypeStruct((4 * N, h, w, C), x.dtype),
        grid=(N,),
        in_specs=[pl.BlockSpec((1, h, w, C), lambda n: (n, 0, 0, 0))],
        out_specs=pl.BlockSpec((4, h, w, C), lambda n: (n, 0, 0, 0)),
        compiler_params=pltpu.CompilerParams(dimension_semantics=("parallel",)),
    )(x)
    parity = parity.reshape(N, 2, 2, h, w, C)
    # interleave parities: out[n, 2i+a, 2j+b, c] = parity[n, a, b, i, j, c]
    return jnp.transpose(parity, (0, 3, 1, 4, 2, 5)).reshape(N, 2 * h, 2 * w, C)


# ---------------------------------------------------------------------------
# Conv2d(3x3, pad=1) + BatchNorm2d (training-mode batch stats) + ReLU, NHWC
# ---------------------------------------------------------------------------
def _conv3x3_stats_kernel(x_ref, w_ref, b_ref, y_ref, stat_ref, *, W, Wp):
    # x_ref: (1, 1, F, Cin)  flattened padded rows of one row-tile (with halo)
    # w_ref: (9, Cin, Cp)    b_ref: (1, Cp)
    # y_ref: (1, 1, Mw, Cp)  "wide" conv+bias output (Wp columns per row)
    # stat_ref: (1, 1, 2, Cp)  per-tile [sum, sumsq] over valid pixels
    Mw = y_ref.shape[2]
    Cp = y_ref.shape[3]
    acc = jnp.zeros((Mw, Cp), jnp.float32)
    for kh in range(3):                         # 9 shifted reads, one accumulator
        for kw in range(3):
            off = kh * Wp + kw
            tap = x_ref[0, 0, off:off + Mw, :]                 # (Mw, Cin)
            acc = acc + jnp.dot(tap, w_ref[kh * 3 + kw],
                                preferred_element_type=jnp.float32)
    acc = acc + b_ref[...]
    y_ref[0, 0] = acc.astype(y_ref.dtype)
    # mask out the 2 junk columns per row before accumulating BN partials
    col = jax.lax.rem(jax.lax.broadcasted_iota(jnp.int32, (Mw, 1), 0), Wp)
    m = jnp.where(col < W, acc, 0.0)
    s = jnp.sum(m, axis=0, keepdims=True)
    ss = jnp.sum(m * m, axis=0, keepdims=True)
    stat_ref[0, 0] = jnp.concatenate([s, ss], axis=0)


def _scale_shift_relu_kernel(y_ref, sc_ref, sh_ref, o_ref):
    o_ref[...] = jnp.maximum(y_ref[...] * sc_ref[...] + sh_ref[...],
                             0.0).astype(o_ref.dtype)


def conv3x3_bn_relu_nhwc(x, w_oihw, b, gamma, beta):
    # x: (N, H, W, Cin) -> NCHW output (N, Cout, H, W)
    N, H, W, Cin = x.shape
    Cout = w_oihw.shape[0]
    Cp = _round_up(Cout, LANE)                  # lane-dense output stores
    TH = _pick_row_tile(H, W)
    T = H // TH
    Wp = W + 2
    Mw = TH * Wp
    F = _round_up((TH + 2) * Wp + 2, 8)

    # Row tiles with a 1-row halo, flattened to (rows*Wp, Cin) -- wrapper glue,
    # ~1x input traffic (+2/TH halo) instead of a 9x materialized im2col.
    xpad = jnp.pad(x, ((0, 0), (1, 1), (1, 1), (0, 0)))
    tiles = [xpad[:, t * TH:t * TH + TH + 2].reshape(N, (TH + 2) * Wp, Cin)
             for t in range(T)]
    xt = jnp.stack(tiles, axis=1)                               # (N, T, ., Cin)
    xt = jnp.pad(xt, ((0, 0), (0, 0), (0, F - (TH + 2) * Wp), (0, 0)))

    w9 = jnp.transpose(w_oihw, (2, 3, 1, 0)).reshape(9, Cin, Cout)
    w9 = jnp.pad(w9, ((0, 0), (0, 0), (0, Cp - Cout)))
    b2 = jnp.pad(b.reshape(1, Cout), ((0, 0), (0, Cp - Cout)))

    kernel = functools.partial(_conv3x3_stats_kernel, W=W, Wp=Wp)
    flops = 2 * N * T * Mw * Cin * Cp * 9
    bytes_accessed = 4 * (xt.size + w9.size + b2.size
                          + N * T * Mw * Cp + N * T * 2 * Cp)
    y, stats = pl.pallas_call(
        kernel,
        out_shape=(jax.ShapeDtypeStruct((N, T, Mw, Cp), jnp.float32),
                   jax.ShapeDtypeStruct((N, T, 2, Cp), jnp.float32)),
        grid=(N, T),
        in_specs=[
            pl.BlockSpec((1, 1, F, Cin), lambda n, t: (n, t, 0, 0)),
            pl.BlockSpec((9, Cin, Cp), lambda n, t: (0, 0, 0)),
            pl.BlockSpec((1, Cp), lambda n, t: (0, 0)),
        ],
        out_specs=(
            pl.BlockSpec((1, 1, Mw, Cp), lambda n, t: (n, t, 0, 0)),
            pl.BlockSpec((1, 1, 2, Cp), lambda n, t: (n, t, 0, 0)),
        ),
        compiler_params=pltpu.CompilerParams(
            dimension_semantics=("parallel", "parallel")),
        cost_estimate=pl.CostEstimate(flops=flops, transcendentals=0,
                                      bytes_accessed=bytes_accessed),
    )(xt, w9, b2)

    # BatchNorm batch statistics from per-tile partials (tiny reduction), then
    # fold mean/var/gamma/beta into one per-channel scale & shift for pass 2.
    cnt = float(N * H * W)
    ssum = jnp.sum(stats[:, :, 0, :], axis=(0, 1))
    ssq = jnp.sum(stats[:, :, 1, :], axis=(0, 1))
    mean = ssum / cnt
    var = jnp.maximum(ssq / cnt - mean * mean, 0.0)
    gamma_p = jnp.pad(gamma, (0, Cp - Cout))
    beta_p = jnp.pad(beta, (0, Cp - Cout))
    scale = gamma_p * jax.lax.rsqrt(var + EPS)
    shift = beta_p - mean * scale
    scale = scale.reshape(1, Cp)
    shift = shift.reshape(1, Cp)

    out = pl.pallas_call(
        _scale_shift_relu_kernel,
        out_shape=jax.ShapeDtypeStruct((N, T, Mw, Cp), jnp.float32),
        grid=(N, T),
        in_specs=[
            pl.BlockSpec((1, 1, Mw, Cp), lambda n, t: (n, t, 0, 0)),
            pl.BlockSpec((1, Cp), lambda n, t: (0, 0)),
            pl.BlockSpec((1, Cp), lambda n, t: (0, 0)),
        ],
        out_specs=pl.BlockSpec((1, 1, Mw, Cp), lambda n, t: (n, t, 0, 0)),
        compiler_params=pltpu.CompilerParams(
            dimension_semantics=("parallel", "parallel")),
    )(y, scale, shift)

    out = out.reshape(N, T, TH, Wp, Cp)[:, :, :, :W, :Cout]     # strip junk/pad
    out = out.reshape(N, H, W, Cout)
    return jnp.transpose(out, (0, 3, 1, 2))                     # back to NCHW


# ---------------------------------------------------------------------------
# Up.forward
# ---------------------------------------------------------------------------
def up_forward(x1, x2, params):
    N, C1, h, w = x1.shape
    x1_nhwc = jnp.transpose(x1, (0, 2, 3, 1))                   # boundary glue
    x1u = upsample_bilinear_2x_nhwc(x1_nhwc)                    # (N, 2h, 2w, C1)
    H, W = 2 * h, 2 * w
    x2_nhwc = jnp.transpose(x2, (0, 2, 3, 1))
    dX = H - x2.shape[2]
    dY = W - x2.shape[3]
    # F.pad(x2, (dX//2, int(dX/2), dY//2, int(dY/2))): last dim (W) gets the
    # "X" difference, dim -2 (H) gets the "Y" difference, as in the PyTorch code.
    x2p = jnp.pad(x2_nhwc, ((0, 0),
                            (dY // 2, int(dY / 2)),
                            (dX // 2, int(dX / 2)),
                            (0, 0)))
    xcat = jnp.concatenate([x2p, x1u], axis=-1)                 # cat([x2, x1], C)
    return conv3x3_bn_relu_nhwc(xcat, params["w"], params["b"],
                                params["gamma"], params["beta"])


def init_up_params(key, channel_in, channel_out):
    k1, k2, k3, k4 = jax.random.split(key, 4)
    bound = 1.0 / np.sqrt(channel_in * 9)
    w = jax.random.uniform(k1, (channel_out, channel_in, 3, 3), jnp.float32,
                           -bound, bound)
    b = jax.random.uniform(k2, (channel_out,), jnp.float32, -bound, bound)
    gamma = 1.0 + 0.1 * jax.random.normal(k3, (channel_out,), jnp.float32)
    beta = 0.1 * jax.random.normal(k4, (channel_out,), jnp.float32)
    # TODO(synk): BatchNorm running-stat (running_mean/var) buffer updates are
    # not modeled; they do not affect the training-mode forward output.
    return {"w": w, "b": b, "gamma": gamma, "beta": beta}


# ---------------------------------------------------------------------------
# Pure-JAX reference for validation.
# ---------------------------------------------------------------------------
def _bilinear2x_matrix(n_in: int) -> np.ndarray:
    n_out = 2 * n_in
    A = np.zeros((n_out, n_in), dtype=np.float32)
    for o in range(n_out):
        src = (o + 0.5) * 0.5 - 0.5
        if src < 0.0:
            src = 0.0
        i0 = int(np.floor(src))
        lam = src - i0
        i1 = min(i0 + 1, n_in - 1)
        A[o, i0] += 1.0 - lam
        A[o, i1] += lam
    return A


def ref_forward(x1, x2, params):
    N, C1, h, w = x1.shape
    ah = jnp.asarray(_bilinear2x_matrix(h))
    awt = jnp.asarray(_bilinear2x_matrix(w).T)
    x1u = jnp.einsum('Hh,nchw,wW->ncHW', ah, x1, awt)
    dX = x1u.shape[2] - x2.shape[2]
    dY = x1u.shape[3] - x2.shape[3]
    x2p = jnp.pad(x2, ((0, 0), (0, 0),
                       (dY // 2, int(dY / 2)), (dX // 2, int(dX / 2))))
    x = jnp.concatenate([x2p, x1u], axis=1)
    y = jax.lax.conv_general_dilated(x, params["w"], (1, 1), ((1, 1), (1, 1)),
                                     dimension_numbers=('NCHW', 'OIHW', 'NCHW'))
    y = y + params["b"].reshape(1, -1, 1, 1)
    mean = jnp.mean(y, axis=(0, 2, 3), keepdims=True)
    var = jnp.mean(jnp.square(y - mean), axis=(0, 2, 3), keepdims=True)
    y = (y - mean) * jax.lax.rsqrt(var + EPS)
    y = y * params["gamma"].reshape(1, -1, 1, 1) + params["beta"].reshape(1, -1, 1, 1)
    return jnp.maximum(y, 0.0)


if __name__ == "__main__":
    key = jax.random.PRNGKey(0)
    kx1, kx2, kp = jax.random.split(key, 3)
    N, C1, C2, h, w = 2, 4, 4, 8, 8
    channel_in, channel_out = C1 + C2, 8
    x1 = jax.random.normal(kx1, (N, C1, h, w), jnp.float32)          # low-res feature
    x2 = jax.random.normal(kx2, (N, C2, 2 * h, 2 * w), jnp.float32)  # skip connection

    params = init_up_params(kp, channel_in, channel_out)

    out = jax.block_until_ready(jax.jit(up_forward)(x1, x2, params))
    assert out.shape == (N, channel_out, 2 * h, 2 * w), out.shape

    ref = ref_forward(x1, x2, params)
    np.testing.assert_allclose(np.asarray(out), np.asarray(ref),
                               rtol=1e-4, atol=1e-4)
    print("KERNEL_OK")
</pallas_src>

<mosaic_0001>
module attributes {stable_mosaic.version = 11 : i64} {
  func.func @_upsample2x_kernel(%arg0: i32, %arg1: memref<1x8x8x4xf32, #tpu.memory_space<vmem>>, %arg2: memref<4x8x8x4xf32, #tpu.memory_space<vmem>>) attributes {dimension_semantics = [#tpu.dimension_semantics<parallel>], iteration_bounds = array<i64: 2>, scalar_prefetch = 0 : i64, scratch_operands = 0 : i64, tpu.core_type = #tpu.core_type<tc>, window_params = [{transform_indices = @transform_0, window_bounds = array<i64: 1, 8, 8, 4>}, {transform_indices = @transform_1, window_bounds = array<i64: 4, 8, 8, 4>}]} {
    %c0 = arith.constant 0 : index
    %c0_0 = arith.constant 0 : index
    %c0_1 = arith.constant 0 : index
    %c0_2 = arith.constant 0 : index
    %0 = vector.load %arg1[%c0, %c0_0, %c0_1, %c0_2] : memref<1x8x8x4xf32, #tpu.memory_space<vmem>>, vector<1x8x8x4xf32>
    %1 = vector.shape_cast %0 : vector<1x8x8x4xf32> to vector<8x8x4xf32>
    %2 = vector.extract_strided_slice %1 {offsets = [0, 0, 0], sizes = [1, 8, 4], strides = [1, 1, 1]} : vector<8x8x4xf32> to vector<1x8x4xf32>
    %3 = vector.extract_strided_slice %1 {offsets = [0, 0, 0], sizes = [7, 8, 4], strides = [1, 1, 1]} : vector<8x8x4xf32> to vector<7x8x4xf32>
    %4 = tpu.concatenate %2, %3 in 0 : vector<1x8x4xf32>, vector<7x8x4xf32> -> vector<8x8x4xf32>
    %5 = vector.extract_strided_slice %1 {offsets = [1, 0, 0], sizes = [7, 8, 4], strides = [1, 1, 1]} : vector<8x8x4xf32> to vector<7x8x4xf32>
    %6 = vector.extract_strided_slice %1 {offsets = [7, 0, 0], sizes = [1, 8, 4], strides = [1, 1, 1]} : vector<8x8x4xf32> to vector<1x8x4xf32>
    %7 = tpu.concatenate %5, %6 in 0 : vector<7x8x4xf32>, vector<1x8x4xf32> -> vector<8x8x4xf32>
    %cst = arith.constant 2.500000e-01 : f32
    %8 = vector.broadcast %cst : f32 to vector<8x8x4xf32>
    %9 = arith.mulf %8, %4 : vector<8x8x4xf32>
    %cst_3 = arith.constant 7.500000e-01 : f32
    %10 = vector.broadcast %cst_3 : f32 to vector<8x8x4xf32>
    %11 = arith.mulf %10, %1 : vector<8x8x4xf32>
    %12 = arith.addf %9, %11 : vector<8x8x4xf32>
    %cst_4 = arith.constant 7.500000e-01 : f32
    %13 = vector.broadcast %cst_4 : f32 to vector<8x8x4xf32>
    %14 = arith.mulf %13, %1 : vector<8x8x4xf32>
    %cst_5 = arith.constant 2.500000e-01 : f32
    %15 = vector.broadcast %cst_5 : f32 to vector<8x8x4xf32>
    %16 = arith.mulf %15, %7 : vector<8x8x4xf32>
    %17 = arith.addf %14, %16 : vector<8x8x4xf32>
    %18 = vector.extract_strided_slice %12 {offsets = [0, 0, 0], sizes = [8, 1, 4], strides = [1, 1, 1]} : vector<8x8x4xf32> to vector<8x1x4xf32>
    %19 = vector.extract_strided_slice %12 {offsets = [0, 0, 0], sizes = [8, 7, 4], strides = [1, 1, 1]} : vector<8x8x4xf32> to vector<8x7x4xf32>
    %20 = tpu.concatenate %18, %19 in 1 : vector<8x1x4xf32>, vector<8x7x4xf32> -> vector<8x8x4xf32>
    %21 = vector.extract_strided_slice %12 {offsets = [0, 1, 0], sizes = [8, 7, 4], strides = [1, 1, 1]} : vector<8x8x4xf32> to vector<8x7x4xf32>
    %22 = vector.extract_strided_slice %12 {offsets = [0, 7, 0], sizes = [8, 1, 4], strides = [1, 1, 1]} : vector<8x8x4xf32> to vector<8x1x4xf32>
    %23 = tpu.concatenate %21, %22 in 1 : vector<8x7x4xf32>, vector<8x1x4xf32> -> vector<8x8x4xf32>
    %cst_6 = arith.constant 2.500000e-01 : f32
    %24 = vector.broadcast %cst_6 : f32 to vector<8x8x4xf32>
    %25 = arith.mulf %24, %20 : vector<8x8x4xf32>
    %cst_7 = arith.constant 7.500000e-01 : f32
    %26 = vector.broadcast %cst_7 : f32 to vector<8x8x4xf32>
    %27 = arith.mulf %26, %12 : vector<8x8x4xf32>
    %28 = arith.addf %25, %27 : vector<8x8x4xf32>
    %c0_8 = arith.constant 0 : index
    %c0_9 = arith.constant 0 : index
    %c0_10 = arith.constant 0 : index
    %c0_11 = arith.constant 0 : index
    %29 = vector.load %arg2[%c0_8, %c0_9, %c0_10, %c0_11] : memref<4x8x8x4xf32, #tpu.memory_space<vmem>>, vector<1x8x8x4xf32>
    %30 = vector.shape_cast %29 : vector<1x8x8x4xf32> to vector<8x8x4xf32>
    %31 = vector.shape_cast %28 : vector<8x8x4xf32> to vector<1x8x8x4xf32>
    tpu.vector_store %arg2[%c0_8, %c0_9, %c0_10, %c0_11], %31 {strides = array<i32>} : memref<4x8x8x4xf32, #tpu.memory_space<vmem>>, vector<1x8x8x4xf32>,
    %cst_12 = arith.constant 7.500000e-01 : f32
    %32 = vector.broadcast %cst_12 : f32 to vector<8x8x4xf32>
    %33 = arith.mulf %32, %12 : vector<8x8x4xf32>
    %cst_13 = arith.constant 2.500000e-01 : f32
    %34 = vector.broadcast %cst_13 : f32 to vector<8x8x4xf32>
    %35 = arith.mulf %34, %23 : vector<8x8x4xf32>
    %36 = arith.addf %33, %35 : vector<8x8x4xf32>
    %c1 = arith.constant 1 : index
    %c0_14 = arith.constant 0 : index
    %c0_15 = arith.constant 0 : index
    %c0_16 = arith.constant 0 : index
    %37 = vector.load %arg2[%c1, %c0_14, %c0_15, %c0_16] : memref<4x8x8x4xf32, #tpu.memory_space<vmem>>, vector<1x8x8x4xf32>
    %38 = vector.shape_cast %37 : vector<1x8x8x4xf32> to vector<8x8x4xf32>
    %39 = vector.shape_cast %36 : vector<8x8x4xf32> to vector<1x8x8x4xf32>
    tpu.vector_store %arg2[%c1, %c0_14, %c0_15, %c0_16], %39 {strides = array<i32>} : memref<4x8x8x4xf32, #tpu.memory_space<vmem>>, vector<1x8x8x4xf32>,
    %40 = vector.extract_strided_slice %17 {offsets = [0, 0, 0], sizes = [8, 1, 4], strides = [1, 1, 1]} : vector<8x8x4xf32> to vector<8x1x4xf32>
    %41 = vector.extract_strided_slice %17 {offsets = [0, 0, 0], sizes = [8, 7, 4], strides = [1, 1, 1]} : vector<8x8x4xf32> to vector<8x7x4xf32>
    %42 = tpu.concatenate %40, %41 in 1 : vector<8x1x4xf32>, vector<8x7x4xf32> -> vector<8x8x4xf32>
    %43 = vector.extract_strided_slice %17 {offsets = [0, 1, 0], sizes = [8, 7, 4], strides = [1, 1, 1]} : vector<8x8x4xf32> to vector<8x7x4xf32>
    %44 = vector.extract_strided_slice %17 {offsets = [0, 7, 0], sizes = [8, 1, 4], strides = [1, 1, 1]} : vector<8x8x4xf32> to vector<8x1x4xf32>
    %45 = tpu.concatenate %43, %44 in 1 : vector<8x7x4xf32>, vector<8x1x4xf32> -> vector<8x8x4xf32>
    %cst_17 = arith.constant 2.500000e-01 : f32
    %46 = vector.broadcast %cst_17 : f32 to vector<8x8x4xf32>
    %47 = arith.mulf %46, %42 : vector<8x8x4xf32>
    %cst_18 = arith.constant 7.500000e-01 : f32
    %48 = vector.broadcast %cst_18 : f32 to vector<8x8x4xf32>
    %49 = arith.mulf %48, %17 : vector<8x8x4xf32>
    %50 = arith.addf %47, %49 : vector<8x8x4xf32>
    %c2 = arith.constant 2 : index
    %c0_19 = arith.constant 0 : index
    %c0_20 = arith.constant 0 : index
    %c0_21 = arith.constant 0 : index
    %51 = vector.load %arg2[%c2, %c0_19, %c0_20, %c0_21] : memref<4x8x8x4xf32, #tpu.memory_space<vmem>>, vector<1x8x8x4xf32>
    %52 = vector.shape_cast %51 : vector<1x8x8x4xf32> to vector<8x8x4xf32>
    %53 = vector.shape_cast %50 : vector<8x8x4xf32> to vector<1x8x8x4xf32>
    tpu.vector_store %arg2[%c2, %c0_19, %c0_20, %c0_21], %53 {strides = array<i32>} : memref<4x8x8x4xf32, #tpu.memory_space<vmem>>, vector<1x8x8x4xf32>,
    %cst_22 = arith.constant 7.500000e-01 : f32
    %54 = vector.broadcast %cst_22 : f32 to vector<8x8x4xf32>
    %55 = arith.mulf %54, %17 : vector<8x8x4xf32>
    %cst_23 = arith.constant 2.500000e-01 : f32
    %56 = vector.broadcast %cst_23 : f32 to vector<8x8x4xf32>
    %57 = arith.mulf %56, %45 : vector<8x8x4xf32>
    %58 = arith.addf %55, %57 : vector<8x8x4xf32>
    %c3 = arith.constant 3 : index
    %c0_24 = arith.constant 0 : index
    %c0_25 = arith.constant 0 : index
    %c0_26 = arith.constant 0 : index
    %59 = vector.load %arg2[%c3, %c0_24, %c0_25, %c0_26] : memref<4x8x8x4xf32, #tpu.memory_space<vmem>>, vector<1x8x8x4xf32>
    %60 = vector.shape_cast %59 : vector<1x8x8x4xf32> to vector<8x8x4xf32>
    %61 = vector.shape_cast %58 : vector<8x8x4xf32> to vector<1x8x8x4xf32>
    tpu.vector_store %arg2[%c3, %c0_24, %c0_25, %c0_26], %61 {strides = array<i32>} : memref<4x8x8x4xf32, #tpu.memory_space<vmem>>, vector<1x8x8x4xf32>,
    return
  }
  func.func @transform_0(%arg0: i32) -> (i32, i32, i32, i32) {
    %c0_i32 = arith.constant 0 : i32
    %c0_i32_0 = arith.constant 0 : i32
    %c0_i32_1 = arith.constant 0 : i32
    %c0_i32_2 = arith.constant 0 : i32
    return %arg0, %c0_i32, %c0_i32_0, %c0_i32_1 : i32, i32, i32, i32
  }
  func.func @transform_1(%arg0: i32) -> (i32, i32, i32, i32) {
    %c0_i32 = arith.constant 0 : i32
    %c0_i32_0 = arith.constant 0 : i32
    %c0_i32_1 = arith.constant 0 : i32
    %c0_i32_2 = arith.constant 0 : i32
    return %arg0, %c0_i32, %c0_i32_0, %c0_i32_1 : i32, i32, i32, i32
  }
}

module attributes {stable_mosaic.version = 11 : i64} {
  func.func @_scale_shift_relu_kernel(%arg0: i32, %arg1: i32, %arg2: memref<1x1x144x128xf32, #tpu.memory_space<vmem>>, %arg3: memref<1x128xf32, #tpu.memory_space<vmem>>, %arg4: memref<1x128xf32, #tpu.memory_space<vmem>>, %arg5: memref<1x1x144x128xf32, #tpu.memory_space<vmem>>) attributes {dimension_semantics = [#tpu.dimension_semantics<parallel>, #tpu.dimension_semantics<parallel>], iteration_bounds = array<i64: 2, 2>, scalar_prefetch = 0 : i64, scratch_operands = 0 : i64, tpu.core_type = #tpu.core_type<tc>, window_params = [{transform_indices = @transform_0, window_bounds = array<i64: 1, 1, 144, 128>}, {pipeline_mode = #tpu.pipeline_mode<synchronous>, transform_indices = @transform_1, window_bounds = array<i64: 1, 128>}, {pipeline_mode = #tpu.pipeline_mode<synchronous>, transform_indices = @transform_2, window_bounds = array<i64: 1, 128>}, {transform_indices = @transform_3, window_bounds = array<i64: 1, 1, 144, 128>}]} {
    %c0 = arith.constant 0 : index
    %c0_0 = arith.constant 0 : index
    %c0_1 = arith.constant 0 : index
    %c0_2 = arith.constant 0 : index
    %0 = vector.load %arg2[%c0, %c0_0, %c0_1, %c0_2] : memref<1x1x144x128xf32, #tpu.memory_space<vmem>>, vector<1x1x144x128xf32>
    %c0_3 = arith.constant 0 : index
    %c0_4 = arith.constant 0 : index
    %1 = vector.load %arg3[%c0_3, %c0_4] : memref<1x128xf32, #tpu.memory_space<vmem>>, vector<1x128xf32>
    %2 = vector.shape_cast %1 : vector<1x128xf32> to vector<1x1x1x128xf32>
    %3 = vector.broadcast %2 : vector<1x1x1x128xf32> to vector<1x1x144x128xf32>
    %4 = arith.mulf %0, %3 : vector<1x1x144x128xf32>
    %c0_5 = arith.constant 0 : index
    %c0_6 = arith.constant 0 : index
    %5 = vector.load %arg4[%c0_5, %c0_6] : memref<1x128xf32, #tpu.memory_space<vmem>>, vector<1x128xf32>
    %6 = vector.shape_cast %5 : vector<1x128xf32> to vector<1x1x1x128xf32>
    %7 = vector.broadcast %6 : vector<1x1x1x128xf32> to vector<1x1x144x128xf32>
    %8 = arith.addf %4, %7 : vector<1x1x144x128xf32>
    %cst = arith.constant 0.000000e+00 : f32
    %9 = vector.broadcast %cst : f32 to vector<1x1x144x128xf32>
    %10 = arith.maximumf %8, %9 : vector<1x1x144x128xf32>
    %c0_7 = arith.constant 0 : index
    %c0_8 = arith.constant 0 : index
    %c0_9 = arith.constant 0 : index
    %c0_10 = arith.constant 0 : index
    %11 = vector.load %arg5[%c0_7, %c0_8, %c0_9, %c0_10] : memref<1x1x144x128xf32, #tpu.memory_space<vmem>>, vector<1x1x144x128xf32>
    tpu.vector_store %arg5[%c0_7, %c0_8, %c0_9, %c0_10], %10 {strides = array<i32>} : memref<1x1x144x128xf32, #tpu.memory_space<vmem>>, vector<1x1x144x128xf32>,
    return
  }
  func.func @transform_0(%arg0: i32, %arg1: i32) -> (i32, i32, i32, i32) {
    %c0_i32 = arith.constant 0 : i32
    %c0_i32_0 = arith.constant 0 : i32
    %c0_i32_1 = arith.constant 0 : i32
    return %arg0, %arg1, %c0_i32, %c0_i32_0 : i32, i32, i32, i32
  }
  func.func @transform_1(%arg0: i32, %arg1: i32) -> (i32, i32) {
    %c0_i32 = arith.constant 0 : i32
    %c0_i32_0 = arith.constant 0 : i32
    %c0_i32_1 = arith.constant 0 : i32
    return %c0_i32, %c0_i32_0 : i32, i32
  }
  func.func @transform_2(%arg0: i32, %arg1: i32) -> (i32, i32) {
    %c0_i32 = arith.constant 0 : i32
    %c0_i32_0 = arith.constant 0 : i32
    %c0_i32_1 = arith.constant 0 : i32
    return %c0_i32, %c0_i32_0 : i32, i32
  }
  func.func @transform_3(%arg0: i32, %arg1: i32) -> (i32, i32, i32, i32) {
    %c0_i32 = arith.constant 0 : i32
    %c0_i32_0 = arith.constant 0 : i32
    %c0_i32_1 = arith.constant 0 : i32
    return %arg0, %arg1, %c0_i32, %c0_i32_0 : i32, i32, i32, i32
  }
}

module attributes {stable_mosaic.version = 11 : i64} {
  func.func @_conv3x3_stats_kernel(%arg0: i32, %arg1: i32, %arg2: memref<1x1x184x8xf32, #tpu.memory_space<vmem>>, %arg3: memref<9x8x128xf32, #tpu.memory_space<vmem>>, %arg4: memref<1x128xf32, #tpu.memory_space<vmem>>, %arg5: memref<1x1x144x128xf32, #tpu.memory_space<vmem>>, %arg6: memref<1x1x2x128xf32, #tpu.memory_space<vmem>>) attributes {dimension_semantics = [#tpu.dimension_semantics<parallel>, #tpu.dimension_semantics<parallel>], iteration_bounds = array<i64: 2, 2>, scalar_prefetch = 0 : i64, scratch_operands = 0 : i64, tpu.core_type = #tpu.core_type<tc>, window_params = [{transform_indices = @transform_0, window_bounds = array<i64: 1, 1, 184, 8>}, {pipeline_mode = #tpu.pipeline_mode<synchronous>, transform_indices = @transform_1, window_bounds = array<i64: 9, 8, 128>}, {pipeline_mode = #tpu.pipeline_mode<synchronous>, transform_indices = @transform_2, window_bounds = array<i64: 1, 128>}, {transform_indices = @transform_3, window_bounds = array<i64: 1, 1, 144, 128>}, {transform_indices = @transform_4, window_bounds = array<i64: 1, 1, 2, 128>}]} {
    %cst = arith.constant 0.000000e+00 : f32
    %0 = vector.broadcast %cst : f32 to vector<144x128xf32>
    %c0 = arith.constant 0 : index
    %c0_0 = arith.constant 0 : index
    %c0_1 = arith.constant 0 : index
    %c0_2 = arith.constant 0 : index
    %1 = vector.load %arg2[%c0, %c0_0, %c0_1, %c0_2] : memref<1x1x184x8xf32, #tpu.memory_space<vmem>>, vector<1x1x144x8xf32>
    %2 = vector.shape_cast %1 : vector<1x1x144x8xf32> to vector<144x8xf32>
    %c0_3 = arith.constant 0 : index
    %c0_4 = arith.constant 0 : index
    %c0_5 = arith.constant 0 : index
    %3 = vector.load %arg3[%c0_3, %c0_4, %c0_5] : memref<9x8x128xf32, #tpu.memory_space<vmem>>, vector<1x8x128xf32>
    %4 = vector.shape_cast %3 : vector<1x8x128xf32> to vector<8x128xf32>
    %cst_6 = arith.constant dense<0.000000e+00> : vector<144x128xf32>
    %5 = tpu.matmul %2, %4, %cst_6 {dimension_numbers = #tpu.dot_dimension_numbers<[1], [0], [0], [1], [0, 0, 1, 1], [], []>} : vector<144x8xf32>, vector<8x128xf32>, vector<144x128xf32> -> vector<144x128xf32>
    %6 = arith.addf %0, %5 : vector<144x128xf32>
    %c0_7 = arith.constant 0 : index
    %c0_8 = arith.constant 0 : index
    %c1 = arith.constant 1 : index
    %c0_9 = arith.constant 0 : index
    %7 = vector.load %arg2[%c0_7, %c0_8, %c1, %c0_9] : memref<1x1x184x8xf32, #tpu.memory_space<vmem>>, vector<1x1x144x8xf32>
    %8 = vector.shape_cast %7 : vector<1x1x144x8xf32> to vector<144x8xf32>
    %c1_10 = arith.constant 1 : index
    %c0_11 = arith.constant 0 : index
    %c0_12 = arith.constant 0 : index
    %9 = vector.load %arg3[%c1_10, %c0_11, %c0_12] : memref<9x8x128xf32, #tpu.memory_space<vmem>>, vector<1x8x128xf32>
    %10 = vector.shape_cast %9 : vector<1x8x128xf32> to vector<8x128xf32>
    %cst_13 = arith.constant dense<0.000000e+00> : vector<144x128xf32>
    %11 = tpu.matmul %8, %10, %cst_13 {dimension_numbers = #tpu.dot_dimension_numbers<[1], [0], [0], [1], [0, 0, 1, 1], [], []>} : vector<144x8xf32>, vector<8x128xf32>, vector<144x128xf32> -> vector<144x128xf32>
    %12 = arith.addf %6, %11 : vector<144x128xf32>
    %c0_14 = arith.constant 0 : index
    %c0_15 = arith.constant 0 : index
    %c2 = arith.constant 2 : index
    %c0_16 = arith.constant 0 : index
    %13 = vector.load %arg2[%c0_14, %c0_15, %c2, %c0_16] : memref<1x1x184x8xf32, #tpu.memory_space<vmem>>, vector<1x1x144x8xf32>
    %14 = vector.shape_cast %13 : vector<1x1x144x8xf32> to vector<144x8xf32>
    %c2_17 = arith.constant 2 : index
    %c0_18 = arith.constant 0 : index
    %c0_19 = arith.constant 0 : index
    %15 = vector.load %arg3[%c2_17, %c0_18, %c0_19] : memref<9x8x128xf32, #tpu.memory_space<vmem>>, vector<1x8x128xf32>
    %16 = vector.shape_cast %15 : vector<1x8x128xf32> to vector<8x128xf32>
    %cst_20 = arith.constant dense<0.000000e+00> : vector<144x128xf32>
    %17 = tpu.matmul %14, %16, %cst_20 {dimension_numbers = #tpu.dot_dimension_numbers<[1], [0], [0], [1], [0, 0, 1, 1], [], []>} : vector<144x8xf32>, vector<8x128xf32>, vector<144x128xf32> -> vector<144x128xf32>
    %18 = arith.addf %12, %17 : vector<144x128xf32>
    %c0_21 = arith.constant 0 : index
    %c0_22 = arith.constant 0 : index
    %c18 = arith.constant 18 : index
    %c0_23 = arith.constant 0 : index
    %19 = vector.load %arg2[%c0_21, %c0_22, %c18, %c0_23] : memref<1x1x184x8xf32, #tpu.memory_space<vmem>>, vector<1x1x144x8xf32>
    %20 = vector.shape_cast %19 : vector<1x1x144x8xf32> to vector<144x8xf32>
    %c3 = arith.constant 3 : index
    %c0_24 = arith.constant 0 : index
    %c0_25 = arith.constant 0 : index
    %21 = vector.load %arg3[%c3, %c0_24, %c0_25] : memref<9x8x128xf32, #tpu.memory_space<vmem>>, vector<1x8x128xf32>
    %22 = vector.shape_cast %21 : vector<1x8x128xf32> to vector<8x128xf32>
    %cst_26 = arith.constant dense<0.000000e+00> : vector<144x128xf32>
    %23 = tpu.matmul %20, %22, %cst_26 {dimension_numbers = #tpu.dot_dimension_numbers<[1], [0], [0], [1], [0, 0, 1, 1], [], []>} : vector<144x8xf32>, vector<8x128xf32>, vector<144x128xf32> -> vector<144x128xf32>
    %24 = arith.addf %18, %23 : vector<144x128xf32>
    %c0_27 = arith.constant 0 : index
    %c0_28 = arith.constant 0 : index
    %c19 = arith.constant 19 : index
    %c0_29 = arith.constant 0 : index
    %25 = vector.load %arg2[%c0_27, %c0_28, %c19, %c0_29] : memref<1x1x184x8xf32, #tpu.memory_space<vmem>>, vector<1x1x144x8xf32>
    %26 = vector.shape_cast %25 : vector<1x1x144x8xf32> to vector<144x8xf32>
    %c4 = arith.constant 4 : index
    %c0_30 = arith.constant 0 : index
    %c0_31 = arith.constant 0 : index
    %27 = vector.load %arg3[%c4, %c0_30, %c0_31] : memref<9x8x128xf32, #tpu.memory_space<vmem>>, vector<1x8x128xf32>
    %28 = vector.shape_cast %27 : vector<1x8x128xf32> to vector<8x128xf32>
    %cst_32 = arith.constant dense<0.000000e+00> : vector<144x128xf32>
    %29 = tpu.matmul %26, %28, %cst_32 {dimension_numbers = #tpu.dot_dimension_numbers<[1], [0], [0], [1], [0, 0, 1, 1], [], []>} : vector<144x8xf32>, vector<8x128xf32>, vector<144x128xf32> -> vector<144x128xf32>
    %30 = arith.addf %24, %29 : vector<144x128xf32>
    %c0_33 = arith.constant 0 : index
    %c0_34 = arith.constant 0 : index
    %c20 = arith.constant 20 : index
    %c0_35 = arith.constant 0 : index
    %31 = vector.load %arg2[%c0_33, %c0_34, %c20, %c0_35] : memref<1x1x184x8xf32, #tpu.memory_space<vmem>>, vector<1x1x144x8xf32>
    %32 = vector.shape_cast %31 : vector<1x1x144x8xf32> to vector<144x8xf32>
    %c5 = arith.constant 5 : index
    %c0_36 = arith.constant 0 : index
    %c0_37 = arith.constant 0 : index
    %33 = vector.load %arg3[%c5, %c0_36, %c0_37] : memref<9x8x128xf32, #tpu.memory_space<vmem>>, vector<1x8x128xf32>
    %34 = vector.shape_cast %33 : vector<1x8x128xf32> to vector<8x128xf32>
    %cst_38 = arith.constant dense<0.000000e+00> : vector<144x128xf32>
    %35 = tpu.matmul %32, %34, %cst_38 {dimension_numbers = #tpu.dot_dimension_numbers<[1], [0], [0], [1], [0, 0, 1, 1], [], []>} : vector<144x8xf32>, vector<8x128xf32>, vector<144x128xf32> -> vector<144x128xf32>
    %36 = arith.addf %30, %35 : vector<144x128xf32>
    %c0_39 = arith.constant 0 : index
    %c0_40 = arith.constant 0 : index
    %c36 = arith.constant 36 : index
    %c0_41 = arith.constant 0 : index
    %37 = vector.load %arg2[%c0_39, %c0_40, %c36, %c0_41] : memref<1x1x184x8xf32, #tpu.memory_space<vmem>>, vector<1x1x144x8xf32>
    %38 = vector.shape_cast %37 : vector<1x1x144x8xf32> to vector<144x8xf32>
    %c6 = arith.constant 6 : index
    %c0_42 = arith.constant 0 : index
    %c0_43 = arith.constant 0 : index
    %39 = vector.load %arg3[%c6, %c0_42, %c0_43] : memref<9x8x128xf32, #tpu.memory_space<vmem>>, vector<1x8x128xf32>
    %40 = vector.shape_cast %39 : vector<1x8x128xf32> to vector<8x128xf32>
    %cst_44 = arith.constant dense<0.000000e+00> : vector<144x128xf32>
    %41 = tpu.matmul %38, %40, %cst_44 {dimension_numbers = #tpu.dot_dimension_numbers<[1], [0], [0], [1], [0, 0, 1, 1], [], []>} : vector<144x8xf32>, vector<8x128xf32>, vector<144x128xf32> -> vector<144x128xf32>
    %42 = arith.addf %36, %41 : vector<144x128xf32>
    %c0_45 = arith.constant 0 : index
    %c0_46 = arith.constant 0 : index
    %c37 = arith.constant 37 : index
    %c0_47 = arith.constant 0 : index
    %43 = vector.load %arg2[%c0_45, %c0_46, %c37, %c0_47] : memref<1x1x184x8xf32, #tpu.memory_space<vmem>>, vector<1x1x144x8xf32>
    %44 = vector.shape_cast %43 : vector<1x1x144x8xf32> to vector<144x8xf32>
    %c7 = arith.constant 7 : index
    %c0_48 = arith.constant 0 : index
    %c0_49 = arith.constant 0 : index
    %45 = vector.load %arg3[%c7, %c0_48, %c0_49] : memref<9x8x128xf32, #tpu.memory_space<vmem>>, vector<1x8x128xf32>
    %46 = vector.shape_cast %45 : vector<1x8x128xf32> to vector<8x128xf32>
    %cst_50 = arith.constant dense<0.000000e+00> : vector<144x128xf32>
    %47 = tpu.matmul %44, %46, %cst_50 {dimension_numbers = #tpu.dot_dimension_numbers<[1], [0], [0], [1], [0, 0, 1, 1], [], []>} : vector<144x8xf32>, vector<8x128xf32>, vector<144x128xf32> -> vector<144x128xf32>
    %48 = arith.addf %42, %47 : vector<144x128xf32>
    %c0_51 = arith.constant 0 : index
    %c0_52 = arith.constant 0 : index
    %c38 = arith.constant 38 : index
    %c0_53 = arith.constant 0 : index
    %49 = vector.load %arg2[%c0_51, %c0_52, %c38, %c0_53] : memref<1x1x184x8xf32, #tpu.memory_space<vmem>>, vector<1x1x144x8xf32>
    %50 = vector.shape_cast %49 : vector<1x1x144x8xf32> to vector<144x8xf32>
    %c8 = arith.constant 8 : index
    %c0_54 = arith.constant 0 : index
    %c0_55 = arith.constant 0 : index
    %51 = vector.load %arg3[%c8, %c0_54, %c0_55] : memref<9x8x128xf32, #tpu.memory_space<vmem>>, vector<1x8x128xf32>
    %52 = vector.shape_cast %51 : vector<1x8x128xf32> to vector<8x128xf32>
    %cst_56 = arith.constant dense<0.000000e+00> : vector<144x128xf32>
    %53 = tpu.matmul %50, %52, %cst_56 {dimension_numbers = #tpu.dot_dimension_numbers<[1], [0], [0], [1], [0, 0, 1, 1], [], []>} : vector<144x8xf32>, vector<8x128xf32>, vector<144x128xf32> -> vector<144x128xf32>
    %54 = arith.addf %48, %53 : vector<144x128xf32>
    %c0_57 = arith.constant 0 : index
    %c0_58 = arith.constant 0 : index
    %55 = vector.load %arg4[%c0_57, %c0_58] : memref<1x128xf32, #tpu.memory_space<vmem>>, vector<1x128xf32>
    %56 = vector.broadcast %55 : vector<1x128xf32> to vector<144x128xf32>
    %57 = arith.addf %54, %56 : vector<144x128xf32>
    %c0_59 = arith.constant 0 : index
    %c0_60 = arith.constant 0 : index
    %c0_61 = arith.constant 0 : index
    %c0_62 = arith.constant 0 : index
    %58 = vector.load %arg5[%c0_59, %c0_60, %c0_61, %c0_62] : memref<1x1x144x128xf32, #tpu.memory_space<vmem>>, vector<1x1x144x128xf32>
    %59 = vector.shape_cast %58 : vector<1x1x144x128xf32> to vector<144x128xf32>
    %60 = vector.shape_cast %57 : vector<144x128xf32> to vector<1x1x144x128xf32>
    tpu.vector_store %arg5[%c0_59, %c0_60, %c0_61, %c0_62], %60 {strides = array<i32>} : memref<1x1x144x128xf32, #tpu.memory_space<vmem>>, vector<1x1x144x128xf32>,
    %61 = tpu.iota {dimensions = array<i32: 0>} : vector<144x1xi32>
    %c18_i32 = arith.constant 18 : i32
    %62 = vector.broadcast %c18_i32 : i32 to vector<144x1xi32>
    %63 = arith.remsi %61, %62 : vector<144x1xi32>
    %c16_i32 = arith.constant 16 : i32
    %64 = vector.broadcast %c16_i32 : i32 to vector<144x1xi32>
    %65 = arith.cmpi slt, %63, %64 : vector<144x1xi32>
    %cst_63 = arith.constant 0.000000e+00 : f32
    %66 = vector.shape_cast %65 : vector<144x1xi1> to vector<144x1xi1>
    %67 = vector.broadcast %66 : vector<144x1xi1> to vector<144x128xi1>
    %68 = vector.broadcast %cst_63 : f32 to vector<144x128xf32>
    %69 = arith.select %67, %57, %68 : vector<144x128xi1>, vector<144x128xf32>
    %cst_64 = arith.constant dense<0.000000e+00> : vector<128xf32>
    %70 = vector.multi_reduction <add>, %69, %cst_64 [0] : vector<144x128xf32> to vector<128xf32>
    %71 = vector.shape_cast %70 : vector<128xf32> to vector<1x128xf32>
    %72 = arith.mulf %69, %69 : vector<144x128xf32>
    %cst_65 = arith.constant dense<0.000000e+00> : vector<128xf32>
    %73 = vector.multi_reduction <add>, %72, %cst_65 [0] : vector<144x128xf32> to vector<128xf32>
    %74 = vector.shape_cast %73 : vector<128xf32> to vector<1x128xf32>
    %75 = tpu.concatenate %71, %74 in 0 : vector<1x128xf32>, vector<1x128xf32> -> vector<2x128xf32>
    %c0_66 = arith.constant 0 : index
    %c0_67 = arith.constant 0 : index
    %c0_68 = arith.constant 0 : index
    %c0_69 = arith.constant 0 : index
    %76 = vector.load %arg6[%c0_66, %c0_67, %c0_68, %c0_69] : memref<1x1x2x128xf32, #tpu.memory_space<vmem>>, vector<1x1x2x128xf32>
    %77 = vector.shape_cast %76 : vector<1x1x2x128xf32> to vector<2x128xf32>
    %78 = vector.shape_cast %75 : vector<2x128xf32> to vector<1x1x2x128xf32>
    tpu.vector_store %arg6[%c0_66, %c0_67, %c0_68, %c0_69], %78 {strides = array<i32>} : memref<1x1x2x128xf32, #tpu.memory_space<vmem>>, vector<1x1x2x128xf32>,
    return
  }
  func.func @transform_0(%arg0: i32, %arg1: i32) -> (i32, i32, i32, i32) {
    %c0_i32 = arith.constant 0 : i32
    %c0_i32_0 = arith.constant 0 : i32
    %c0_i32_1 = arith.constant 0 : i32
    return %arg0, %arg1, %c0_i32, %c0_i32_0 : i32, i32, i32, i32
  }
  func.func @transform_1(%arg0: i32, %arg1: i32) -> (i32, i32, i32) {
    %c0_i32 = arith.constant 0 : i32
    %c0_i32_0 = arith.constant 0 : i32
    %c0_i32_1 = arith.constant 0 : i32
    %c0_i32_2 = arith.constant 0 : i32
    return %c0_i32, %c0_i32_0, %c0_i32_1 : i32, i32, i32
  }
  func.func @transform_2(%arg0: i32, %arg1: i32) -> (i32, i32) {
    %c0_i32 = arith.constant 0 : i32
    %c0_i32_0 = arith.constant 0 : i32
    %c0_i32_1 = arith.constant 0 : i32
    return %c0_i32, %c0_i32_0 : i32, i32
  }
  func.func @transform_3(%arg0: i32, %arg1: i32) -> (i32, i32, i32, i32) {
    %c0_i32 = arith.constant 0 : i32
    %c0_i32_0 = arith.constant 0 : i32
    %c0_i32_1 = arith.constant 0 : i32
    return %arg0, %arg1, %c0_i32, %c0_i32_0 : i32, i32, i32, i32
  }
  func.func @transform_4(%arg0: i32, %arg1: i32) -> (i32, i32, i32, i32) {
    %c0_i32 = arith.constant 0 : i32
    %c0_i32_0 = arith.constant 0 : i32
    %c0_i32_1 = arith.constant 0 : i32
    return %arg0, %arg1, %c0_i32, %c0_i32_0 : i32, i32, i32, i32
  }
}

</mosaic_0001>

<llo_original>
// kernel: up_forward.3
$region0: #{up_forward.3}
  #allocation0 [shape = 'u32[]', space=smem, size = 0x4, offset = 0x4, fixed_abs, tag = 'smem constant byte address 0x4 - core index']
  #allocation1 [shape = 'u32[144,128]{1,0:T(1,128)}', space=vmem, size = 0x12000, scoped, tag = 'internal scratch']
  %s0 = inlined_call_operand.vmem [shape: f32[2,8,8,4], index: 0, kind: input, shape index: {}]
  %s1 = inlined_call_operand.vmem [shape: f32[8,8,8,4], index: 1, kind: output, shape index: {}]
  %s2 = sld [smem:[#allocation0]]
  $region37: #{up_forward.3} parent=0
    _
  %s4 = ssub.s32 1, %s2
  %s5 = scalar_select 0, %s4, %s2
  loop: start=0, step=1, limit=4
  $region2: #{up_forward.3} parent=0 // loop_pre_header
    _
  $region3: #{up_forward.3} parent=0 // loop_header
    %s7 = sphi 0, %s11
    %p8 = scmp.ge.s32.totalorder %s7, 4
    %s17 = sphi 0, %s19
    %s20 = sphi 0, %s17
    %s21 = sphi 0, %s20
    %s37 = sphi 0, %s21
    %s43 = sphi 0, %s45
    %s46 = sphi 0, %s43
    %s47 = sphi 0, %s46
    %s63 = sphi 0, %s47
  $region4: #{up_forward.3} parent=0 // loop_header_branch
    %10 = sbr.rel (%p8) target = $region8
  $region5: #{up_forward.3} parent=0 // loop_body
    %s12 = ssub.s32 %s7, 1
    %s13 = ssub.s32 %s7, 2
    %s14 = sadd.s32 %s7, 1
    %s15 = ssub.s32 %s7, %s14
    %p16 = scmp.eq.s32.totalorder %s15, 0
    %s18 = sadd.s32 %s17, 1
    %s19 = scalar_select %p16, %s17, %s18
    %p22 = pneg %p16
    %p23 = scmp.eq.s32.totalorder %s7, 1
    %p24 = por %p22, %p23
    %p25 = scmp.ne.s32.totalorder %s17, %s20
    %p26 = scmp.eq.s32.totalorder %s7, 0
    %p27 = por %p25, %p26
    %p28 = scmp.ne.s32.totalorder %s17, %s20
    %p29 = scmp.eq.s32.totalorder %s12, 1
    %p30 = por %p28, %p29
    %p31 = scmp.ne.s32.totalorder %s20, %s21
    %p32 = scmp.eq.s32.totalorder %s12, 0
    %p33 = por %p31, %p32
    %p34 = scmp.ne.s32.totalorder %s20, %s21
    %p35 = scmp.eq.s32.totalorder %s13, 1
    %p36 = por %p34, %p35
    %p38 = scmp.ne.s32.totalorder %s21, %s37
    %p39 = scmp.eq.s32.totalorder %s13, 0
    %p40 = por %p38, %p39
    %s41 = ssub.s32 %s7, %s14
    %p42 = scmp.eq.s32.totalorder %s41, 0
    %s44 = sadd.s32 %s43, 1
    %s45 = scalar_select %p42, %s43, %s44
    %p48 = pneg %p42
    %p49 = scmp.eq.s32.totalorder %s7, 1
    %p50 = por %p48, %p49
    %p51 = scmp.ne.s32.totalorder %s43, %s46
    %p52 = scmp.eq.s32.totalorder %s7, 0
    %p53 = por %p51, %p52
    %p54 = scmp.ne.s32.totalorder %s43, %s46
    %p55 = scmp.eq.s32.totalorder %s12, 1
    %p56 = por %p54, %p55
    %p57 = scmp.ne.s32.totalorder %s46, %s47
    %p58 = scmp.eq.s32.totalorder %s12, 0
    %p59 = por %p57, %p58
    %p60 = scmp.ne.s32.totalorder %s46, %s47
    %p61 = scmp.eq.s32.totalorder %s13, 1
    %p62 = por %p60, %p61
    %p64 = scmp.ne.s32.totalorder %s47, %s63
    %p65 = scmp.eq.s32.totalorder %s13, 0
    %p66 = por %p64, %p65
    %p67 = scmp.le.s32.totalorder 1, %s7
    %p68 = scmp.lt.s32.totalorder %s7, 3
    %p69 = pnand %p67, %p68
    %p70 = pneg %p69
    // Predicated region
    $region9: #{up_forward.3} parent=5 // pred_check
      _
    $region10: #{up_forward.3} parent=5 // pred_check_branch
      %72 = sbr.rel (%p69) target = $region12
    $region11: #{up_forward.3} parent=5 // pred_region
      %s73 = ssub.s32 %s7, 1
    $region12: #{up_forward.3} parent=5 // pred_fallthru
      _
    %p74 = scmp.lt.s32.totalorder %s7, 2
    // Predicated region
    $region13: #{up_forward.3} parent=5 // pred_check
      %p75 = pneg %p74
    $region14: #{up_forward.3} parent=5 // pred_check_branch
      %77 = sbr.rel (%p75) target = $region16
    $region15: #{up_forward.3} parent=5 // pred_region
      // Predicated region
      $region17: #{up_forward.3} parent=15 // pred_check
        %p78 = pneg %p27
      $region18: #{up_forward.3} parent=15 // pred_check_branch
        %80 = sbr.rel (%p78) target = $region20
      $region19: #{up_forward.3} parent=15 // pred_region
        %p81 = scmp.lt.s32.totalorder %s7, 1
        %s82 = scalar_select %p81, %s7, 1
        %s83 = smul.addr %s82, 8
        %s84 = smul.addr %s83, 8
        %s85 = scalar_lea.vmem %s0, %s84
      $region20: #{up_forward.3} parent=15 // pred_fallthru
        _
    $region16: #{up_forward.3} parent=5 // pred_fallthru
      _
    %p86 = scmp.le.s32.totalorder 1, %s7
    %p87 = scmp.lt.s32.totalorder %s7, 3
    %p88 = pnand %p86, %p87
    %p89 = pneg %p88
    // Predicated region
    $region21: #{up_forward.3} parent=5 // pred_check
      _
    $region22: #{up_forward.3} parent=5 // pred_check_branch
      %91 = sbr.rel (%p88) target = $region24
    $region23: #{up_forward.3} parent=5 // pred_region
      %s92 = ssub.s32 %s7, 1
      %p93 = scmp.lt.s32.totalorder %s12, 1
      %s94 = scalar_select %p93, %s12, 1
      %s95 = smul.addr %s94, 8
      %s96 = smul.addr %s95, 8
      %s97 = scalar_lea.vmem %s0, %s96
      %p98 = pneg %p33
      %p99 = pneg %p30
      %p100 = pneg %p59
      %p101 = pneg %p56
      %s102 = smul.u32 4, %s12
      %p103 = scmp.lt.s32.totalorder %s102, 7
      %s104 = scalar_select %p103, %s102, 7
      %s105 = smul.addr %s104, 8
      %s106 = smul.addr %s105, 8
      %s107 = scalar_lea.vmem %s1, %s106
      %p108 = scmp.lt.s32.totalorder %s12, 1
      %s109 = scalar_select %p108, %s12, 1
      %s110 = smul.addr %s109, 8
      %s111 = smul.addr %s110, 8
      %s112 = scalar_lea.vmem %s0, %s111
      %s113 = smul.u32 4, %s12
      %p114 = scmp.lt.s32.totalorder %s113, 7
      %s115 = scalar_select %p114, %s113, 7
      %s116 = smul.addr %s115, 8
      %s117 = smul.addr %s116, 8
      %s118 = scalar_lea.vmem %s1, %s117
      %s119 = smul.u32 4, %s12
      %v120 = vld [vmem:[%s112] sm:$0xff]
      %v121 = vld [vmem:[%s112 + $0x8] sm:$0xff]
      %v122 = vld [vmem:[%s112 + $0x10] sm:$0xff]
      %v123 = vld [vmem:[%s112 + $0x18] sm:$0xff]
      %v124 = vld [vmem:[%s112 + $0x20] sm:$0xff]
      %v125 = vld [vmem:[%s112 + $0x28] sm:$0xff]
      %v126 = vld [vmem:[%s112 + $0x30] sm:$0xff]
      %v127 = vld [vmem:[%s112 + $0x38] sm:$0xff]
      %v128 = vmul.f32 %v120, 0.25
      %v129 = vmul.f32 %v121, 0.25
      %v130 = vmul.f32 %v122, 0.25
      %v131 = vmul.f32 %v123, 0.25
      %v132 = vmul.f32 %v124, 0.25
      %v133 = vmul.f32 %v125, 0.25
      %v134 = vmul.f32 %v126, 0.25
      %v135 = vmul.f32 %v120, 0.75
      %v136 = vmul.f32 %v121, 0.75
      %v137 = vmul.f32 %v122, 0.75
      %v138 = vmul.f32 %v123, 0.75
      %v139 = vmul.f32 %v124, 0.75
      %v140 = vmul.f32 %v125, 0.75
      %v141 = vmul.f32 %v126, 0.75
      %v142 = vmul.f32 %v127, 0.75
      %v143 = vadd.f32 %v128, %v135
      %v144 = vadd.f32 %v128, %v136
      %v145 = vadd.f32 %v129, %v137
      %v146 = vadd.f32 %v130, %v138
      %v147 = vadd.f32 %v131, %v139
      %v148 = vadd.f32 %v132, %v140
      %v149 = vadd.f32 %v133, %v141
      %v150 = vadd.f32 %v134, %v142
      %v151 = vmul.f32 %v127, 0.25
      %v152 = vadd.f32 %v135, %v129
      %v153 = vadd.f32 %v136, %v130
      %v154 = vadd.f32 %v137, %v131
      %v155 = vadd.f32 %v138, %v132
      %v156 = vadd.f32 %v139, %v133
      %v157 = vadd.f32 %v140, %v134
      %v158 = vadd.f32 %v141, %v151
      %v159 = vadd.f32 %v142, %v151
      %v168 = vrot.slane %v143, 7
      %v169 = vrot.slane %v144, 7
      %v170 = vrot.slane %v145, 7
      %v171 = vrot.slane %v146, 7
      %v172 = vrot.slane %v147, 7
      %v173 = vrot.slane %v148, 7
      %v174 = vrot.slane %v149, 7
      %v175 = vrot.slane %v150, 7
      %vm184 = vcmask 1040384
      %v185 = vsel %vm184, %v143, %v168
      %v186 = vsel %vm184, %v144, %v169
      %v187 = vsel %vm184, %v145, %v170
      %v188 = vsel %vm184, %v146, %v171
      %v189 = vsel %vm184, %v147, %v172
      %v190 = vsel %vm184, %v148, %v173
      %v191 = vsel %vm184, %v149, %v174
      %v192 = vsel %vm184, %v150, %v175
      %v193 = vrot.slane %v143, 1
      %v194 = vrot.slane %v144, 1
      %v195 = vrot.slane %v145, 1
      %v196 = vrot.slane %v146, 1
      %v197 = vrot.slane %v147, 1
      %v198 = vrot.slane %v148, 1
      %v199 = vrot.slane %v149, 1
      %v200 = vrot.slane %v150, 1
      %vm209 = vcmask 1046528
      %v210 = vsel %vm209, %v193, %v143
      %v211 = vsel %vm209, %v194, %v144
      %v212 = vsel %vm209, %v195, %v145
      %v213 = vsel %vm209, %v196, %v146
      %v214 = vsel %vm209, %v197, %v147
      %v215 = vsel %vm209, %v198, %v148
      %v216 = vsel %vm209, %v199, %v149
      %v217 = vsel %vm209, %v200, %v150
      %v218 = vmul.f32 %v185, 0.25
      %v219 = vmul.f32 %v186, 0.25
      %v220 = vmul.f32 %v187, 0.25
      %v221 = vmul.f32 %v188, 0.25
      %v222 = vmul.f32 %v189, 0.25
      %v223 = vmul.f32 %v190, 0.25
      %v224 = vmul.f32 %v191, 0.25
      %v225 = vmul.f32 %v192, 0.25
      %v226 = vmul.f32 %v143, 0.75
      %v227 = vmul.f32 %v144, 0.75
      %v228 = vmul.f32 %v145, 0.75
      %v229 = vmul.f32 %v146, 0.75
      %v230 = vmul.f32 %v147, 0.75
      %v231 = vmul.f32 %v148, 0.75
      %v232 = vmul.f32 %v149, 0.75
      %v233 = vmul.f32 %v150, 0.75
      %v234 = vadd.f32 %v218, %v226
      %v235 = vadd.f32 %v219, %v227
      %v236 = vadd.f32 %v220, %v228
      %v237 = vadd.f32 %v221, %v229
      %v238 = vadd.f32 %v222, %v230
      %v239 = vadd.f32 %v223, %v231
      %v240 = vadd.f32 %v224, %v232
      %v241 = vadd.f32 %v225, %v233
      %vm242 = vcmask 31744
      %243 = vst.msk [vmem:[%s118] sm:$0xff] %vm242, %v234
      %244 = vst.msk [vmem:[%s118 + $0x8] sm:$0xff] %vm242, %v235
      %245 = vst.msk [vmem:[%s118 + $0x10] sm:$0xff] %vm242, %v236
      %246 = vst.msk [vmem:[%s118 + $0x18] sm:$0xff] %vm242, %v237
      %247 = vst.msk [vmem:[%s118 + $0x20] sm:$0xff] %vm242, %v238
      %248 = vst.msk [vmem:[%s118 + $0x28] sm:$0xff] %vm242, %v239
      %249 = vst.msk [vmem:[%s118 + $0x30] sm:$0xff] %vm242, %v240
      %250 = vst.msk [vmem:[%s118 + $0x38] sm:$0xff] %vm242, %v241
      %v251 = vmul.f32 %v210, 0.25
      %v252 = vmul.f32 %v211, 0.25
      %v253 = vmul.f32 %v212, 0.25
      %v254 = vmul.f32 %v213, 0.25
      %v255 = vmul.f32 %v214, 0.25
      %v256 = vmul.f32 %v215, 0.25
      %v257 = vmul.f32 %v216, 0.25
      %v258 = vmul.f32 %v217, 0.25
      %v259 = vadd.f32 %v226, %v251
      %v260 = vadd.f32 %v227, %v252
      %v261 = vadd.f32 %v228, %v253
      %v262 = vadd.f32 %v229, %v254
      %v263 = vadd.f32 %v230, %v255
      %v264 = vadd.f32 %v231, %v256
      %v265 = vadd.f32 %v232, %v257
      %v266 = vadd.f32 %v233, %v258
      %s267 = scalar_lea.vmem %s118, 64
      %268 = vst.msk [vmem:[%s267] sm:$0xff] %vm242, %v259
      %269 = vst.msk [vmem:[%s267 + $0x8] sm:$0xff] %vm242, %v260
      %270 = vst.msk [vmem:[%s267 + $0x10] sm:$0xff] %vm242, %v261
      %271 = vst.msk [vmem:[%s267 + $0x18] sm:$0xff] %vm242, %v262
      %272 = vst.msk [vmem:[%s267 + $0x20] sm:$0xff] %vm242, %v263
      %273 = vst.msk [vmem:[%s267 + $0x28] sm:$0xff] %vm242, %v264
      %274 = vst.msk [vmem:[%s267 + $0x30] sm:$0xff] %vm242, %v265
      %275 = vst.msk [vmem:[%s267 + $0x38] sm:$0xff] %vm242, %v266
      %v284 = vrot.slane %v152, 7
      %v285 = vrot.slane %v153, 7
      %v286 = vrot.slane %v154, 7
      %v287 = vrot.slane %v155, 7
      %v288 = vrot.slane %v156, 7
      %v289 = vrot.slane %v157, 7
      %v290 = vrot.slane %v158, 7
      %v291 = vrot.slane %v159, 7
      %v300 = vsel %vm184, %v152, %v284
      %v301 = vsel %vm184, %v153, %v285
      %v302 = vsel %vm184, %v154, %v286
      %v303 = vsel %vm184, %v155, %v287
      %v304 = vsel %vm184, %v156, %v288
      %v305 = vsel %vm184, %v157, %v289
      %v306 = vsel %vm184, %v158, %v290
      %v307 = vsel %vm184, %v159, %v291
      %v308 = vrot.slane %v152, 1
      %v309 = vrot.slane %v153, 1
      %v310 = vrot.slane %v154, 1
      %v311 = vrot.slane %v155, 1
      %v312 = vrot.slane %v156, 1
      %v313 = vrot.slane %v157, 1
      %v314 = vrot.slane %v158, 1
      %v315 = vrot.slane %v159, 1
      %v324 = vsel %vm209, %v308, %v152
      %v325 = vsel %vm209, %v309, %v153
      %v326 = vsel %vm209, %v310, %v154
      %v327 = vsel %vm209, %v311, %v155
      %v328 = vsel %vm209, %v312, %v156
      %v329 = vsel %vm209, %v313, %v157
      %v330 = vsel %vm209, %v314, %v158
      %v331 = vsel %vm209, %v315, %v159
      %v332 = vmul.f32 %v300, 0.25
      %v333 = vmul.f32 %v301, 0.25
      %v334 = vmul.f32 %v302, 0.25
      %v335 = vmul.f32 %v303, 0.25
      %v336 = vmul.f32 %v304, 0.25
      %v337 = vmul.f32 %v305, 0.25
      %v338 = vmul.f32 %v306, 0.25
      %v339 = vmul.f32 %v307, 0.25
      %v340 = vmul.f32 %v152, 0.75
      %v341 = vmul.f32 %v153, 0.75
      %v342 = vmul.f32 %v154, 0.75
      %v343 = vmul.f32 %v155, 0.75
      %v344 = vmul.f32 %v156, 0.75
      %v345 = vmul.f32 %v157, 0.75
      %v346 = vmul.f32 %v158, 0.75
      %v347 = vmul.f32 %v159, 0.75
      %v348 = vadd.f32 %v332, %v340
      %v349 = vadd.f32 %v333, %v341
      %v350 = vadd.f32 %v334, %v342
      %v351 = vadd.f32 %v335, %v343
      %v352 = vadd.f32 %v336, %v344
      %v353 = vadd.f32 %v337, %v345
      %v354 = vadd.f32 %v338, %v346
      %v355 = vadd.f32 %v339, %v347
      %s356 = scalar_lea.vmem %s118, 128
      %357 = vst.msk [vmem:[%s356] sm:$0xff] %vm242, %v348
      %358 = vst.msk [vmem:[%s356 + $0x8] sm:$0xff] %vm242, %v349
      %359 = vst.msk [vmem:[%s356 + $0x10] sm:$0xff] %vm242, %v350
      %360 = vst.msk [vmem:[%s356 + $0x18] sm:$0xff] %vm242, %v351
      %361 = vst.msk [vmem:[%s356 + $0x20] sm:$0xff] %vm242, %v352
      %362 = vst.msk [vmem:[%s356 + $0x28] sm:$0xff] %vm242, %v353
      %363 = vst.msk [vmem:[%s356 + $0x30] sm:$0xff] %vm242, %v354
      %364 = vst.msk [vmem:[%s356 + $0x38] sm:$0xff] %vm242, %v355
      %v365 = vmul.f32 %v324, 0.25
      %v366 = vmul.f32 %v325, 0.25
      %v367 = vmul.f32 %v326, 0.25
      %v368 = vmul.f32 %v327, 0.25
      %v369 = vmul.f32 %v328, 0.25
      %v370 = vmul.f32 %v329, 0.25
      %v371 = vmul.f32 %v330, 0.25
      %v372 = vmul.f32 %v331, 0.25
      %v373 = vadd.f32 %v340, %v365
      %v374 = vadd.f32 %v341, %v366
      %v375 = vadd.f32 %v342, %v367
      %v376 = vadd.f32 %v343, %v368
      %v377 = vadd.f32 %v344, %v369
      %v378 = vadd.f32 %v345, %v370
      %v379 = vadd.f32 %v346, %v371
      %v380 = vadd.f32 %v347, %v372
      %s381 = scalar_lea.vmem %s118, 192
      %382 = vst.msk [vmem:[%s381] sm:$0xff] %vm242, %v373
      %383 = vst.msk [vmem:[%s381 + $0x8] sm:$0xff] %vm242, %v374
      %384 = vst.msk [vmem:[%s381 + $0x10] sm:$0xff] %vm242, %v375
      %385 = vst.msk [vmem:[%s381 + $0x18] sm:$0xff] %vm242, %v376
      %386 = vst.msk [vmem:[%s381 + $0x20] sm:$0xff] %vm242, %v377
      %387 = vst.msk [vmem:[%s381 + $0x28] sm:$0xff] %vm242, %v378
      %388 = vst.msk [vmem:[%s381 + $0x30] sm:$0xff] %vm242, %v379
      %389 = vst.msk [vmem:[%s381 + $0x38] sm:$0xff] %vm242, %v380
      %s390 = smul.u32 4, %s12
      %p391 = scmp.lt.s32.totalorder %s390, 7
      %s392 = scalar_select %p391, %s390, 7
      %s393 = smul.addr %s392, 8
      %s394 = smul.addr %s393, 8
      %s395 = scalar_lea.vmem %s1, %s394
      // Predicated region
      $region25: #{up_forward.3} parent=23 // pred_check
        %p396 = pneg %p56
      $region26: #{up_forward.3} parent=23 // pred_check_branch
        %398 = sbr.rel (%p396) target = $region28
      $region27: #{up_forward.3} parent=23 // pred_region
        %s399 = smul.u32 4, %s12
      $region28: #{up_forward.3} parent=23 // pred_fallthru
        _
    $region24: #{up_forward.3} parent=5 // pred_fallthru
      _
    %p400 = scmp.le.s32.totalorder 2, %s7
    // Predicated region
    $region29: #{up_forward.3} parent=5 // pred_check
      %p401 = pneg %p400
    $region30: #{up_forward.3} parent=5 // pred_check_branch
      %403 = sbr.rel (%p401) target = $region32
    $region31: #{up_forward.3} parent=5 // pred_region
      %s404 = ssub.s32 %s7, 2
      // Predicated region
      $region33: #{up_forward.3} parent=31 // pred_check
        %p405 = pneg %p62
      $region34: #{up_forward.3} parent=31 // pred_check_branch
        %407 = sbr.rel (%p405) target = $region36
      $region35: #{up_forward.3} parent=31 // pred_region
        %s408 = smul.u32 4, %s13
        %p409 = scmp.lt.s32.totalorder %s408, 7
        %s410 = scalar_select %p409, %s408, 7
        %s411 = smul.addr %s410, 8
        %s412 = smul.addr %s411, 8
        %s413 = scalar_lea.vmem %s1, %s412
      $region36: #{up_forward.3} parent=31 // pred_fallthru
        _
    $region32: #{up_forward.3} parent=5 // pred_fallthru
      _
  $region6: #{up_forward.3} parent=0 // loop_footer
    %s11 = sadd.s32 1, %s7
  $region7: #{up_forward.3} parent=0 // loop_footer_branch
    %6 = sbr.rel target = $region3
  $region8: #{up_forward.3} parent=0 // loop_exit
    _

// kernel: up_forward.5
$region0: #{up_forward.5}
  #allocation0 [shape = 'u32[]', space=smem, size = 0x4, offset = 0x4, fixed_abs, tag = 'smem constant byte address 0x4 - core index']
  #allocation1 [shape = 'u32[144,128]{1,0:T(1,128)}', space=vmem, size = 0x12000, scoped, tag = 'internal scratch']
  %s0 = inlined_call_operand.vmem [shape: f32[2,2,144,128], index: 0, kind: input, shape index: {}]
  %s1 = inlined_call_operand.vmem [shape: f32[1,128], index: 1, kind: input, shape index: {}]
  %s2 = inlined_call_operand.vmem [shape: f32[1,128], index: 2, kind: input, shape index: {}]
  %s3 = inlined_call_operand.vmem [shape: f32[2,2,144,128], index: 3, kind: output, shape index: {}]
  %s4 = sld [smem:[#allocation0]]
  $region45: #{up_forward.5} parent=0
    _
  %s6 = ssub.s32 1, %s4
  %s7 = scalar_select 0, %s6, %s4
  loop: start=0, step=1, limit=6
  $region2: #{up_forward.5} parent=0 // loop_pre_header
    _
  $region3: #{up_forward.5} parent=0 // loop_header
    %s9 = sphi 0, %s13
    %p10 = scmp.ge.s32.totalorder %s9, 6
    %s16 = sphi 0, %s28
    %s17 = sphi 0, %s24
    %s18 = sphi 0, %s16
    %s19 = sphi 0, %s17
    %s20 = sphi 0, %s18
    %s21 = sphi 0, %s19
    %s33 = sphi 0, %s35
    %s36 = sphi 0, %s33
    %s37 = sphi 0, %s36
    %s53 = sphi 0, %s37
    %s57 = sphi 0, %s57
    %s59 = sphi 0, %s57
    %s60 = sphi 0, %s59
    %s74 = sphi 0, %s60
    %s78 = sphi 0, %s78
    %s80 = sphi 0, %s78
    %s81 = sphi 0, %s80
    %s95 = sphi 0, %s81
    %s103 = sphi 0, %s105
    %s106 = sphi 0, %s103
    %s107 = sphi 0, %s106
    %s123 = sphi 0, %s107
  $region4: #{up_forward.5} parent=0 // loop_header_branch
    %12 = sbr.rel (%p10) target = $region8
  $region5: #{up_forward.5} parent=0 // loop_body
    %s14 = ssub.s32 %s9, 1
    %s15 = ssub.s32 %s9, 2
    %s22 = sadd.s32 1, %s17
    %p23 = scmp.ge.s32.totalorder %s22, 2
    %s24 = scalar_select %p23, 0, %s22
    %s25 = sadd.s32 1, %s16
    %s26 = scalar_select %p23, %s25, %s16
    %p27 = scmp.ge.s32.totalorder %s26, 2
    %s28 = scalar_select %p27, 0, %s26
    %s29 = ssub.s32 %s16, %s28
    %s30 = ssub.s32 %s17, %s24
    %s31 = sor.u32 %s29, %s30
    %p32 = scmp.eq.s32.totalorder %s31, 0
    %s34 = sadd.s32 %s33, 1
    %s35 = scalar_select %p32, %s33, %s34
    %p38 = pneg %p32
    %p39 = scmp.eq.s32.totalorder %s9, 3
    %p40 = por %p38, %p39
    %p41 = scmp.ne.s32.totalorder %s33, %s36
    %p42 = scmp.eq.s32.totalorder %s9, 0
    %p43 = por %p41, %p42
    %p44 = scmp.ne.s32.totalorder %s33, %s36
    %p45 = scmp.eq.s32.totalorder %s14, 3
    %p46 = por %p44, %p45
    %p47 = scmp.ne.s32.totalorder %s36, %s37
    %p48 = scmp.eq.s32.totalorder %s14, 0
    %p49 = por %p47, %p48
    %p50 = scmp.ne.s32.totalorder %s36, %s37
    %p51 = scmp.eq.s32.totalorder %s15, 3
    %p52 = por %p50, %p51
    %p54 = scmp.ne.s32.totalorder %s37, %s53
    %p55 = scmp.eq.s32.totalorder %s15, 0
    %p56 = por %p54, %p55
    %s58 = sadd.s32 %s57, 1
    %p61 = scmp.eq.s32.totalorder %s9, 3
    %p62 = scmp.ne.s32.totalorder %s57, %s59
    %p63 = scmp.eq.s32.totalorder %s9, 0
    %p64 = por %p62, %p63
    %p65 = scmp.ne.s32.totalorder %s57, %s59
    %p66 = scmp.eq.s32.totalorder %s14, 3
    %p67 = por %p65, %p66
    %p68 = scmp.ne.s32.totalorder %s59, %s60
    %p69 = scmp.eq.s32.totalorder %s14, 0
    %p70 = por %p68, %p69
    %p71 = scmp.ne.s32.totalorder %s59, %s60
    %p72 = scmp.eq.s32.totalorder %s15, 3
    %p73 = por %p71, %p72
    %p75 = scmp.ne.s32.totalorder %s60, %s74
    %p76 = scmp.eq.s32.totalorder %s15, 0
    %p77 = por %p75, %p76
    %s79 = sadd.s32 %s78, 1
    %p82 = scmp.eq.s32.totalorder %s9, 3
    %p83 = scmp.ne.s32.totalorder %s78, %s80
    %p84 = scmp.eq.s32.totalorder %s9, 0
    %p85 = por %p83, %p84
    %p86 = scmp.ne.s32.totalorder %s78, %s80
    %p87 = scmp.eq.s32.totalorder %s14, 3
    %p88 = por %p86, %p87
    %p89 = scmp.ne.s32.totalorder %s80, %s81
    %p90 = scmp.eq.s32.totalorder %s14, 0
    %p91 = por %p89, %p90
    %p92 = scmp.ne.s32.totalorder %s80, %s81
    %p93 = scmp.eq.s32.totalorder %s15, 3
    %p94 = por %p92, %p93
    %p96 = scmp.ne.s32.totalorder %s81, %s95
    %p97 = scmp.eq.s32.totalorder %s15, 0
    %p98 = por %p96, %p97
    %s99 = ssub.s32 %s16, %s28
    %s100 = ssub.s32 %s17, %s24
    %s101 = sor.u32 %s99, %s100
    %p102 = scmp.eq.s32.totalorder %s101, 0
    %s104 = sadd.s32 %s103, 1
    %s105 = scalar_select %p102, %s103, %s104
    %p108 = pneg %p102
    %p109 = scmp.eq.s32.totalorder %s9, 3
    %p110 = por %p108, %p109
    %p111 = scmp.ne.s32.totalorder %s103, %s106
    %p112 = scmp.eq.s32.totalorder %s9, 0
    %p113 = por %p111, %p112
    %p114 = scmp.ne.s32.totalorder %s103, %s106
    %p115 = scmp.eq.s32.totalorder %s14, 3
    %p116 = por %p114, %p115
    %p117 = scmp.ne.s32.totalorder %s106, %s107
    %p118 = scmp.eq.s32.totalorder %s14, 0
    %p119 = por %p117, %p118
    %p120 = scmp.ne.s32.totalorder %s106, %s107
    %p121 = scmp.eq.s32.totalorder %s15, 3
    %p122 = por %p120, %p121
    %p124 = scmp.ne.s32.totalorder %s107, %s123
    %p125 = scmp.eq.s32.totalorder %s15, 0
    %p126 = por %p124, %p125
    %p127 = scmp.le.s32.totalorder 1, %s9
    %p128 = scmp.lt.s32.totalorder %s9, 5
    %p129 = pnand %p127, %p128
    %p130 = pneg %p129
    // Predicated region
    $region9: #{up_forward.5} parent=5 // pred_check
      _
    $region10: #{up_forward.5} parent=5 // pred_check_branch
      %132 = sbr.rel (%p129) target = $region12
    $region11: #{up_forward.5} parent=5 // pred_region
      %s133 = ssub.s32 %s9, 1
      // Predicated region
      $region13: #{up_forward.5} parent=11 // pred_check
        %p134 = pneg %p70
      $region14: #{up_forward.5} parent=11 // pred_check_branch
        %136 = sbr.rel (%p134) target = $region16
      $region15: #{up_forward.5} parent=11 // pred_region
        _
      $region16: #{up_forward.5} parent=11 // pred_fallthru
        _
      // Predicated region
      $region17: #{up_forward.5} parent=11 // pred_check
        %p137 = pneg %p91
      $region18: #{up_forward.5} parent=11 // pred_check_branch
        %139 = sbr.rel (%p137) target = $region20
      $region19: #{up_forward.5} parent=11 // pred_region
        _
      $region20: #{up_forward.5} parent=11 // pred_fallthru
        _
    $region12: #{up_forward.5} parent=5 // pred_fallthru
      _
    %p140 = scmp.lt.s32.totalorder %s9, 4
    // Predicated region
    $region21: #{up_forward.5} parent=5 // pred_check
      %p141 = pneg %p140
    $region22: #{up_forward.5} parent=5 // pred_check_branch
      %143 = sbr.rel (%p141) target = $region24
    $region23: #{up_forward.5} parent=5 // pred_region
      // Predicated region
      $region25: #{up_forward.5} parent=23 // pred_check
        %p144 = pneg %p43
      $region26: #{up_forward.5} parent=23 // pred_check_branch
        %146 = sbr.rel (%p144) target = $region28
      $region27: #{up_forward.5} parent=23 // pred_region
        %p147 = scmp.lt.s32.totalorder %s16, 1
        %s148 = scalar_select %p147, %s16, 1
        %p149 = scmp.lt.s32.totalorder %s17, 1
        %s150 = scalar_select %p149, %s17, 1
        %s151 = smul.addr %s150, 18
        %s152 = smul.addr %s148, 36
        %s153 = sadd.s32 %s151, %s152
        %s154 = smul.addr %s153, 8
        %s155 = scalar_lea.vmem %s0, %s154
      $region28: #{up_forward.5} parent=23 // pred_fallthru
        _
    $region24: #{up_forward.5} parent=5 // pred_fallthru
      _
    %p156 = scmp.le.s32.totalorder 1, %s9
    %p157 = scmp.lt.s32.totalorder %s9, 5
    %p158 = pnand %p156, %p157
    %p159 = pneg %p158
    // Predicated region
    $region29: #{up_forward.5} parent=5 // pred_check
      _
    $region30: #{up_forward.5} parent=5 // pred_check_branch
      %161 = sbr.rel (%p158) target = $region32
    $region31: #{up_forward.5} parent=5 // pred_region
      %s162 = ssub.s32 %s9, 1
      %p163 = scmp.lt.s32.totalorder %s18, 1
      %s164 = scalar_select %p163, %s18, 1
      %p165 = scmp.lt.s32.totalorder %s19, 1
      %s166 = scalar_select %p165, %s19, 1
      %s167 = smul.addr %s166, 18
      %s168 = smul.addr %s164, 36
      %s169 = sadd.s32 %s167, %s168
      %s170 = smul.addr %s169, 8
      %s171 = scalar_lea.vmem %s0, %s170
      %p172 = pneg %p49
      %p173 = pneg %p46
      %p174 = pneg %p70
      %p175 = pneg %p67
      %p176 = pneg %p91
      %p177 = pneg %p88
      %p178 = pneg %p119
      %p179 = pneg %p116
      %p180 = scmp.lt.s32.totalorder %s18, 1
      %s181 = scalar_select %p180, %s18, 1
      %p182 = scmp.lt.s32.totalorder %s19, 1
      %s183 = scalar_select %p182, %s19, 1
      %s184 = smul.addr %s183, 18
      %s185 = smul.addr %s181, 36
      %s186 = sadd.s32 %s184, %s185
      %s187 = smul.addr %s186, 8
      %s188 = scalar_lea.vmem %s3, %s187
      %p189 = scmp.lt.s32.totalorder %s18, 1
      %s190 = scalar_select %p189, %s18, 1
      %p191 = scmp.lt.s32.totalorder %s19, 1
      %s192 = scalar_select %p191, %s19, 1
      %s193 = smul.addr %s192, 18
      %s194 = smul.addr %s190, 36
      %s195 = sadd.s32 %s193, %s194
      %s196 = smul.addr %s195, 8
      %s197 = scalar_lea.vmem %s0, %s196
      %p198 = scmp.lt.s32.totalorder %s18, 1
      %s199 = scalar_select %p198, %s18, 1
      %p200 = scmp.lt.s32.totalorder %s19, 1
      %s201 = scalar_select %p200, %s19, 1
      %s202 = smul.addr %s201, 18
      %s203 = smul.addr %s199, 36
      %s204 = sadd.s32 %s202, %s203
      %s205 = smul.addr %s204, 8
      %s206 = scalar_lea.vmem %s3, %s205
      %v207 = vld [vmem:[%s197] sm:$0xff]
      %v208 = vld [vmem:[%s197 + $0x8] sm:$0xff]
      %v209 = vld [vmem:[%s197 + $0x10] sm:$0xff]
      %v210 = vld [vmem:[%s197 + $0x18] sm:$0xff]
      %v211 = vld [vmem:[%s197 + $0x20] sm:$0xff]
      %v212 = vld [vmem:[%s197 + $0x28] sm:$0xff]
      %v213 = vld [vmem:[%s197 + $0x30] sm:$0xff]
      %v214 = vld [vmem:[%s197 + $0x38] sm:$0xff]
      %v215 = vld [vmem:[%s197 + $0x40] sm:$0xff]
      %v216 = vld [vmem:[%s197 + $0x48] sm:$0xff]
      %v217 = vld [vmem:[%s197 + $0x50] sm:$0xff]
      %v218 = vld [vmem:[%s197 + $0x58] sm:$0xff]
      %v219 = vld [vmem:[%s197 + $0x60] sm:$0xff]
      %v220 = vld [vmem:[%s197 + $0x68] sm:$0xff]
      %v221 = vld [vmem:[%s197 + $0x70] sm:$0xff]
      %v222 = vld [vmem:[%s197 + $0x78] sm:$0xff]
      %v223 = vld [vmem:[%s197 + $0x80] sm:$0xff]
      %v224 = vld [vmem:[%s197 + $0x88] sm:$0xff]
      %v225 = vld [vmem:[%s1] sm:$0x1]
      %v227 = vlaneseq
      %v228 = vshrl.u32 %v227, 7
      %v229 = vsub.s32 0, %v228
      %v230 = vrot.slane %v225, %v229
      %v232 = vmul.f32 %v207, %v230
      %v233 = vmul.f32 %v208, %v230
      %v234 = vmul.f32 %v209, %v230
      %v235 = vmul.f32 %v210, %v230
      %v236 = vmul.f32 %v211, %v230
      %v237 = vmul.f32 %v212, %v230
      %v238 = vmul.f32 %v213, %v230
      %v239 = vmul.f32 %v214, %v230
      %v240 = vmul.f32 %v215, %v230
      %v241 = vmul.f32 %v216, %v230
      %v242 = vmul.f32 %v217, %v230
      %v243 = vmul.f32 %v218, %v230
      %v244 = vmul.f32 %v219, %v230
      %v245 = vmul.f32 %v220, %v230
      %v246 = vmul.f32 %v221, %v230
      %v247 = vmul.f32 %v222, %v230
      %v248 = vmul.f32 %v223, %v230
      %v249 = vmul.f32 %v224, %v230
      %v250 = vld [vmem:[%s2] sm:$0x1]
      %v252 = vlaneseq
      %v253 = vshrl.u32 %v252, 7
      %v254 = vsub.s32 0, %v253
      %v255 = vrot.slane %v250, %v254
      %v257 = vadd.f32 %v232, %v255
      %v258 = vadd.f32 %v233, %v255
      %v259 = vadd.f32 %v234, %v255
      %v260 = vadd.f32 %v235, %v255
      %v261 = vadd.f32 %v236, %v255
      %v262 = vadd.f32 %v237, %v255
      %v263 = vadd.f32 %v238, %v255
      %v264 = vadd.f32 %v239, %v255
      %v265 = vadd.f32 %v240, %v255
      %v266 = vadd.f32 %v241, %v255
      %v267 = vadd.f32 %v242, %v255
      %v268 = vadd.f32 %v243, %v255
      %v269 = vadd.f32 %v244, %v255
      %v270 = vadd.f32 %v245, %v255
      %v271 = vadd.f32 %v246, %v255
      %v272 = vadd.f32 %v247, %v255
      %v273 = vadd.f32 %v248, %v255
      %v274 = vadd.f32 %v249, %v255
      %v275 = vmax.f32 %v257, 0.0
      %v276 = vmax.f32 %v258, 0.0
      %v277 = vmax.f32 %v259, 0.0
      %v278 = vmax.f32 %v260, 0.0
      %v279 = vmax.f32 %v261, 0.0
      %v280 = vmax.f32 %v262, 0.0
      %v281 = vmax.f32 %v263, 0.0
      %v282 = vmax.f32 %v264, 0.0
      %v283 = vmax.f32 %v265, 0.0
      %v284 = vmax.f32 %v266, 0.0
      %v285 = vmax.f32 %v267, 0.0
      %v286 = vmax.f32 %v268, 0.0
      %v287 = vmax.f32 %v269, 0.0
      %v288 = vmax.f32 %v270, 0.0
      %v289 = vmax.f32 %v271, 0.0
      %v290 = vmax.f32 %v272, 0.0
      %v291 = vmax.f32 %v273, 0.0
      %v292 = vmax.f32 %v274, 0.0
      %293 = vst [vmem:[%s206] sm:$0xff] %v275
      %294 = vst [vmem:[%s206 + $0x8] sm:$0xff] %v276
      %295 = vst [vmem:[%s206 + $0x10] sm:$0xff] %v277
      %296 = vst [vmem:[%s206 + $0x18] sm:$0xff] %v278
      %297 = vst [vmem:[%s206 + $0x20] sm:$0xff] %v279
      %298 = vst [vmem:[%s206 + $0x28] sm:$0xff] %v280
      %299 = vst [vmem:[%s206 + $0x30] sm:$0xff] %v281
      %300 = vst [vmem:[%s206 + $0x38] sm:$0xff] %v282
      %301 = vst [vmem:[%s206 + $0x40] sm:$0xff] %v283
      %302 = vst [vmem:[%s206 + $0x48] sm:$0xff] %v284
      %303 = vst [vmem:[%s206 + $0x50] sm:$0xff] %v285
      %304 = vst [vmem:[%s206 + $0x58] sm:$0xff] %v286
      %305 = vst [vmem:[%s206 + $0x60] sm:$0xff] %v287
      %306 = vst [vmem:[%s206 + $0x68] sm:$0xff] %v288
      %307 = vst [vmem:[%s206 + $0x70] sm:$0xff] %v289
      %308 = vst [vmem:[%s206 + $0x78] sm:$0xff] %v290
      %309 = vst [vmem:[%s206 + $0x80] sm:$0xff] %v291
      %310 = vst [vmem:[%s206 + $0x88] sm:$0xff] %v292
      %p311 = scmp.lt.s32.totalorder %s18, 1
      %s312 = scalar_select %p311, %s18, 1
      %p313 = scmp.lt.s32.totalorder %s19, 1
      %s314 = scalar_select %p313, %s19, 1
      %s315 = smul.addr %s314, 18
      %s316 = smul.addr %s312, 36
      %s317 = sadd.s32 %s315, %s316
      %s318 = smul.addr %s317, 8
      %s319 = scalar_lea.vmem %s3, %s318
      // Predicated region
      $region33: #{up_forward.5} parent=31 // pred_check
        %p320 = pneg %p116
      $region34: #{up_forward.5} parent=31 // pred_check_branch
        %322 = sbr.rel (%p320) target = $region36
      $region35: #{up_forward.5} parent=31 // pred_region
        _
      $region36: #{up_forward.5} parent=31 // pred_fallthru
        _
    $region32: #{up_forward.5} parent=5 // pred_fallthru
      _
    %p323 = scmp.le.s32.totalorder 2, %s9
    // Predicated region
    $region37: #{up_forward.5} parent=5 // pred_check
      %p324 = pneg %p323
    $region38: #{up_forward.5} parent=5 // pred_check_branch
      %326 = sbr.rel (%p324) target = $region40
    $region39: #{up_forward.5} parent=5 // pred_region
      %s327 = ssub.s32 %s9, 2
      // Predicated region
      $region41: #{up_forward.5} parent=39 // pred_check
        %p328 = pneg %p122
      $region42: #{up_forward.5} parent=39 // pred_check_branch
        %330 = sbr.rel (%p328) target = $region44
      $region43: #{up_forward.5} parent=39 // pred_region
        %p331 = scmp.lt.s32.totalorder %s20, 1
        %s332 = scalar_select %p331, %s20, 1
        %p333 = scmp.lt.s32.totalorder %s21, 1
        %s334 = scalar_select %p333, %s21, 1
        %s335 = smul.addr %s334, 18
        %s336 = smul.addr %s332, 36
        %s337 = sadd.s32 %s335, %s336
        %s338 = smul.addr %s337, 8
        %s339 = scalar_lea.vmem %s3, %s338
      $region44: #{up_forward.5} parent=39 // pred_fallthru
        _
    $region40: #{up_forward.5} parent=5 // pred_fallthru
      _
  $region6: #{up_forward.5} parent=0 // loop_footer
    %s13 = sadd.s32 1, %s9
  $region7: #{up_forward.5} parent=0 // loop_footer_branch
    %8 = sbr.rel target = $region3
  $region8: #{up_forward.5} parent=0 // loop_exit
    _

// kernel: up_forward.4
$region0: #{up_forward.4}
  #allocation0 [shape = 'u32[]', space=smem, size = 0x4, offset = 0x4, fixed_abs, tag = 'smem constant byte address 0x4 - core index']
  #allocation1 [shape = 'u32[144,128]{1,0:T(1,128)}', space=vmem, size = 0x12000, scoped, tag = 'internal scratch']
  %s0 = inlined_call_operand.vmem [shape: f32[2,2,184,8], index: 0, kind: input, shape index: {}]
  %s1 = inlined_call_operand.vmem [shape: f32[9,8,128], index: 1, kind: input, shape index: {}]
  %s2 = inlined_call_operand.vmem [shape: f32[1,128], index: 2, kind: input, shape index: {}]
  %s3 = inlined_call_operand.vmem [shape: f32[2,2,144,128], index: 3, kind: output, shape index: {0}]
  %s4 = inlined_call_operand.vmem [shape: f32[2,2,2,128], index: 4, kind: output, shape index: {1}]
  %5 = xla_tuple %s3, %s4
  %s6 = sld [smem:[#allocation0]]
  $region53: #{up_forward.4} parent=0
    _
  %s8 = ssub.s32 1, %s6
  %s9 = scalar_select 0, %s8, %s6
  loop: start=0, step=1, limit=6
  $region2: #{up_forward.4} parent=0 // loop_pre_header
    _
  $region3: #{up_forward.4} parent=0 // loop_header
    %s11 = sphi 0, %s15
    %p12 = scmp.ge.s32.totalorder %s11, 6
    %s18 = sphi 0, %s30
    %s19 = sphi 0, %s26
    %s20 = sphi 0, %s18
    %s21 = sphi 0, %s19
    %s22 = sphi 0, %s20
    %s23 = sphi 0, %s21
    %s35 = sphi 0, %s37
    %s38 = sphi 0, %s35
    %s39 = sphi 0, %s38
    %s55 = sphi 0, %s39
    %s59 = sphi 0, %s59
    %s61 = sphi 0, %s59
    %s62 = sphi 0, %s61
    %s76 = sphi 0, %s62
    %s80 = sphi 0, %s80
    %s82 = sphi 0, %s80
    %s83 = sphi 0, %s82
    %s97 = sphi 0, %s83
    %s105 = sphi 0, %s107
    %s108 = sphi 0, %s105
    %s109 = sphi 0, %s108
    %s125 = sphi 0, %s109
    %s133 = sphi 0, %s135
    %s136 = sphi 0, %s133
    %s137 = sphi 0, %s136
    %s153 = sphi 0, %s137
  $region4: #{up_forward.4} parent=0 // loop_header_branch
    %14 = sbr.rel (%p12) target = $region8
  $region5: #{up_forward.4} parent=0 // loop_body
    %s16 = ssub.s32 %s11, 1
    %s17 = ssub.s32 %s11, 2
    %s24 = sadd.s32 1, %s19
    %p25 = scmp.ge.s32.totalorder %s24, 2
    %s26 = scalar_select %p25, 0, %s24
    %s27 = sadd.s32 1, %s18
    %s28 = scalar_select %p25, %s27, %s18
    %p29 = scmp.ge.s32.totalorder %s28, 2
    %s30 = scalar_select %p29, 0, %s28
    %s31 = ssub.s32 %s18, %s30
    %s32 = ssub.s32 %s19, %s26
    %s33 = sor.u32 %s31, %s32
    %p34 = scmp.eq.s32.totalorder %s33, 0
    %s36 = sadd.s32 %s35, 1
    %s37 = scalar_select %p34, %s35, %s36
    %p40 = pneg %p34
    %p41 = scmp.eq.s32.totalorder %s11, 3
    %p42 = por %p40, %p41
    %p43 = scmp.ne.s32.totalorder %s35, %s38
    %p44 = scmp.eq.s32.totalorder %s11, 0
    %p45 = por %p43, %p44
    %p46 = scmp.ne.s32.totalorder %s35, %s38
    %p47 = scmp.eq.s32.totalorder %s16, 3
    %p48 = por %p46, %p47
    %p49 = scmp.ne.s32.totalorder %s38, %s39
    %p50 = scmp.eq.s32.totalorder %s16, 0
    %p51 = por %p49, %p50
    %p52 = scmp.ne.s32.totalorder %s38, %s39
    %p53 = scmp.eq.s32.totalorder %s17, 3
    %p54 = por %p52, %p53
    %p56 = scmp.ne.s32.totalorder %s39, %s55
    %p57 = scmp.eq.s32.totalorder %s17, 0
    %p58 = por %p56, %p57
    %s60 = sadd.s32 %s59, 1
    %p63 = scmp.eq.s32.totalorder %s11, 3
    %p64 = scmp.ne.s32.totalorder %s59, %s61
    %p65 = scmp.eq.s32.totalorder %s11, 0
    %p66 = por %p64, %p65
    %p67 = scmp.ne.s32.totalorder %s59, %s61
    %p68 = scmp.eq.s32.totalorder %s16, 3
    %p69 = por %p67, %p68
    %p70 = scmp.ne.s32.totalorder %s61, %s62
    %p71 = scmp.eq.s32.totalorder %s16, 0
    %p72 = por %p70, %p71
    %p73 = scmp.ne.s32.totalorder %s61, %s62
    %p74 = scmp.eq.s32.totalorder %s17, 3
    %p75 = por %p73, %p74
    %p77 = scmp.ne.s32.totalorder %s62, %s76
    %p78 = scmp.eq.s32.totalorder %s17, 0
    %p79 = por %p77, %p78
    %s81 = sadd.s32 %s80, 1
    %p84 = scmp.eq.s32.totalorder %s11, 3
    %p85 = scmp.ne.s32.totalorder %s80, %s82
    %p86 = scmp.eq.s32.totalorder %s11, 0
    %p87 = por %p85, %p86
    %p88 = scmp.ne.s32.totalorder %s80, %s82
    %p89 = scmp.eq.s32.totalorder %s16, 3
    %p90 = por %p88, %p89
    %p91 = scmp.ne.s32.totalorder %s82, %s83
    %p92 = scmp.eq.s32.totalorder %s16, 0
    %p93 = por %p91, %p92
    %p94 = scmp.ne.s32.totalorder %s82, %s83
    %p95 = scmp.eq.s32.totalorder %s17, 3
    %p96 = por %p94, %p95
    %p98 = scmp.ne.s32.totalorder %s83, %s97
    %p99 = scmp.eq.s32.totalorder %s17, 0
    %p100 = por %p98, %p99
    %s101 = ssub.s32 %s18, %s30
    %s102 = ssub.s32 %s19, %s26
    %s103 = sor.u32 %s101, %s102
    %p104 = scmp.eq.s32.totalorder %s103, 0
    %s106 = sadd.s32 %s105, 1
    %s107 = scalar_select %p104, %s105, %s106
    %p110 = pneg %p104
    %p111 = scmp.eq.s32.totalorder %s11, 3
    %p112 = por %p110, %p111
    %p113 = scmp.ne.s32.totalorder %s105, %s108
    %p114 = scmp.eq.s32.totalorder %s11, 0
    %p115 = por %p113, %p114
    %p116 = scmp.ne.s32.totalorder %s105, %s108
    %p117 = scmp.eq.s32.totalorder %s16, 3
    %p118 = por %p116, %p117
    %p119 = scmp.ne.s32.totalorder %s108, %s109
    %p120 = scmp.eq.s32.totalorder %s16, 0
    %p121 = por %p119, %p120
    %p122 = scmp.ne.s32.totalorder %s108, %s109
    %p123 = scmp.eq.s32.totalorder %s17, 3
    %p124 = por %p122, %p123
    %p126 = scmp.ne.s32.totalorder %s109, %s125
    %p127 = scmp.eq.s32.totalorder %s17, 0
    %p128 = por %p126, %p127
    %s129 = ssub.s32 %s18, %s30
    %s130 = ssub.s32 %s19, %s26
    %s131 = sor.u32 %s129, %s130
    %p132 = scmp.eq.s32.totalorder %s131, 0
    %s134 = sadd.s32 %s133, 1
    %s135 = scalar_select %p132, %s133, %s134
    %p138 = pneg %p132
    %p139 = scmp.eq.s32.totalorder %s11, 3
    %p140 = por %p138, %p139
    %p141 = scmp.ne.s32.totalorder %s133, %s136
    %p142 = scmp.eq.s32.totalorder %s11, 0
    %p143 = por %p141, %p142
    %p144 = scmp.ne.s32.totalorder %s133, %s136
    %p145 = scmp.eq.s32.totalorder %s16, 3
    %p146 = por %p144, %p145
    %p147 = scmp.ne.s32.totalorder %s136, %s137
    %p148 = scmp.eq.s32.totalorder %s16, 0
    %p149 = por %p147, %p148
    %p150 = scmp.ne.s32.totalorder %s136, %s137
    %p151 = scmp.eq.s32.totalorder %s17, 3
    %p152 = por %p150, %p151
    %p154 = scmp.ne.s32.totalorder %s137, %s153
    %p155 = scmp.eq.s32.totalorder %s17, 0
    %p156 = por %p154, %p155
    %p157 = scmp.le.s32.totalorder 1, %s11
    %p158 = scmp.lt.s32.totalorder %s11, 5
    %p159 = pnand %p157, %p158
    %p160 = pneg %p159
    // Predicated region
    $region9: #{up_forward.4} parent=5 // pred_check
      _
    $region10: #{up_forward.4} parent=5 // pred_check_branch
      %162 = sbr.rel (%p159) target = $region12
    $region11: #{up_forward.4} parent=5 // pred_region
      %s163 = ssub.s32 %s11, 1
      // Predicated region
      $region13: #{up_forward.4} parent=11 // pred_check
        %p164 = pneg %p72
      $region14: #{up_forward.4} parent=11 // pred_check_branch
        %166 = sbr.rel (%p164) target = $region16
      $region15: #{up_forward.4} parent=11 // pred_region
        _
      $region16: #{up_forward.4} parent=11 // pred_fallthru
        _
      // Predicated region
      $region17: #{up_forward.4} parent=11 // pred_check
        %p167 = pneg %p93
      $region18: #{up_forward.4} parent=11 // pred_check_branch
        %169 = sbr.rel (%p167) target = $region20
      $region19: #{up_forward.4} parent=11 // pred_region
        _
      $region20: #{up_forward.4} parent=11 // pred_fallthru
        _
    $region12: #{up_forward.4} parent=5 // pred_fallthru
      _
    %p170 = scmp.lt.s32.totalorder %s11, 4
    // Predicated region
    $region21: #{up_forward.4} parent=5 // pred_check
      %p171 = pneg %p170
    $region22: #{up_forward.4} parent=5 // pred_check_branch
      %173 = sbr.rel (%p171) target = $region24
    $region23: #{up_forward.4} parent=5 // pred_region
      // Predicated region
      $region25: #{up_forward.4} parent=23 // pred_check
        %p174 = pneg %p45
      $region26: #{up_forward.4} parent=23 // pred_check_branch
        %176 = sbr.rel (%p174) target = $region28
      $region27: #{up_forward.4} parent=23 // pred_region
        %p177 = scmp.lt.s32.totalorder %s18, 1
        %s178 = scalar_select %p177, %s18, 1
        %p179 = scmp.lt.s32.totalorder %s19, 1
        %s180 = scalar_select %p179, %s19, 1
        %s181 = smul.addr %s180, 23
        %s182 = smul.addr %s178, 46
        %s183 = sadd.s32 %s181, %s182
        %s184 = smul.addr %s183, 8
        %s185 = scalar_lea.vmem %s0, %s184
      $region28: #{up_forward.4} parent=23 // pred_fallthru
        _
    $region24: #{up_forward.4} parent=5 // pred_fallthru
      _
    %p186 = scmp.le.s32.totalorder 1, %s11
    %p187 = scmp.lt.s32.totalorder %s11, 5
    %p188 = pnand %p186, %p187
    %p189 = pneg %p188
    // Predicated region
    $region29: #{up_forward.4} parent=5 // pred_check
      _
    $region30: #{up_forward.4} parent=5 // pred_check_branch
      %191 = sbr.rel (%p188) target = $region32
    $region31: #{up_forward.4} parent=5 // pred_region
      %s192 = ssub.s32 %s11, 1
      %p193 = scmp.lt.s32.totalorder %s20, 1
      %s194 = scalar_select %p193, %s20, 1
      %p195 = scmp.lt.s32.totalorder %s21, 1
      %s196 = scalar_select %p195, %s21, 1
      %s197 = smul.addr %s196, 23
      %s198 = smul.addr %s194, 46
      %s199 = sadd.s32 %s197, %s198
      %s200 = smul.addr %s199, 8
      %s201 = scalar_lea.vmem %s0, %s200
      %p202 = pneg %p51
      %p203 = pneg %p48
      %p204 = pneg %p72
      %p205 = pneg %p69
      %p206 = pneg %p93
      %p207 = pneg %p90
      %p208 = pneg %p121
      %p209 = pneg %p118
      %p210 = scmp.lt.s32.totalorder %s20, 1
      %s211 = scalar_select %p210, %s20, 1
      %p212 = scmp.lt.s32.totalorder %s21, 1
      %s213 = scalar_select %p212, %s21, 1
      %s214 = smul.addr %s213, 18
      %s215 = smul.addr %s211, 36
      %s216 = sadd.s32 %s214, %s215
      %s217 = smul.addr %s216, 8
      %s218 = scalar_lea.vmem %s3, %s217
      %p219 = pneg %p149
      %p220 = pneg %p146
      %p221 = scmp.lt.s32.totalorder %s20, 1
      %s222 = scalar_select %p221, %s20, 1
      %p223 = scmp.lt.s32.totalorder %s21, 1
      %s224 = scalar_select %p223, %s21, 1
      %s225 = smul.addr %s222, 2
      %s226 = sadd.s32 %s224, %s225
      %s227 = smul.addr %s226, 2
      %s228 = scalar_lea.vmem %s4, %s227
      %p229 = scmp.lt.s32.totalorder %s20, 1
      %s230 = scalar_select %p229, %s20, 1
      %p231 = scmp.lt.s32.totalorder %s21, 1
      %s232 = scalar_select %p231, %s21, 1
      %s233 = smul.addr %s232, 23
      %s234 = smul.addr %s230, 46
      %s235 = sadd.s32 %s233, %s234
      %s236 = smul.addr %s235, 8
      %s237 = scalar_lea.vmem %s0, %s236
      %p238 = scmp.lt.s32.totalorder %s20, 1
      %s239 = scalar_select %p238, %s20, 1
      %p240 = scmp.lt.s32.totalorder %s21, 1
      %s241 = scalar_select %p240, %s21, 1
      %s242 = smul.addr %s241, 18
      %s243 = smul.addr %s239, 36
      %s244 = sadd.s32 %s242, %s243
      %s245 = smul.addr %s244, 8
      %s246 = scalar_lea.vmem %s3, %s245
      %p247 = scmp.lt.s32.totalorder %s20, 1
      %s248 = scalar_select %p247, %s20, 1
      %p249 = scmp.lt.s32.totalorder %s21, 1
      %s250 = scalar_select %p249, %s21, 1
      %s251 = smul.addr %s248, 2
      %s252 = sadd.s32 %s250, %s251
      %s253 = smul.addr %s252, 2
      %s254 = scalar_lea.vmem %s4, %s253
      %v255 = vld [vmem:[%s237] sm:$0xff]
      %v256 = vld [vmem:[%s237 + $0x8] sm:$0xff]
      %v257 = vld [vmem:[%s237 + $0x10] sm:$0xff]
      %v258 = vld [vmem:[%s237 + $0x18] sm:$0xff]
      %v259 = vld [vmem:[%s237 + $0x20] sm:$0xff]
      %v260 = vld [vmem:[%s237 + $0x28] sm:$0xff]
      %v261 = vld [vmem:[%s237 + $0x30] sm:$0xff]
      %v262 = vld [vmem:[%s237 + $0x38] sm:$0xff]
      %v263 = vld [vmem:[%s237 + $0x40] sm:$0xff]
      %v264 = vld [vmem:[%s237 + $0x48] sm:$0xff]
      %v265 = vld [vmem:[%s237 + $0x50] sm:$0xff]
      %v266 = vld [vmem:[%s237 + $0x58] sm:$0xff]
      %v267 = vld [vmem:[%s237 + $0x60] sm:$0xff]
      %v268 = vld [vmem:[%s237 + $0x68] sm:$0xff]
      %v269 = vld [vmem:[%s237 + $0x70] sm:$0xff]
      %v270 = vld [vmem:[%s237 + $0x78] sm:$0xff]
      %v271 = vld [vmem:[%s237 + $0x80] sm:$0xff]
      %v272 = vld [vmem:[%s237 + $0x88] sm:$0xff]
      %v273 = vld [vmem:[%s1] sm:$0xff]
      %v274 = vld [vmem:[%s237 + $0x1] sm:$0xff]
      %v275 = vld [vmem:[%s237 + $0x9] sm:$0xff]
      %v276 = vld [vmem:[%s237 + $0x11] sm:$0xff]
      %v277 = vld [vmem:[%s237 + $0x19] sm:$0xff]
      %v278 = vld [vmem:[%s237 + $0x21] sm:$0xff]
      %v279 = vld [vmem:[%s237 + $0x29] sm:$0xff]
      %v280 = vld [vmem:[%s237 + $0x31] sm:$0xff]
      %v281 = vld [vmem:[%s237 + $0x39] sm:$0xff]
      %v282 = vld [vmem:[%s237 + $0x41] sm:$0xff]
      %v283 = vld [vmem:[%s237 + $0x49] sm:$0xff]
      %v284 = vld [vmem:[%s237 + $0x51] sm:$0xff]
      %v285 = vld [vmem:[%s237 + $0x59] sm:$0xff]
      %v286 = vld [vmem:[%s237 + $0x61] sm:$0xff]
      %v287 = vld [vmem:[%s237 + $0x69] sm:$0xff]
      %v288 = vld [vmem:[%s237 + $0x71] sm:$0xff]
      %v289 = vld [vmem:[%s237 + $0x79] sm:$0xff]
      %v290 = vld [vmem:[%s237 + $0x81] sm:$0xff]
      %v291 = vld [vmem:[%s237 + $0x89] sm:$0xff]
      %s292 = scalar_lea.vmem %s1, 8
      %v293 = vld [vmem:[%s292] sm:$0xff]
      %vm294 = vcmask 64512
      %v296 = vsel %vm294, %v274, 0
      %v299 = vsel %vm294, %v275, 0
      %v302 = vsel %vm294, %v276, 0
      %v305 = vsel %vm294, %v277, 0
      %v308 = vsel %vm294, %v278, 0
      %v311 = vsel %vm294, %v279, 0
      %v314 = vsel %vm294, %v280, 0
      %v317 = vsel %vm294, %v281, 0
      %v320 = vsel %vm294, %v282, 0
      %v323 = vsel %vm294, %v283, 0
      %v326 = vsel %vm294, %v284, 0
      %v329 = vsel %vm294, %v285, 0
      %v332 = vsel %vm294, %v286, 0
      %v335 = vsel %vm294, %v287, 0
      %v338 = vsel %vm294, %v288, 0
      %v341 = vsel %vm294, %v289, 0
      %v344 = vsel %vm294, %v290, 0
      %v347 = vsel %vm294, %v291, 0
      %349 = vmatprep.subr.mxu0 0.0
      %350 = vmatpush1.msra.mxu0 0.0
      %351 = vmatprep.subr.mxu0 0.0
      %352 = vmatpush1.msra.mxu0 0.0
      %353 = vmatprep.subr.mxu0 0.0
      %354 = vmatpush1.msra.mxu0 0.0
      %355 = vmatprep.subr.mxu0 0.0
      %356 = vmatpush1.msra.mxu0 0.0
      %357 = vmatprep.subr.mxu0 0.0
      %358 = vmatpush1.msra.mxu0 0.0
      %359 = vmatprep.subr.mxu0 0.0
      %360 = vmatpush1.msra.mxu0 0.0
      %361 = vmatprep.subr.mxu0 0.0
      %362 = vmatpush1.msra.mxu0 0.0
      %363 = vmatprep.subr.mxu0 0.0
      %364 = vmatpush1.msra.mxu0 0.0
      %365 = vmatprep.subr.mxu0 0.0
      %366 = vmatpush1.msra.mxu0 0.0
      %367 = vmatprep.subr.mxu0 0.0
      %368 = vmatpush1.msra.mxu0 0.0
      %369 = vmatprep.subr.mxu0 0.0
      %370 = vmatpush1.msra.mxu0 0.0
      %371 = vmatprep.subr.mxu0 0.0
      %372 = vmatpush1.msra.mxu0 0.0
      %373 = vmatprep.subr.mxu0 0.0
      %374 = vmatpush1.msra.mxu0 0.0
      %375 = vmatprep.subr.mxu0 0.0
      %376 = vmatpush1.msra.mxu0 0.0
      %377 = vmatprep.subr.mxu0 0.0
      %378 = vmatpush1.msra.mxu0 0.0
      %379 = vmatprep.subr.mxu0 0.0
      %380 = vmatpush1.msra.mxu0 %v293
      %381 = vmatprep.subr.mxu0 0.0
      %382 = vmatpush2.msra.mxu0 0.0
      %383 = vmatprep.subr.mxu0 0.0
      %384 = vmatpush2.msra.mxu0 0.0
      %385 = vmatprep.subr.mxu0 0.0
      %386 = vmatpush2.msra.mxu0 0.0
      %387 = vmatprep.subr.mxu0 0.0
      %388 = vmatpush2.msra.mxu0 0.0
      %389 = vmatprep.subr.mxu0 0.0
      %390 = vmatpush2.msra.mxu0 0.0
      %391 = vmatprep.subr.mxu0 0.0
      %392 = vmatpush2.msra.mxu0 0.0
      %393 = vmatprep.subr.mxu0 0.0
      %394 = vmatpush2.msra.mxu0 0.0
      %395 = vmatprep.subr.mxu0 0.0
      %396 = vmatpush2.msra.mxu0 0.0
      %397 = vmatprep.subr.mxu0 0.0
      %398 = vmatpush2.msra.mxu0 0.0
      %399 = vmatprep.subr.mxu0 0.0
      %400 = vmatpush2.msra.mxu0 0.0
      %401 = vmatprep.subr.mxu0 0.0
      %402 = vmatpush2.msra.mxu0 0.0
      %403 = vmatprep.subr.mxu0 0.0
      %404 = vmatpush2.msra.mxu0 0.0
      %405 = vmatprep.subr.mxu0 0.0
      %406 = vmatpush2.msra.mxu0 0.0
      %407 = vmatprep.subr.mxu0 0.0
      %408 = vmatpush2.msra.mxu0 0.0
      %409 = vmatprep.subr.mxu0 0.0
      %410 = vmatpush2.msra.mxu0 0.0
      %411 = vmatprep.subr.mxu0 0.0
      %412 = vmatpush2.msra.mxu0 0.0
      %413 = vmatprep.mubr.f32.mxu0 0.0
      %414 = vmatmul.mubr.f32.gmra.mxu0 %v296
      %v415 = vpop.f32.mrf.mxu0
      %v416 = vadd.f32 0.0, %v415
      %v417 = vpop.f32.mrf.mxu0
      %418 = vmatprep.mubr.f32.mxu0 0.0
      %419 = vmatmul.mubr.f32.gmra.mxu0 %v299
      %v420 = vpop.f32.mrf.mxu0
      %v421 = vadd.f32 0.0, %v420
      %v422 = vpop.f32.mrf.mxu0
      %423 = vmatprep.mubr.f32.mxu0 0.0
      %424 = vmatmul.mubr.f32.gmra.mxu0 %v302
      %v425 = vpop.f32.mrf.mxu0
      %v426 = vadd.f32 0.0, %v425
      %v427 = vpop.f32.mrf.mxu0
      %428 = vmatprep.mubr.f32.mxu0 0.0
      %429 = vmatmul.mubr.f32.gmra.mxu0 %v305
      %v430 = vpop.f32.mrf.mxu0
      %v431 = vadd.f32 0.0, %v430
      %v432 = vpop.f32.mrf.mxu0
      %433 = vmatprep.mubr.f32.mxu0 0.0
      %434 = vmatmul.mubr.f32.gmra.mxu0 %v308
      %v435 = vpop.f32.mrf.mxu0
      %v436 = vadd.f32 0.0, %v435
      %v437 = vpop.f32.mrf.mxu0
      %438 = vmatprep.mubr.f32.mxu0 0.0
      %439 = vmatmul.mubr.f32.gmra.mxu0 %v311
      %v440 = vpop.f32.mrf.mxu0
      %v441 = vadd.f32 0.0, %v440
      %v442 = vpop.f32.mrf.mxu0
      %443 = vmatprep.mubr.f32.mxu0 0.0
      %444 = vmatmul.mubr.f32.gmra.mxu0 %v314
      %v445 = vpop.f32.mrf.mxu0
      %v446 = vadd.f32 0.0, %v445
      %v447 = vpop.f32.mrf.mxu0
      %448 = vmatprep.mubr.f32.mxu0 0.0
      %449 = vmatmul.mubr.f32.gmra.mxu0 %v317
      %v450 = vpop.f32.mrf.mxu0
      %v451 = vadd.f32 0.0, %v450
      %v452 = vpop.f32.mrf.mxu0
      %453 = vmatprep.mubr.f32.mxu0 0.0
      %454 = vmatmul.mubr.f32.gmra.mxu0 %v320
      %v455 = vpop.f32.mrf.mxu0
      %v456 = vadd.f32 0.0, %v455
      %v457 = vpop.f32.mrf.mxu0
      %458 = vmatprep.mubr.f32.mxu0 0.0
      %459 = vmatmul.mubr.f32.gmra.mxu0 %v323
      %v460 = vpop.f32.mrf.mxu0
      %v461 = vadd.f32 0.0, %v460
      %v462 = vpop.f32.mrf.mxu0
      %463 = vmatprep.mubr.f32.mxu0 0.0
      %464 = vmatmul.mubr.f32.gmra.mxu0 %v326
      %v465 = vpop.f32.mrf.mxu0
      %v466 = vadd.f32 0.0, %v465
      %v467 = vpop.f32.mrf.mxu0
      %468 = vmatprep.mubr.f32.mxu0 0.0
      %469 = vmatmul.mubr.f32.gmra.mxu0 %v329
      %v470 = vpop.f32.mrf.mxu0
      %v471 = vadd.f32 0.0, %v470
      %v472 = vpop.f32.mrf.mxu0
      %473 = vmatprep.mubr.f32.mxu0 0.0
      %474 = vmatmul.mubr.f32.gmra.mxu0 %v332
      %v475 = vpop.f32.mrf.mxu0
      %v476 = vadd.f32 0.0, %v475
      %v477 = vpop.f32.mrf.mxu0
      %478 = vmatprep.mubr.f32.mxu0 0.0
      %479 = vmatmul.mubr.f32.gmra.mxu0 %v335
      %v480 = vpop.f32.mrf.mxu0
      %v481 = vadd.f32 0.0, %v480
      %v482 = vpop.f32.mrf.mxu0
      %483 = vmatprep.mubr.f32.mxu0 0.0
      %484 = vmatmul.mubr.f32.gmra.mxu0 %v338
      %v485 = vpop.f32.mrf.mxu0
      %v486 = vadd.f32 0.0, %v485
      %v487 = vpop.f32.mrf.mxu0
      %488 = vmatprep.mubr.f32.mxu0 0.0
      %489 = vmatmul.mubr.f32.gmra.mxu0 %v341
      %v490 = vpop.f32.mrf.mxu0
      %v491 = vadd.f32 0.0, %v490
      %v492 = vpop.f32.mrf.mxu0
      %493 = vmatprep.mubr.f32.mxu0 0.0
      %494 = vmatmul.mubr.f32.gmra.mxu0 %v344
      %v495 = vpop.f32.mrf.mxu0
      %v496 = vadd.f32 0.0, %v495
      %v497 = vpop.f32.mrf.mxu0
      %498 = vmatprep.mubr.f32.mxu0 0.0
      %499 = vmatmul.mubr.f32.gmra.mxu0 %v347
      %v500 = vpop.f32.mrf.mxu0
      %v501 = vadd.f32 0.0, %v500
      %v502 = vpop.f32.mrf.mxu0
      %503 = vdwg.mxu0
      %v505 = vsel %vm294, %v255, 0
      %v508 = vsel %vm294, %v256, 0
      %v511 = vsel %vm294, %v257, 0
      %v514 = vsel %vm294, %v258, 0
      %v517 = vsel %vm294, %v259, 0
      %v520 = vsel %vm294, %v260, 0
      %v523 = vsel %vm294, %v261, 0
      %v526 = vsel %vm294, %v262, 0
      %v529 = vsel %vm294, %v263, 0
      %v532 = vsel %vm294, %v264, 0
      %v535 = vsel %vm294, %v265, 0
      %v538 = vsel %vm294, %v266, 0
      %v541 = vsel %vm294, %v267, 0
      %v544 = vsel %vm294, %v268, 0
      %v547 = vsel %vm294, %v269, 0
      %v550 = vsel %vm294, %v270, 0
      %v553 = vsel %vm294, %v271, 0
      %v556 = vsel %vm294, %v272, 0
      %558 = vmatprep.subr.mxu0 0.0
      %559 = vmatpush1.msra.mxu0 0.0
      %560 = vmatprep.subr.mxu0 0.0
      %561 = vmatpush1.msra.mxu0 0.0
      %562 = vmatprep.subr.mxu0 0.0
      %563 = vmatpush1.msra.mxu0 0.0
      %564 = vmatprep.subr.mxu0 0.0
      %565 = vmatpush1.msra.mxu0 0.0
      %566 = vmatprep.subr.mxu0 0.0
      %567 = vmatpush1.msra.mxu0 0.0
      %568 = vmatprep.subr.mxu0 0.0
      %569 = vmatpush1.msra.mxu0 0.0
      %570 = vmatprep.subr.mxu0 0.0
      %571 = vmatpush1.msra.mxu0 0.0
      %572 = vmatprep.subr.mxu0 0.0
      %573 = vmatpush1.msra.mxu0 0.0
      %574 = vmatprep.subr.mxu0 0.0
      %575 = vmatpush1.msra.mxu0 0.0
      %576 = vmatprep.subr.mxu0 0.0
      %577 = vmatpush1.msra.mxu0 0.0
      %578 = vmatprep.subr.mxu0 0.0
      %579 = vmatpush1.msra.mxu0 0.0
      %580 = vmatprep.subr.mxu0 0.0
      %581 = vmatpush1.msra.mxu0 0.0
      %582 = vmatprep.subr.mxu0 0.0
      %583 = vmatpush1.msra.mxu0 0.0
      %584 = vmatprep.subr.mxu0 0.0
      %585 = vmatpush1.msra.mxu0 0.0
      %586 = vmatprep.subr.mxu0 0.0
      %587 = vmatpush1.msra.mxu0 0.0
      %588 = vmatprep.subr.mxu0 0.0
      %589 = vmatpush1.msra.mxu0 %v273
      %590 = vmatprep.subr.mxu0 0.0
      %591 = vmatpush2.msra.mxu0 0.0
      %592 = vmatprep.subr.mxu0 0.0
      %593 = vmatpush2.msra.mxu0 0.0
      %594 = vmatprep.subr.mxu0 0.0
      %595 = vmatpush2.msra.mxu0 0.0
      %596 = vmatprep.subr.mxu0 0.0
      %597 = vmatpush2.msra.mxu0 0.0
      %598 = vmatprep.subr.mxu0 0.0
      %599 = vmatpush2.msra.mxu0 0.0
      %600 = vmatprep.subr.mxu0 0.0
      %601 = vmatpush2.msra.mxu0 0.0
      %602 = vmatprep.subr.mxu0 0.0
      %603 = vmatpush2.msra.mxu0 0.0
      %604 = vmatprep.subr.mxu0 0.0
      %605 = vmatpush2.msra.mxu0 0.0
      %606 = vmatprep.subr.mxu0 0.0
      %607 = vmatpush2.msra.mxu0 0.0
      %608 = vmatprep.subr.mxu0 0.0
      %609 = vmatpush2.msra.mxu0 0.0
      %610 = vmatprep.subr.mxu0 0.0
      %611 = vmatpush2.msra.mxu0 0.0
      %612 = vmatprep.subr.mxu0 0.0
      %613 = vmatpush2.msra.mxu0 0.0
      %614 = vmatprep.subr.mxu0 0.0
      %615 = vmatpush2.msra.mxu0 0.0
      %616 = vmatprep.subr.mxu0 0.0
      %617 = vmatpush2.msra.mxu0 0.0
      %618 = vmatprep.subr.mxu0 0.0
      %619 = vmatpush2.msra.mxu0 0.0
      %620 = vmatprep.subr.mxu0 0.0
      %621 = vmatpush2.msra.mxu0 0.0
      %622 = vmatprep.mubr.f32.mxu0 0.0
      %623 = vmatmul.mubr.f32.gmra.mxu0 %v505
      %v624 = vpop.f32.mrf.mxu0
      %v625 = vadd.f32 %v416, %v624
      %v626 = vpop.f32.mrf.mxu0
      %627 = vmatprep.mubr.f32.mxu0 0.0
      %628 = vmatmul.mubr.f32.gmra.mxu0 %v508
      %v629 = vpop.f32.mrf.mxu0
      %v630 = vadd.f32 %v421, %v629
      %v631 = vpop.f32.mrf.mxu0
      %632 = vmatprep.mubr.f32.mxu0 0.0
      %633 = vmatmul.mubr.f32.gmra.mxu0 %v511
      %v634 = vpop.f32.mrf.mxu0
      %v635 = vadd.f32 %v426, %v634
      %v636 = vpop.f32.mrf.mxu0
      %637 = vmatprep.mubr.f32.mxu0 0.0
      %638 = vmatmul.mubr.f32.gmra.mxu0 %v514
      %v639 = vpop.f32.mrf.mxu0
      %v640 = vadd.f32 %v431, %v639
      %v641 = vpop.f32.mrf.mxu0
      %642 = vmatprep.mubr.f32.mxu0 0.0
      %643 = vmatmul.mubr.f32.gmra.mxu0 %v517
      %v644 = vpop.f32.mrf.mxu0
      %v645 = vadd.f32 %v436, %v644
      %v646 = vpop.f32.mrf.mxu0
      %647 = vmatprep.mubr.f32.mxu0 0.0
      %648 = vmatmul.mubr.f32.gmra.mxu0 %v520
      %v649 = vpop.f32.mrf.mxu0
      %v650 = vadd.f32 %v441, %v649
      %v651 = vpop.f32.mrf.mxu0
      %652 = vmatprep.mubr.f32.mxu0 0.0
      %653 = vmatmul.mubr.f32.gmra.mxu0 %v523
      %v654 = vpop.f32.mrf.mxu0
      %v655 = vadd.f32 %v446, %v654
      %v656 = vpop.f32.mrf.mxu0
      %657 = vmatprep.mubr.f32.mxu0 0.0
      %658 = vmatmul.mubr.f32.gmra.mxu0 %v526
      %v659 = vpop.f32.mrf.mxu0
      %v660 = vadd.f32 %v451, %v659
      %v661 = vpop.f32.mrf.mxu0
      %662 = vmatprep.mubr.f32.mxu0 0.0
      %663 = vmatmul.mubr.f32.gmra.mxu0 %v529
      %v664 = vpop.f32.mrf.mxu0
      %v665 = vadd.f32 %v456, %v664
      %v666 = vpop.f32.mrf.mxu0
      %667 = vmatprep.mubr.f32.mxu0 0.0
      %668 = vmatmul.mubr.f32.gmra.mxu0 %v532
      %v669 = vpop.f32.mrf.mxu0
      %v670 = vadd.f32 %v461, %v669
      %v671 = vpop.f32.mrf.mxu0
      %672 = vmatprep.mubr.f32.mxu0 0.0
      %673 = vmatmul.mubr.f32.gmra.mxu0 %v535
      %v674 = vpop.f32.mrf.mxu0
      %v675 = vadd.f32 %v466, %v674
      %v676 = vpop.f32.mrf.mxu0
      %677 = vmatprep.mubr.f32.mxu0 0.0
      %678 = vmatmul.mubr.f32.gmra.mxu0 %v538
      %v679 = vpop.f32.mrf.mxu0
      %v680 = vadd.f32 %v471, %v679
      %v681 = vpop.f32.mrf.mxu0
      %682 = vmatprep.mubr.f32.mxu0 0.0
      %683 = vmatmul.mubr.f32.gmra.mxu0 %v541
      %v684 = vpop.f32.mrf.mxu0
      %v685 = vadd.f32 %v476, %v684
      %v686 = vpop.f32.mrf.mxu0
      %687 = vmatprep.mubr.f32.mxu0 0.0
      %688 = vmatmul.mubr.f32.gmra.mxu0 %v544
      %v689 = vpop.f32.mrf.mxu0
      %v690 = vadd.f32 %v481, %v689
      %v691 = vpop.f32.mrf.mxu0
      %692 = vmatprep.mubr.f32.mxu0 0.0
      %693 = vmatmul.mubr.f32.gmra.mxu0 %v547
      %v694 = vpop.f32.mrf.mxu0
      %v695 = vadd.f32 %v486, %v694
      %v696 = vpop.f32.mrf.mxu0
      %697 = vmatprep.mubr.f32.mxu0 0.0
      %698 = vmatmul.mubr.f32.gmra.mxu0 %v550
      %v699 = vpop.f32.mrf.mxu0
      %v700 = vadd.f32 %v491, %v699
      %v701 = vpop.f32.mrf.mxu0
      %702 = vmatprep.mubr.f32.mxu0 0.0
      %703 = vmatmul.mubr.f32.gmra.mxu0 %v553
      %v704 = vpop.f32.mrf.mxu0
      %v705 = vadd.f32 %v496, %v704
      %v706 = vpop.f32.mrf.mxu0
      %707 = vmatprep.mubr.f32.mxu0 0.0
      %708 = vmatmul.mubr.f32.gmra.mxu0 %v556
      %v709 = vpop.f32.mrf.mxu0
      %v710 = vadd.f32 %v501, %v709
      %v711 = vpop.f32.mrf.mxu0
      %712 = vdwg.mxu0
      %v713 = vld [vmem:[%s237 + $0x2] sm:$0xff]
      %v714 = vld [vmem:[%s237 + $0xa] sm:$0xff]
      %v715 = vld [vmem:[%s237 + $0x12] sm:$0xff]
      %v716 = vld [vmem:[%s237 + $0x1a] sm:$0xff]
      %v717 = vld [vmem:[%s237 + $0x22] sm:$0xff]
      %v718 = vld [vmem:[%s237 + $0x2a] sm:$0xff]
      %v719 = vld [vmem:[%s237 + $0x32] sm:$0xff]
      %v720 = vld [vmem:[%s237 + $0x3a] sm:$0xff]
      %v721 = vld [vmem:[%s237 + $0x42] sm:$0xff]
      %v722 = vld [vmem:[%s237 + $0x4a] sm:$0xff]
      %v723 = vld [vmem:[%s237 + $0x52] sm:$0xff]
      %v724 = vld [vmem:[%s237 + $0x5a] sm:$0xff]
      %v725 = vld [vmem:[%s237 + $0x62] sm:$0xff]
      %v726 = vld [vmem:[%s237 + $0x6a] sm:$0xff]
      %v727 = vld [vmem:[%s237 + $0x72] sm:$0xff]
      %v728 = vld [vmem:[%s237 + $0x7a] sm:$0xff]
      %v729 = vld [vmem:[%s237 + $0x82] sm:$0xff]
      %v730 = vld [vmem:[%s237 + $0x8a] sm:$0xff]
      %s731 = scalar_lea.vmem %s1, 16
      %v732 = vld [vmem:[%s731] sm:$0xff]
      %v734 = vsel %vm294, %v713, 0
      %v737 = vsel %vm294, %v714, 0
      %v740 = vsel %vm294, %v715, 0
      %v743 = vsel %vm294, %v716, 0
      %v746 = vsel %vm294, %v717, 0
      %v749 = vsel %vm294, %v718, 0
      %v752 = vsel %vm294, %v719, 0
      %v755 = vsel %vm294, %v720, 0
      %v758 = vsel %vm294, %v721, 0
      %v761 = vsel %vm294, %v722, 0
      %v764 = vsel %vm294, %v723, 0
      %v767 = vsel %vm294, %v724, 0
      %v770 = vsel %vm294, %v725, 0
      %v773 = vsel %vm294, %v726, 0
      %v776 = vsel %vm294, %v727, 0
      %v779 = vsel %vm294, %v728, 0
      %v782 = vsel %vm294, %v729, 0
      %v785 = vsel %vm294, %v730, 0
      %787 = vmatprep.subr.mxu0 0.0
      %788 = vmatpush1.msra.mxu0 0.0
      %789 = vmatprep.subr.mxu0 0.0
      %790 = vmatpush1.msra.mxu0 0.0
      %791 = vmatprep.subr.mxu0 0.0
      %792 = vmatpush1.msra.mxu0 0.0
      %793 = vmatprep.subr.mxu0 0.0
      %794 = vmatpush1.msra.mxu0 0.0
      %795 = vmatprep.subr.mxu0 0.0
      %796 = vmatpush1.msra.mxu0 0.0
      %797 = vmatprep.subr.mxu0 0.0
      %798 = vmatpush1.msra.mxu0 0.0
      %799 = vmatprep.subr.mxu0 0.0
      %800 = vmatpush1.msra.mxu0 0.0
      %801 = vmatprep.subr.mxu0 0.0
      %802 = vmatpush1.msra.mxu0 0.0
      %803 = vmatprep.subr.mxu0 0.0
      %804 = vmatpush1.msra.mxu0 0.0
      %805 = vmatprep.subr.mxu0 0.0
      %806 = vmatpush1.msra.mxu0 0.0
      %807 = vmatprep.subr.mxu0 0.0
      %808 = vmatpush1.msra.mxu0 0.0
      %809 = vmatprep.subr.mxu0 0.0
      %810 = vmatpush1.msra.mxu0 0.0
      %811 = vmatprep.subr.mxu0 0.0
      %812 = vmatpush1.msra.mxu0 0.0
      %813 = vmatprep.subr.mxu0 0.0
      %814 = vmatpush1.msra.mxu0 0.0
      %815 = vmatprep.subr.mxu0 0.0
      %816 = vmatpush1.msra.mxu0 0.0
      %817 = vmatprep.subr.mxu0 0.0
      %818 = vmatpush1.msra.mxu0 %v732
      %819 = vmatprep.subr.mxu0 0.0
      %820 = vmatpush2.msra.mxu0 0.0
      %821 = vmatprep.subr.mxu0 0.0
      %822 = vmatpush2.msra.mxu0 0.0
      %823 = vmatprep.subr.mxu0 0.0
      %824 = vmatpush2.msra.mxu0 0.0
      %825 = vmatprep.subr.mxu0 0.0
      %826 = vmatpush2.msra.mxu0 0.0
      %827 = vmatprep.subr.mxu0 0.0
      %828 = vmatpush2.msra.mxu0 0.0
      %829 = vmatprep.subr.mxu0 0.0
      %830 = vmatpush2.msra.mxu0 0.0
      %831 = vmatprep.subr.mxu0 0.0
      %832 = vmatpush2.msra.mxu0 0.0
      %833 = vmatprep.subr.mxu0 0.0
      %834 = vmatpush2.msra.mxu0 0.0
      %835 = vmatprep.subr.mxu0 0.0
      %836 = vmatpush2.msra.mxu0 0.0
      %837 = vmatprep.subr.mxu0 0.0
      %838 = vmatpush2.msra.mxu0 0.0
      %839 = vmatprep.subr.mxu0 0.0
      %840 = vmatpush2.msra.mxu0 0.0
      %841 = vmatprep.subr.mxu0 0.0
      %842 = vmatpush2.msra.mxu0 0.0
      %843 = vmatprep.subr.mxu0 0.0
      %844 = vmatpush2.msra.mxu0 0.0
      %845 = vmatprep.subr.mxu0 0.0
      %846 = vmatpush2.msra.mxu0 0.0
      %847 = vmatprep.subr.mxu0 0.0
      %848 = vmatpush2.msra.mxu0 0.0
      %849 = vmatprep.subr.mxu0 0.0
      %850 = vmatpush2.msra.mxu0 0.0
      %851 = vmatprep.mubr.f32.mxu0 0.0
      %852 = vmatmul.mubr.f32.gmra.mxu0 %v734
      %v853 = vpop.f32.mrf.mxu0
      %v854 = vadd.f32 0.0, %v853
      %v855 = vpop.f32.mrf.mxu0
      %856 = vmatprep.mubr.f32.mxu0 0.0
      %857 = vmatmul.mubr.f32.gmra.mxu0 %v737
      %v858 = vpop.f32.mrf.mxu0
      %v859 = vadd.f32 0.0, %v858
      %v860 = vpop.f32.mrf.mxu0
      %861 = vmatprep.mubr.f32.mxu0 0.0
      %862 = vmatmul.mubr.f32.gmra.mxu0 %v740
      %v863 = vpop.f32.mrf.mxu0
      %v864 = vadd.f32 0.0, %v863
      %v865 = vpop.f32.mrf.mxu0
      %866 = vmatprep.mubr.f32.mxu0 0.0
      %867 = vmatmul.mubr.f32.gmra.mxu0 %v743
      %v868 = vpop.f32.mrf.mxu0
      %v869 = vadd.f32 0.0, %v868
      %v870 = vpop.f32.mrf.mxu0
      %871 = vmatprep.mubr.f32.mxu0 0.0
      %872 = vmatmul.mubr.f32.gmra.mxu0 %v746
      %v873 = vpop.f32.mrf.mxu0
      %v874 = vadd.f32 0.0, %v873
      %v875 = vpop.f32.mrf.mxu0
      %876 = vmatprep.mubr.f32.mxu0 0.0
      %877 = vmatmul.mubr.f32.gmra.mxu0 %v749
      %v878 = vpop.f32.mrf.mxu0
      %v879 = vadd.f32 0.0, %v878
      %v880 = vpop.f32.mrf.mxu0
      %881 = vmatprep.mubr.f32.mxu0 0.0
      %882 = vmatmul.mubr.f32.gmra.mxu0 %v752
      %v883 = vpop.f32.mrf.mxu0
      %v884 = vadd.f32 0.0, %v883
      %v885 = vpop.f32.mrf.mxu0
      %886 = vmatprep.mubr.f32.mxu0 0.0
      %887 = vmatmul.mubr.f32.gmra.mxu0 %v755
      %v888 = vpop.f32.mrf.mxu0
      %v889 = vadd.f32 0.0, %v888
      %v890 = vpop.f32.mrf.mxu0
      %891 = vmatprep.mubr.f32.mxu0 0.0
      %892 = vmatmul.mubr.f32.gmra.mxu0 %v758
      %v893 = vpop.f32.mrf.mxu0
      %v894 = vadd.f32 0.0, %v893
      %v895 = vpop.f32.mrf.mxu0
      %896 = vmatprep.mubr.f32.mxu0 0.0
      %897 = vmatmul.mubr.f32.gmra.mxu0 %v761
      %v898 = vpop.f32.mrf.mxu0
      %v899 = vadd.f32 0.0, %v898
      %v900 = vpop.f32.mrf.mxu0
      %901 = vmatprep.mubr.f32.mxu0 0.0
      %902 = vmatmul.mubr.f32.gmra.mxu0 %v764
      %v903 = vpop.f32.mrf.mxu0
      %v904 = vadd.f32 0.0, %v903
      %v905 = vpop.f32.mrf.mxu0
      %906 = vmatprep.mubr.f32.mxu0 0.0
      %907 = vmatmul.mubr.f32.gmra.mxu0 %v767
      %v908 = vpop.f32.mrf.mxu0
      %v909 = vadd.f32 0.0, %v908
      %v910 = vpop.f32.mrf.mxu0
      %911 = vmatprep.mubr.f32.mxu0 0.0
      %912 = vmatmul.mubr.f32.gmra.mxu0 %v770
      %v913 = vpop.f32.mrf.mxu0
      %v914 = vadd.f32 0.0, %v913
      %v915 = vpop.f32.mrf.mxu0
      %916 = vmatprep.mubr.f32.mxu0 0.0
      %917 = vmatmul.mubr.f32.gmra.mxu0 %v773
      %v918 = vpop.f32.mrf.mxu0
      %v919 = vadd.f32 0.0, %v918
      %v920 = vpop.f32.mrf.mxu0
      %921 = vmatprep.mubr.f32.mxu0 0.0
      %922 = vmatmul.mubr.f32.gmra.mxu0 %v776
      %v923 = vpop.f32.mrf.mxu0
      %v924 = vadd.f32 0.0, %v923
      %v925 = vpop.f32.mrf.mxu0
      %926 = vmatprep.mubr.f32.mxu0 0.0
      %927 = vmatmul.mubr.f32.gmra.mxu0 %v779
      %v928 = vpop.f32.mrf.mxu0
      %v929 = vadd.f32 0.0, %v928
      %v930 = vpop.f32.mrf.mxu0
      %931 = vmatprep.mubr.f32.mxu0 0.0
      %932 = vmatmul.mubr.f32.gmra.mxu0 %v782
      %v933 = vpop.f32.mrf.mxu0
      %v934 = vadd.f32 0.0, %v933
      %v935 = vpop.f32.mrf.mxu0
      %936 = vmatprep.mubr.f32.mxu0 0.0
      %937 = vmatmul.mubr.f32.gmra.mxu0 %v785
      %v938 = vpop.f32.mrf.mxu0
      %v939 = vadd.f32 0.0, %v938
      %v940 = vpop.f32.mrf.mxu0
      %941 = vdwg.mxu0
      %v942 = vadd.f32 %v625, %v854
      %v943 = vadd.f32 %v630, %v859
      %v944 = vadd.f32 %v635, %v864
      %v945 = vadd.f32 %v640, %v869
      %v946 = vadd.f32 %v645, %v874
      %v947 = vadd.f32 %v650, %v879
      %v948 = vadd.f32 %v655, %v884
      %v949 = vadd.f32 %v660, %v889
      %v950 = vadd.f32 %v665, %v894
      %v951 = vadd.f32 %v670, %v899
      %v952 = vadd.f32 %v675, %v904
      %v953 = vadd.f32 %v680, %v909
      %v954 = vadd.f32 %v685, %v914
      %v955 = vadd.f32 %v690, %v919
      %v956 = vadd.f32 %v695, %v924
      %v957 = vadd.f32 %v700, %v929
      %v958 = vadd.f32 %v705, %v934
      %v959 = vadd.f32 %v710, %v939
      %v960 = vld [vmem:[%s237 + $0x12] sm:$0xff]
      %v961 = vld [vmem:[%s237 + $0x1a] sm:$0xff]
      %v962 = vld [vmem:[%s237 + $0x22] sm:$0xff]
      %v963 = vld [vmem:[%s237 + $0x2a] sm:$0xff]
      %v964 = vld [vmem:[%s237 + $0x32] sm:$0xff]
      %v965 = vld [vmem:[%s237 + $0x3a] sm:$0xff]
      %v966 = vld [vmem:[%s237 + $0x42] sm:$0xff]
      %v967 = vld [vmem:[%s237 + $0x4a] sm:$0xff]
      %v968 = vld [vmem:[%s237 + $0x52] sm:$0xff]
      %v969 = vld [vmem:[%s237 + $0x5a] sm:$0xff]
      %v970 = vld [vmem:[%s237 + $0x62] sm:$0xff]
      %v971 = vld [vmem:[%s237 + $0x6a] sm:$0xff]
      %v972 = vld [vmem:[%s237 + $0x72] sm:$0xff]
      %v973 = vld [vmem:[%s237 + $0x7a] sm:$0xff]
      %v974 = vld [vmem:[%s237 + $0x82] sm:$0xff]
      %v975 = vld [vmem:[%s237 + $0x8a] sm:$0xff]
      %v976 = vld [vmem:[%s237 + $0x92] sm:$0xff]
      %v977 = vld [vmem:[%s237 + $0x9a] sm:$0xff]
      %s978 = scalar_lea.vmem %s1, 24
      %v979 = vld [vmem:[%s978] sm:$0xff]
      %v981 = vsel %vm294, %v960, 0
      %v984 = vsel %vm294, %v961, 0
      %v987 = vsel %vm294, %v962, 0
      %v990 = vsel %vm294, %v963, 0
      %v993 = vsel %vm294, %v964, 0
      %v996 = vsel %vm294, %v965, 0
      %v999 = vsel %vm294, %v966, 0
      %v1002 = vsel %vm294, %v967, 0
      %v1005 = vsel %vm294, %v968, 0
      %v1008 = vsel %vm294, %v969, 0
      %v1011 = vsel %vm294, %v970, 0
      %v1014 = vsel %vm294, %v971, 0
      %v1017 = vsel %vm294, %v972, 0
      %v1020 = vsel %vm294, %v973, 0
      %v1023 = vsel %vm294, %v974, 0
      %v1026 = vsel %vm294, %v975, 0
      %v1029 = vsel %vm294, %v976, 0
      %v1032 = vsel %vm294, %v977, 0
      %1034 = vmatprep.subr.mxu0 0.0
      %1035 = vmatpush1.msra.mxu0 0.0
      %1036 = vmatprep.subr.mxu0 0.0
      %1037 = vmatpush1.msra.mxu0 0.0
      %1038 = vmatprep.subr.mxu0 0.0
      %1039 = vmatpush1.msra.mxu0 0.0
      %1040 = vmatprep.subr.mxu0 0.0
      %1041 = vmatpush1.msra.mxu0 0.0
      %1042 = vmatprep.subr.mxu0 0.0
      %1043 = vmatpush1.msra.mxu0 0.0
      %1044 = vmatprep.subr.mxu0 0.0
      %1045 = vmatpush1.msra.mxu0 0.0
      %1046 = vmatprep.subr.mxu0 0.0
      %1047 = vmatpush1.msra.mxu0 0.0
      %1048 = vmatprep.subr.mxu0 0.0
      %1049 = vmatpush1.msra.mxu0 0.0
      %1050 = vmatprep.subr.mxu0 0.0
      %1051 = vmatpush1.msra.mxu0 0.0
      %1052 = vmatprep.subr.mxu0 0.0
      %1053 = vmatpush1.msra.mxu0 0.0
      %1054 = vmatprep.subr.mxu0 0.0
      %1055 = vmatpush1.msra.mxu0 0.0
      %1056 = vmatprep.subr.mxu0 0.0
      %1057 = vmatpush1.msra.mxu0 0.0
      %1058 = vmatprep.subr.mxu0 0.0
      %1059 = vmatpush1.msra.mxu0 0.0
      %1060 = vmatprep.subr.mxu0 0.0
      %1061 = vmatpush1.msra.mxu0 0.0
      %1062 = vmatprep.subr.mxu0 0.0
      %1063 = vmatpush1.msra.mxu0 0.0
      %1064 = vmatprep.subr.mxu0 0.0
      %1065 = vmatpush1.msra.mxu0 %v979
      %1066 = vmatprep.subr.mxu0 0.0
      %1067 = vmatpush2.msra.mxu0 0.0
      %1068 = vmatprep.subr.mxu0 0.0
      %1069 = vmatpush2.msra.mxu0 0.0
      %1070 = vmatprep.subr.mxu0 0.0
      %1071 = vmatpush2.msra.mxu0 0.0
      %1072 = vmatprep.subr.mxu0 0.0
      %1073 = vmatpush2.msra.mxu0 0.0
      %1074 = vmatprep.subr.mxu0 0.0
      %1075 = vmatpush2.msra.mxu0 0.0
      %1076 = vmatprep.subr.mxu0 0.0
      %1077 = vmatpush2.msra.mxu0 0.0
      %1078 = vmatprep.subr.mxu0 0.0
      %1079 = vmatpush2.msra.mxu0 0.0
      %1080 = vmatprep.subr.mxu0 0.0
      %1081 = vmatpush2.msra.mxu0 0.0
      %1082 = vmatprep.subr.mxu0 0.0
      %1083 = vmatpush2.msra.mxu0 0.0
      %1084 = vmatprep.subr.mxu0 0.0
      %1085 = vmatpush2.msra.mxu0 0.0
      %1086 = vmatprep.subr.mxu0 0.0
      %1087 = vmatpush2.msra.mxu0 0.0
      %1088 = vmatprep.subr.mxu0 0.0
      %1089 = vmatpush2.msra.mxu0 0.0
      %1090 = vmatprep.subr.mxu0 0.0
      %1091 = vmatpush2.msra.mxu0 0.0
      %1092 = vmatprep.subr.mxu0 0.0
      %1093 = vmatpush2.msra.mxu0 0.0
      %1094 = vmatprep.subr.mxu0 0.0
      %1095 = vmatpush2.msra.mxu0 0.0
      %1096 = vmatprep.subr.mxu0 0.0
      %1097 = vmatpush2.msra.mxu0 0.0
      %1098 = vmatprep.mubr.f32.mxu0 0.0
      %1099 = vmatmul.mubr.f32.gmra.mxu0 %v981
      %v1100 = vpop.f32.mrf.mxu0
      %v1101 = vadd.f32 0.0, %v1100
      %v1102 = vpop.f32.mrf.mxu0
      %1103 = vmatprep.mubr.f32.mxu0 0.0
      %1104 = vmatmul.mubr.f32.gmra.mxu0 %v984
      %v1105 = vpop.f32.mrf.mxu0
      %v1106 = vadd.f32 0.0, %v1105
      %v1107 = vpop.f32.mrf.mxu0
      %1108 = vmatprep.mubr.f32.mxu0 0.0
      %1109 = vmatmul.mubr.f32.gmra.mxu0 %v987
      %v1110 = vpop.f32.mrf.mxu0
      %v1111 = vadd.f32 0.0, %v1110
      %v1112 = vpop.f32.mrf.mxu0
      %1113 = vmatprep.mubr.f32.mxu0 0.0
      %1114 = vmatmul.mubr.f32.gmra.mxu0 %v990
      %v1115 = vpop.f32.mrf.mxu0
      %v1116 = vadd.f32 0.0, %v1115
      %v1117 = vpop.f32.mrf.mxu0
      %1118 = vmatprep.mubr.f32.mxu0 0.0
      %1119 = vmatmul.mubr.f32.gmra.mxu0 %v993
      %v1120 = vpop.f32.mrf.mxu0
      %v1121 = vadd.f32 0.0, %v1120
      %v1122 = vpop.f32.mrf.mxu0
      %1123 = vmatprep.mubr.f32.mxu0 0.0
      %1124 = vmatmul.mubr.f32.gmra.mxu0 %v996
      %v1125 = vpop.f32.mrf.mxu0
      %v1126 = vadd.f32 0.0, %v1125
      %v1127 = vpop.f32.mrf.mxu0
      %1128 = vmatprep.mubr.f32.mxu0 0.0
      %1129 = vmatmul.mubr.f32.gmra.mxu0 %v999
      %v1130 = vpop.f32.mrf.mxu0
      %v1131 = vadd.f32 0.0, %v1130
      %v1132 = vpop.f32.mrf.mxu0
      %1133 = vmatprep.mubr.f32.mxu0 0.0
      %1134 = vmatmul.mubr.f32.gmra.mxu0 %v1002
      %v1135 = vpop.f32.mrf.mxu0
      %v1136 = vadd.f32 0.0, %v1135
      %v1137 = vpop.f32.mrf.mxu0
      %1138 = vmatprep.mubr.f32.mxu0 0.0
      %1139 = vmatmul.mubr.f32.gmra.mxu0 %v1005
      %v1140 = vpop.f32.mrf.mxu0
      %v1141 = vadd.f32 0.0, %v1140
      %v1142 = vpop.f32.mrf.mxu0
      %1143 = vmatprep.mubr.f32.mxu0 0.0
      %1144 = vmatmul.mubr.f32.gmra.mxu0 %v1008
      %v1145 = vpop.f32.mrf.mxu0
      %v1146 = vadd.f32 0.0, %v1145
      %v1147 = vpop.f32.mrf.mxu0
      %1148 = vmatprep.mubr.f32.mxu0 0.0
      %1149 = vmatmul.mubr.f32.gmra.mxu0 %v1011
      %v1150 = vpop.f32.mrf.mxu0
      %v1151 = vadd.f32 0.0, %v1150
      %v1152 = vpop.f32.mrf.mxu0
      %1153 = vmatprep.mubr.f32.mxu0 0.0
      %1154 = vmatmul.mubr.f32.gmra.mxu0 %v1014
      %v1155 = vpop.f32.mrf.mxu0
      %v1156 = vadd.f32 0.0, %v1155
      %v1157 = vpop.f32.mrf.mxu0
      %1158 = vmatprep.mubr.f32.mxu0 0.0
      %1159 = vmatmul.mubr.f32.gmra.mxu0 %v1017
      %v1160 = vpop.f32.mrf.mxu0
      %v1161 = vadd.f32 0.0, %v1160
      %v1162 = vpop.f32.mrf.mxu0
      %1163 = vmatprep.mubr.f32.mxu0 0.0
      %1164 = vmatmul.mubr.f32.gmra.mxu0 %v1020
      %v1165 = vpop.f32.mrf.mxu0
      %v1166 = vadd.f32 0.0, %v1165
      %v1167 = vpop.f32.mrf.mxu0
      %1168 = vmatprep.mubr.f32.mxu0 0.0
      %1169 = vmatmul.mubr.f32.gmra.mxu0 %v1023
      %v1170 = vpop.f32.mrf.mxu0
      %v1171 = vadd.f32 0.0, %v1170
      %v1172 = vpop.f32.mrf.mxu0
      %1173 = vmatprep.mubr.f32.mxu0 0.0
      %1174 = vmatmul.mubr.f32.gmra.mxu0 %v1026
      %v1175 = vpop.f32.mrf.mxu0
      %v1176 = vadd.f32 0.0, %v1175
      %v1177 = vpop.f32.mrf.mxu0
      %1178 = vmatprep.mubr.f32.mxu0 0.0
      %1179 = vmatmul.mubr.f32.gmra.mxu0 %v1029
      %v1180 = vpop.f32.mrf.mxu0
      %v1181 = vadd.f32 0.0, %v1180
      %v1182 = vpop.f32.mrf.mxu0
      %1183 = vmatprep.mubr.f32.mxu0 0.0
      %1184 = vmatmul.mubr.f32.gmra.mxu0 %v1032
      %v1185 = vpop.f32.mrf.mxu0
      %v1186 = vadd.f32 0.0, %v1185
      %v1187 = vpop.f32.mrf.mxu0
      %1188 = vdwg.mxu0
      %v1189 = vadd.f32 %v942, %v1101
      %v1190 = vadd.f32 %v943, %v1106
      %v1191 = vadd.f32 %v944, %v1111
      %v1192 = vadd.f32 %v945, %v1116
      %v1193 = vadd.f32 %v946, %v1121
      %v1194 = vadd.f32 %v947, %v1126
      %v1195 = vadd.f32 %v948, %v1131
      %v1196 = vadd.f32 %v949, %v1136
      %v1197 = vadd.f32 %v950, %v1141
      %v1198 = vadd.f32 %v951, %v1146
      %v1199 = vadd.f32 %v952, %v1151
      %v1200 = vadd.f32 %v953, %v1156
      %v1201 = vadd.f32 %v954, %v1161
      %v1202 = vadd.f32 %v955, %v1166
      %v1203 = vadd.f32 %v956, %v1171
      %v1204 = vadd.f32 %v957, %v1176
      %v1205 = vadd.f32 %v958, %v1181
      %v1206 = vadd.f32 %v959, %v1186
      %v1207 = vld [vmem:[%s237 + $0x13] sm:$0xff]
      %v1208 = vld [vmem:[%s237 + $0x1b] sm:$0xff]
      %v1209 = vld [vmem:[%s237 + $0x23] sm:$0xff]
      %v1210 = vld [vmem:[%s237 + $0x2b] sm:$0xff]
      %v1211 = vld [vmem:[%s237 + $0x33] sm:$0xff]
      %v1212 = vld [vmem:[%s237 + $0x3b] sm:$0xff]
      %v1213 = vld [vmem:[%s237 + $0x43] sm:$0xff]
      %v1214 = vld [vmem:[%s237 + $0x4b] sm:$0xff]
      %v1215 = vld [vmem:[%s237 + $0x53] sm:$0xff]
      %v1216 = vld [vmem:[%s237 + $0x5b] sm:$0xff]
      %v1217 = vld [vmem:[%s237 + $0x63] sm:$0xff]
      %v1218 = vld [vmem:[%s237 + $0x6b] sm:$0xff]
      %v1219 = vld [vmem:[%s237 + $0x73] sm:$0xff]
      %v1220 = vld [vmem:[%s237 + $0x7b] sm:$0xff]
      %v1221 = vld [vmem:[%s237 + $0x83] sm:$0xff]
      %v1222 = vld [vmem:[%s237 + $0x8b] sm:$0xff]
      %v1223 = vld [vmem:[%s237 + $0x93] sm:$0xff]
      %v1224 = vld [vmem:[%s237 + $0x9b] sm:$0xff]
      %s1225 = scalar_lea.vmem %s1, 32
      %v1226 = vld [vmem:[%s1225] sm:$0xff]
      %v1228 = vsel %vm294, %v1207, 0
      %v1231 = vsel %vm294, %v1208, 0
      %v1234 = vsel %vm294, %v1209, 0
      %v1237 = vsel %vm294, %v1210, 0
      %v1240 = vsel %vm294, %v1211, 0
      %v1243 = vsel %vm294, %v1212, 0
      %v1246 = vsel %vm294, %v1213, 0
      %v1249 = vsel %vm294, %v1214, 0
      %v1252 = vsel %vm294, %v1215, 0
      %v1255 = vsel %vm294, %v1216, 0
      %v1258 = vsel %vm294, %v1217, 0
      %v1261 = vsel %vm294, %v1218, 0
      %v1264 = vsel %vm294, %v1219, 0
      %v1267 = vsel %vm294, %v1220, 0
      %v1270 = vsel %vm294, %v1221, 0
      %v1273 = vsel %vm294, %v1222, 0
      %v1276 = vsel %vm294, %v1223, 0
      %v1279 = vsel %vm294, %v1224, 0
      %1281 = vmatprep.subr.mxu0 0.0
      %1282 = vmatpush1.msra.mxu0 0.0
      %1283 = vmatprep.subr.mxu0 0.0
      %1284 = vmatpush1.msra.mxu0 0.0
      %1285 = vmatprep.subr.mxu0 0.0
      %1286 = vmatpush1.msra.mxu0 0.0
      %1287 = vmatprep.subr.mxu0 0.0
      %1288 = vmatpush1.msra.mxu0 0.0
      %1289 = vmatprep.subr.mxu0 0.0
      %1290 = vmatpush1.msra.mxu0 0.0
      %1291 = vmatprep.subr.mxu0 0.0
      %1292 = vmatpush1.msra.mxu0 0.0
      %1293 = vmatprep.subr.mxu0 0.0
      %1294 = vmatpush1.msra.mxu0 0.0
      %1295 = vmatprep.subr.mxu0 0.0
      %1296 = vmatpush1.msra.mxu0 0.0
      %1297 = vmatprep.subr.mxu0 0.0
      %1298 = vmatpush1.msra.mxu0 0.0
      %1299 = vmatprep.subr.mxu0 0.0
      %1300 = vmatpush1.msra.mxu0 0.0
      %1301 = vmatprep.subr.mxu0 0.0
      %1302 = vmatpush1.msra.mxu0 0.0
      %1303 = vmatprep.subr.mxu0 0.0
      %1304 = vmatpush1.msra.mxu0 0.0
      %1305 = vmatprep.subr.mxu0 0.0
      %1306 = vmatpush1.msra.mxu0 0.0
      %1307 = vmatprep.subr.mxu0 0.0
      %1308 = vmatpush1.msra.mxu0 0.0
      %1309 = vmatprep.subr.mxu0 0.0
      %1310 = vmatpush1.msra.mxu0 0.0
      %1311 = vmatprep.subr.mxu0 0.0
      %1312 = vmatpush1.msra.mxu0 %v1226
      %1313 = vmatprep.subr.mxu0 0.0
      %1314 = vmatpush2.msra.mxu0 0.0
      %1315 = vmatprep.subr.mxu0 0.0
      %1316 = vmatpush2.msra.mxu0 0.0
      %1317 = vmatprep.subr.mxu0 0.0
      %1318 = vmatpush2.msra.mxu0 0.0
      %1319 = vmatprep.subr.mxu0 0.0
      %1320 = vmatpush2.msra.mxu0 0.0
      %1321 = vmatprep.subr.mxu0 0.0
      %1322 = vmatpush2.msra.mxu0 0.0
      %1323 = vmatprep.subr.mxu0 0.0
      %1324 = vmatpush2.msra.mxu0 0.0
      %1325 = vmatprep.subr.mxu0 0.0
      %1326 = vmatpush2.msra.mxu0 0.0
      %1327 = vmatprep.subr.mxu0 0.0
      %1328 = vmatpush2.msra.mxu0 0.0
      %1329 = vmatprep.subr.mxu0 0.0
      %1330 = vmatpush2.msra.mxu0 0.0
      %1331 = vmatprep.subr.mxu0 0.0
      %1332 = vmatpush2.msra.mxu0 0.0
      %1333 = vmatprep.subr.mxu0 0.0
      %1334 = vmatpush2.msra.mxu0 0.0
      %1335 = vmatprep.subr.mxu0 0.0
      %1336 = vmatpush2.msra.mxu0 0.0
      %1337 = vmatprep.subr.mxu0 0.0
      %1338 = vmatpush2.msra.mxu0 0.0
      %1339 = vmatprep.subr.mxu0 0.0
      %1340 = vmatpush2.msra.mxu0 0.0
      %1341 = vmatprep.subr.mxu0 0.0
      %1342 = vmatpush2.msra.mxu0 0.0
      %1343 = vmatprep.subr.mxu0 0.0
      %1344 = vmatpush2.msra.mxu0 0.0
      %1345 = vmatprep.mubr.f32.mxu0 0.0
      %1346 = vmatmul.mubr.f32.gmra.mxu0 %v1228
      %v1347 = vpop.f32.mrf.mxu0
      %v1348 = vadd.f32 0.0, %v1347
      %v1349 = vpop.f32.mrf.mxu0
      %1350 = vmatprep.mubr.f32.mxu0 0.0
      %1351 = vmatmul.mubr.f32.gmra.mxu0 %v1231
      %v1352 = vpop.f32.mrf.mxu0
      %v1353 = vadd.f32 0.0, %v1352
      %v1354 = vpop.f32.mrf.mxu0
      %1355 = vmatprep.mubr.f32.mxu0 0.0
      %1356 = vmatmul.mubr.f32.gmra.mxu0 %v1234
      %v1357 = vpop.f32.mrf.mxu0
      %v1358 = vadd.f32 0.0, %v1357
      %v1359 = vpop.f32.mrf.mxu0
      %1360 = vmatprep.mubr.f32.mxu0 0.0
      %1361 = vmatmul.mubr.f32.gmra.mxu0 %v1237
      %v1362 = vpop.f32.mrf.mxu0
      %v1363 = vadd.f32 0.0, %v1362
      %v1364 = vpop.f32.mrf.mxu0
      %1365 = vmatprep.mubr.f32.mxu0 0.0
      %1366 = vmatmul.mubr.f32.gmra.mxu0 %v1240
      %v1367 = vpop.f32.mrf.mxu0
      %v1368 = vadd.f32 0.0, %v1367
      %v1369 = vpop.f32.mrf.mxu0
      %1370 = vmatprep.mubr.f32.mxu0 0.0
      %1371 = vmatmul.mubr.f32.gmra.mxu0 %v1243
      %v1372 = vpop.f32.mrf.mxu0
      %v1373 = vadd.f32 0.0, %v1372
      %v1374 = vpop.f32.mrf.mxu0
      %1375 = vmatprep.mubr.f32.mxu0 0.0
      %1376 = vmatmul.mubr.f32.gmra.mxu0 %v1246
      %v1377 = vpop.f32.mrf.mxu0
      %v1378 = vadd.f32 0.0, %v1377
      %v1379 = vpop.f32.mrf.mxu0
      %1380 = vmatprep.mubr.f32.mxu0 0.0
      %1381 = vmatmul.mubr.f32.gmra.mxu0 %v1249
      %v1382 = vpop.f32.mrf.mxu0
      %v1383 = vadd.f32 0.0, %v1382
      %v1384 = vpop.f32.mrf.mxu0
      %1385 = vmatprep.mubr.f32.mxu0 0.0
      %1386 = vmatmul.mubr.f32.gmra.mxu0 %v1252
      %v1387 = vpop.f32.mrf.mxu0
      %v1388 = vadd.f32 0.0, %v1387
      %v1389 = vpop.f32.mrf.mxu0
      %1390 = vmatprep.mubr.f32.mxu0 0.0
      %1391 = vmatmul.mubr.f32.gmra.mxu0 %v1255
      %v1392 = vpop.f32.mrf.mxu0
      %v1393 = vadd.f32 0.0, %v1392
      %v1394 = vpop.f32.mrf.mxu0
      %1395 = vmatprep.mubr.f32.mxu0 0.0
      %1396 = vmatmul.mubr.f32.gmra.mxu0 %v1258
      %v1397 = vpop.f32.mrf.mxu0
      %v1398 = vadd.f32 0.0, %v1397
      %v1399 = vpop.f32.mrf.mxu0
      %1400 = vmatprep.mubr.f32.mxu0 0.0
      %1401 = vmatmul.mubr.f32.gmra.mxu0 %v1261
      %v1402 = vpop.f32.mrf.mxu0
      %v1403 = vadd.f32 0.0, %v1402
      %v1404 = vpop.f32.mrf.mxu0
      %1405 = vmatprep.mubr.f32.mxu0 0.0
      %1406 = vmatmul.mubr.f32.gmra.mxu0 %v1264
      %v1407 = vpop.f32.mrf.mxu0
      %v1408 = vadd.f32 0.0, %v1407
      %v1409 = vpop.f32.mrf.mxu0
      %1410 = vmatprep.mubr.f32.mxu0 0.0
      %1411 = vmatmul.mubr.f32.gmra.mxu0 %v1267
      %v1412 = vpop.f32.mrf.mxu0
      %v1413 = vadd.f32 0.0, %v1412
      %v1414 = vpop.f32.mrf.mxu0
      %1415 = vmatprep.mubr.f32.mxu0 0.0
      %1416 = vmatmul.mubr.f32.gmra.mxu0 %v1270
      %v1417 = vpop.f32.mrf.mxu0
      %v1418 = vadd.f32 0.0, %v1417
      %v1419 = vpop.f32.mrf.mxu0
      %1420 = vmatprep.mubr.f32.mxu0 0.0
      %1421 = vmatmul.mubr.f32.gmra.mxu0 %v1273
      %v1422 = vpop.f32.mrf.mxu0
      %v1423 = vadd.f32 0.0, %v1422
      %v1424 = vpop.f32.mrf.mxu0
      %1425 = vmatprep.mubr.f32.mxu0 0.0
      %1426 = vmatmul.mubr.f32.gmra.mxu0 %v1276
      %v1427 = vpop.f32.mrf.mxu0
      %v1428 = vadd.f32 0.0, %v1427
      %v1429 = vpop.f32.mrf.mxu0
      %1430 = vmatprep.mubr.f32.mxu0 0.0
      %1431 = vmatmul.mubr.f32.gmra.mxu0 %v1279
      %v1432 = vpop.f32.mrf.mxu0
      %v1433 = vadd.f32 0.0, %v1432
      %v1434 = vpop.f32.mrf.mxu0
      %1435 = vdwg.mxu0
      %v1436 = vadd.f32 %v1189, %v1348
      %v1437 = vadd.f32 %v1190, %v1353
      %v1438 = vadd.f32 %v1191, %v1358
      %v1439 = vadd.f32 %v1192, %v1363
      %v1440 = vadd.f32 %v1193, %v1368
      %v1441 = vadd.f32 %v1194, %v1373
      %v1442 = vadd.f32 %v1195, %v1378
      %v1443 = vadd.f32 %v1196, %v1383
      %v1444 = vadd.f32 %v1197, %v1388
      %v1445 = vadd.f32 %v1198, %v1393
      %v1446 = vadd.f32 %v1199, %v1398
      %v1447 = vadd.f32 %v1200, %v1403
      %v1448 = vadd.f32 %v1201, %v1408
      %v1449 = vadd.f32 %v1202, %v1413
      %v1450 = vadd.f32 %v1203, %v1418
      %v1451 = vadd.f32 %v1204, %v1423
      %v1452 = vadd.f32 %v1205, %v1428
      %v1453 = vadd.f32 %v1206, %v1433
      %v1454 = vld [vmem:[%s237 + $0x14] sm:$0xff]
      %v1455 = vld [vmem:[%s237 + $0x1c] sm:$0xff]
      %v1456 = vld [vmem:[%s237 + $0x24] sm:$0xff]
      %v1457 = vld [vmem:[%s237 + $0x2c] sm:$0xff]
      %v1458 = vld [vmem:[%s237 + $0x34] sm:$0xff]
      %v1459 = vld [vmem:[%s237 + $0x3c] sm:$0xff]
      %v1460 = vld [vmem:[%s237 + $0x44] sm:$0xff]
      %v1461 = vld [vmem:[%s237 + $0x4c] sm:$0xff]
      %v1462 = vld [vmem:[%s237 + $0x54] sm:$0xff]
      %v1463 = vld [vmem:[%s237 + $0x5c] sm:$0xff]
      %v1464 = vld [vmem:[%s237 + $0x64] sm:$0xff]
      %v1465 = vld [vmem:[%s237 + $0x6c] sm:$0xff]
      %v1466 = vld [vmem:[%s237 + $0x74] sm:$0xff]
      %v1467 = vld [vmem:[%s237 + $0x7c] sm:$0xff]
      %v1468 = vld [vmem:[%s237 + $0x84] sm:$0xff]
      %v1469 = vld [vmem:[%s237 + $0x8c] sm:$0xff]
      %v1470 = vld [vmem:[%s237 + $0x94] sm:$0xff]
      %v1471 = vld [vmem:[%s237 + $0x9c] sm:$0xff]
      %s1472 = scalar_lea.vmem %s1, 40
      %v1473 = vld [vmem:[%s1472] sm:$0xff]
      %v1475 = vsel %vm294, %v1454, 0
      %v1478 = vsel %vm294, %v1455, 0
      %v1481 = vsel %vm294, %v1456, 0
      %v1484 = vsel %vm294, %v1457, 0
      %v1487 = vsel %vm294, %v1458, 0
      %v1490 = vsel %vm294, %v1459, 0
      %v1493 = vsel %vm294, %v1460, 0
      %v1496 = vsel %vm294, %v1461, 0
      %v1499 = vsel %vm294, %v1462, 0
      %v1502 = vsel %vm294, %v1463, 0
      %v1505 = vsel %vm294, %v1464, 0
      %v1508 = vsel %vm294, %v1465, 0
      %v1511 = vsel %vm294, %v1466, 0
      %v1514 = vsel %vm294, %v1467, 0
      %v1517 = vsel %vm294, %v1468, 0
      %v1520 = vsel %vm294, %v1469, 0
      %v1523 = vsel %vm294, %v1470, 0
      %v1526 = vsel %vm294, %v1471, 0
      %1528 = vmatprep.subr.mxu0 0.0
      %1529 = vmatpush1.msra.mxu0 0.0
      %1530 = vmatprep.subr.mxu0 0.0
      %1531 = vmatpush1.msra.mxu0 0.0
      %1532 = vmatprep.subr.mxu0 0.0
      %1533 = vmatpush1.msra.mxu0 0.0
      %1534 = vmatprep.subr.mxu0 0.0
      %1535 = vmatpush1.msra.mxu0 0.0
      %1536 = vmatprep.subr.mxu0 0.0
      %1537 = vmatpush1.msra.mxu0 0.0
      %1538 = vmatprep.subr.mxu0 0.0
      %1539 = vmatpush1.msra.mxu0 0.0
      %1540 = vmatprep.subr.mxu0 0.0
      %1541 = vmatpush1.msra.mxu0 0.0
      %1542 = vmatprep.subr.mxu0 0.0
      %1543 = vmatpush1.msra.mxu0 0.0
      %1544 = vmatprep.subr.mxu0 0.0
      %1545 = vmatpush1.msra.mxu0 0.0
      %1546 = vmatprep.subr.mxu0 0.0
      %1547 = vmatpush1.msra.mxu0 0.0
      %1548 = vmatprep.subr.mxu0 0.0
      %1549 = vmatpush1.msra.mxu0 0.0
      %1550 = vmatprep.subr.mxu0 0.0
      %1551 = vmatpush1.msra.mxu0 0.0
      %1552 = vmatprep.subr.mxu0 0.0
      %1553 = vmatpush1.msra.mxu0 0.0
      %1554 = vmatprep.subr.mxu0 0.0
      %1555 = vmatpush1.msra.mxu0 0.0
      %1556 = vmatprep.subr.mxu0 0.0
      %1557 = vmatpush1.msra.mxu0 0.0
      %1558 = vmatprep.subr.mxu0 0.0
      %1559 = vmatpush1.msra.mxu0 %v1473
      %1560 = vmatprep.subr.mxu0 0.0
      %1561 = vmatpush2.msra.mxu0 0.0
      %1562 = vmatprep.subr.mxu0 0.0
      %1563 = vmatpush2.msra.mxu0 0.0
      %1564 = vmatprep.subr.mxu0 0.0
      %1565 = vmatpush2.msra.mxu0 0.0
      %1566 = vmatprep.subr.mxu0 0.0
      %1567 = vmatpush2.msra.mxu0 0.0
      %1568 = vmatprep.subr.mxu0 0.0
      %1569 = vmatpush2.msra.mxu0 0.0
      %1570 = vmatprep.subr.mxu0 0.0
      %1571 = vmatpush2.msra.mxu0 0.0
      %1572 = vmatprep.subr.mxu0 0.0
      %1573 = vmatpush2.msra.mxu0 0.0
      %1574 = vmatprep.subr.mxu0 0.0
      %1575 = vmatpush2.msra.mxu0 0.0
      %1576 = vmatprep.subr.mxu0 0.0
      %1577 = vmatpush2.msra.mxu0 0.0
      %1578 = vmatprep.subr.mxu0 0.0
      %1579 = vmatpush2.msra.mxu0 0.0
      %1580 = vmatprep.subr.mxu0 0.0
      %1581 = vmatpush2.msra.mxu0 0.0
      %1582 = vmatprep.subr.mxu0 0.0
      %1583 = vmatpush2.msra.mxu0 0.0
      %1584 = vmatprep.subr.mxu0 0.0
      %1585 = vmatpush2.msra.mxu0 0.0
      %1586 = vmatprep.subr.mxu0 0.0
      %1587 = vmatpush2.msra.mxu0 0.0
      %1588 = vmatprep.subr.mxu0 0.0
      %1589 = vmatpush2.msra.mxu0 0.0
      %1590 = vmatprep.subr.mxu0 0.0
      %1591 = vmatpush2.msra.mxu0 0.0
      %1592 = vmatprep.mubr.f32.mxu0 0.0
      %1593 = vmatmul.mubr.f32.gmra.mxu0 %v1475
      %v1594 = vpop.f32.mrf.mxu0
      %v1595 = vadd.f32 0.0, %v1594
      %v1596 = vpop.f32.mrf.mxu0
      %1597 = vmatprep.mubr.f32.mxu0 0.0
      %1598 = vmatmul.mubr.f32.gmra.mxu0 %v1478
      %v1599 = vpop.f32.mrf.mxu0
      %v1600 = vadd.f32 0.0, %v1599
      %v1601 = vpop.f32.mrf.mxu0
      %1602 = vmatprep.mubr.f32.mxu0 0.0
      %1603 = vmatmul.mubr.f32.gmra.mxu0 %v1481
      %v1604 = vpop.f32.mrf.mxu0
      %v1605 = vadd.f32 0.0, %v1604
      %v1606 = vpop.f32.mrf.mxu0
      %1607 = vmatprep.mubr.f32.mxu0 0.0
      %1608 = vmatmul.mubr.f32.gmra.mxu0 %v1484
      %v1609 = vpop.f32.mrf.mxu0
      %v1610 = vadd.f32 0.0, %v1609
      %v1611 = vpop.f32.mrf.mxu0
      %1612 = vmatprep.mubr.f32.mxu0 0.0
      %1613 = vmatmul.mubr.f32.gmra.mxu0 %v1487
      %v1614 = vpop.f32.mrf.mxu0
      %v1615 = vadd.f32 0.0, %v1614
      %v1616 = vpop.f32.mrf.mxu0
      %1617 = vmatprep.mubr.f32.mxu0 0.0
      %1618 = vmatmul.mubr.f32.gmra.mxu0 %v1490
      %v1619 = vpop.f32.mrf.mxu0
      %v1620 = vadd.f32 0.0, %v1619
      %v1621 = vpop.f32.mrf.mxu0
      %1622 = vmatprep.mubr.f32.mxu0 0.0
      %1623 = vmatmul.mubr.f32.gmra.mxu0 %v1493
      %v1624 = vpop.f32.mrf.mxu0
      %v1625 = vadd.f32 0.0, %v1624
      %v1626 = vpop.f32.mrf.mxu0
      %1627 = vmatprep.mubr.f32.mxu0 0.0
      %1628 = vmatmul.mubr.f32.gmra.mxu0 %v1496
      %v1629 = vpop.f32.mrf.mxu0
      %v1630 = vadd.f32 0.0, %v1629
      %v1631 = vpop.f32.mrf.mxu0
      %1632 = vmatprep.mubr.f32.mxu0 0.0
      %1633 = vmatmul.mubr.f32.gmra.mxu0 %v1499
      %v1634 = vpop.f32.mrf.mxu0
      %v1635 = vadd.f32 0.0, %v1634
      %v1636 = vpop.f32.mrf.mxu0
      %1637 = vmatprep.mubr.f32.mxu0 0.0
      %1638 = vmatmul.mubr.f32.gmra.mxu0 %v1502
      %v1639 = vpop.f32.mrf.mxu0
      %v1640 = vadd.f32 0.0, %v1639
      %v1641 = vpop.f32.mrf.mxu0
      %1642 = vmatprep.mubr.f32.mxu0 0.0
      %1643 = vmatmul.mubr.f32.gmra.mxu0 %v1505
      %v1644 = vpop.f32.mrf.mxu0
      %v1645 = vadd.f32 0.0, %v1644
      %v1646 = vpop.f32.mrf.mxu0
      %1647 = vmatprep.mubr.f32.mxu0 0.0
      %1648 = vmatmul.mubr.f32.gmra.mxu0 %v1508
      %v1649 = vpop.f32.mrf.mxu0
      %v1650 = vadd.f32 0.0, %v1649
      %v1651 = vpop.f32.mrf.mxu0
      %1652 = vmatprep.mubr.f32.mxu0 0.0
      %1653 = vmatmul.mubr.f32.gmra.mxu0 %v1511
      %v1654 = vpop.f32.mrf.mxu0
      %v1655 = vadd.f32 0.0, %v1654
      %v1656 = vpop.f32.mrf.mxu0
      %1657 = vmatprep.mubr.f32.mxu0 0.0
      %1658 = vmatmul.mubr.f32.gmra.mxu0 %v1514
      %v1659 = vpop.f32.mrf.mxu0
      %v1660 = vadd.f32 0.0, %v1659
      %v1661 = vpop.f32.mrf.mxu0
      %1662 = vmatprep.mubr.f32.mxu0 0.0
      %1663 = vmatmul.mubr.f32.gmra.mxu0 %v1517
      %v1664 = vpop.f32.mrf.mxu0
      %v1665 = vadd.f32 0.0, %v1664
      %v1666 = vpop.f32.mrf.mxu0
      %1667 = vmatprep.mubr.f32.mxu0 0.0
      %1668 = vmatmul.mubr.f32.gmra.mxu0 %v1520
      %v1669 = vpop.f32.mrf.mxu0
      %v1670 = vadd.f32 0.0, %v1669
      %v1671 = vpop.f32.mrf.mxu0
      %1672 = vmatprep.mubr.f32.mxu0 0.0
      %1673 = vmatmul.mubr.f32.gmra.mxu0 %v1523
      %v1674 = vpop.f32.mrf.mxu0
      %v1675 = vadd.f32 0.0, %v1674
      %v1676 = vpop.f32.mrf.mxu0
      %1677 = vmatprep.mubr.f32.mxu0 0.0
      %1678 = vmatmul.mubr.f32.gmra.mxu0 %v1526
      %v1679 = vpop.f32.mrf.mxu0
      %v1680 = vadd.f32 0.0, %v1679
      %v1681 = vpop.f32.mrf.mxu0
      %1682 = vdwg.mxu0
      %v1683 = vadd.f32 %v1436, %v1595
      %v1684 = vadd.f32 %v1437, %v1600
      %v1685 = vadd.f32 %v1438, %v1605
      %v1686 = vadd.f32 %v1439, %v1610
      %v1687 = vadd.f32 %v1440, %v1615
      %v1688 = vadd.f32 %v1441, %v1620
      %v1689 = vadd.f32 %v1442, %v1625
      %v1690 = vadd.f32 %v1443, %v1630
      %v1691 = vadd.f32 %v1444, %v1635
      %v1692 = vadd.f32 %v1445, %v1640
      %v1693 = vadd.f32 %v1446, %v1645
      %v1694 = vadd.f32 %v1447, %v1650
      %v1695 = vadd.f32 %v1448, %v1655
      %v1696 = vadd.f32 %v1449, %v1660
      %v1697 = vadd.f32 %v1450, %v1665
      %v1698 = vadd.f32 %v1451, %v1670
      %v1699 = vadd.f32 %v1452, %v1675
      %v1700 = vadd.f32 %v1453, %v1680
      %v1701 = vld [vmem:[%s237 + $0x24] sm:$0xff]
      %v1702 = vld [vmem:[%s237 + $0x2c] sm:$0xff]
      %v1703 = vld [vmem:[%s237 + $0x34] sm:$0xff]
      %v1704 = vld [vmem:[%s237 + $0x3c] sm:$0xff]
      %v1705 = vld [vmem:[%s237 + $0x44] sm:$0xff]
      %v1706 = vld [vmem:[%s237 + $0x4c] sm:$0xff]
      %v1707 = vld [vmem:[%s237 + $0x54] sm:$0xff]
      %v1708 = vld [vmem:[%s237 + $0x5c] sm:$0xff]
      %v1709 = vld [vmem:[%s237 + $0x64] sm:$0xff]
      %v1710 = vld [vmem:[%s237 + $0x6c] sm:$0xff]
      %v1711 = vld [vmem:[%s237 + $0x74] sm:$0xff]
      %v1712 = vld [vmem:[%s237 + $0x7c] sm:$0xff]
      %v1713 = vld [vmem:[%s237 + $0x84] sm:$0xff]
      %v1714 = vld [vmem:[%s237 + $0x8c] sm:$0xff]
      %v1715 = vld [vmem:[%s237 + $0x94] sm:$0xff]
      %v1716 = vld [vmem:[%s237 + $0x9c] sm:$0xff]
      %v1717 = vld [vmem:[%s237 + $0xa4] sm:$0xff]
      %v1718 = vld [vmem:[%s237 + $0xac] sm:$0xff]
      %s1719 = scalar_lea.vmem %s1, 48
      %v1720 = vld [vmem:[%s1719] sm:$0xff]
      %v1722 = vsel %vm294, %v1701, 0
      %v1725 = vsel %vm294, %v1702, 0
      %v1728 = vsel %vm294, %v1703, 0
      %v1731 = vsel %vm294, %v1704, 0
      %v1734 = vsel %vm294, %v1705, 0
      %v1737 = vsel %vm294, %v1706, 0
      %v1740 = vsel %vm294, %v1707, 0
      %v1743 = vsel %vm294, %v1708, 0
      %v1746 = vsel %vm294, %v1709, 0
      %v1749 = vsel %vm294, %v1710, 0
      %v1752 = vsel %vm294, %v1711, 0
      %v1755 = vsel %vm294, %v1712, 0
      %v1758 = vsel %vm294, %v1713, 0
      %v1761 = vsel %vm294, %v1714, 0
      %v1764 = vsel %vm294, %v1715, 0
      %v1767 = vsel %vm294, %v1716, 0
      %v1770 = vsel %vm294, %v1717, 0
      %v1773 = vsel %vm294, %v1718, 0
      %1775 = vmatprep.subr.mxu0 0.0
      %1776 = vmatpush1.msra.mxu0 0.0
      %1777 = vmatprep.subr.mxu0 0.0
      %1778 = vmatpush1.msra.mxu0 0.0
      %1779 = vmatprep.subr.mxu0 0.0
      %1780 = vmatpush1.msra.mxu0 0.0
      %1781 = vmatprep.subr.mxu0 0.0
      %1782 = vmatpush1.msra.mxu0 0.0
      %1783 = vmatprep.subr.mxu0 0.0
      %1784 = vmatpush1.msra.mxu0 0.0
      %1785 = vmatprep.subr.mxu0 0.0
      %1786 = vmatpush1.msra.mxu0 0.0
      %1787 = vmatprep.subr.mxu0 0.0
      %1788 = vmatpush1.msra.mxu0 0.0
      %1789 = vmatprep.subr.mxu0 0.0
      %1790 = vmatpush1.msra.mxu0 0.0
      %1791 = vmatprep.subr.mxu0 0.0
      %1792 = vmatpush1.msra.mxu0 0.0
      %1793 = vmatprep.subr.mxu0 0.0
      %1794 = vmatpush1.msra.mxu0 0.0
      %1795 = vmatprep.subr.mxu0 0.0
      %1796 = vmatpush1.msra.mxu0 0.0
      %1797 = vmatprep.subr.mxu0 0.0
      %1798 = vmatpush1.msra.mxu0 0.0
      %1799 = vmatprep.subr.mxu0 0.0
      %1800 = vmatpush1.msra.mxu0 0.0
      %1801 = vmatprep.subr.mxu0 0.0
      %1802 = vmatpush1.msra.mxu0 0.0
      %1803 = vmatprep.subr.mxu0 0.0
      %1804 = vmatpush1.msra.mxu0 0.0
      %1805 = vmatprep.subr.mxu0 0.0
      %1806 = vmatpush1.msra.mxu0 %v1720
      %1807 = vmatprep.subr.mxu0 0.0
      %1808 = vmatpush2.msra.mxu0 0.0
      %1809 = vmatprep.subr.mxu0 0.0
      %1810 = vmatpush2.msra.mxu0 0.0
      %1811 = vmatprep.subr.mxu0 0.0
      %1812 = vmatpush2.msra.mxu0 0.0
      %1813 = vmatprep.subr.mxu0 0.0
      %1814 = vmatpush2.msra.mxu0 0.0
      %1815 = vmatprep.subr.mxu0 0.0
      %1816 = vmatpush2.msra.mxu0 0.0
      %1817 = vmatprep.subr.mxu0 0.0
      %1818 = vmatpush2.msra.mxu0 0.0
      %1819 = vmatprep.subr.mxu0 0.0
      %1820 = vmatpush2.msra.mxu0 0.0
      %1821 = vmatprep.subr.mxu0 0.0
      %1822 = vmatpush2.msra.mxu0 0.0
      %1823 = vmatprep.subr.mxu0 0.0
      %1824 = vmatpush2.msra.mxu0 0.0
      %1825 = vmatprep.subr.mxu0 0.0
      %1826 = vmatpush2.msra.mxu0 0.0
      %1827 = vmatprep.subr.mxu0 0.0
      %1828 = vmatpush2.msra.mxu0 0.0
      %1829 = vmatprep.subr.mxu0 0.0
      %1830 = vmatpush2.msra.mxu0 0.0
      %1831 = vmatprep.subr.mxu0 0.0
      %1832 = vmatpush2.msra.mxu0 0.0
      %1833 = vmatprep.subr.mxu0 0.0
      %1834 = vmatpush2.msra.mxu0 0.0
      %1835 = vmatprep.subr.mxu0 0.0
      %1836 = vmatpush2.msra.mxu0 0.0
      %1837 = vmatprep.subr.mxu0 0.0
      %1838 = vmatpush2.msra.mxu0 0.0
      %1839 = vmatprep.mubr.f32.mxu0 0.0
      %1840 = vmatmul.mubr.f32.gmra.mxu0 %v1722
      %v1841 = vpop.f32.mrf.mxu0
      %v1842 = vadd.f32 0.0, %v1841
      %v1843 = vpop.f32.mrf.mxu0
      %1844 = vmatprep.mubr.f32.mxu0 0.0
      %1845 = vmatmul.mubr.f32.gmra.mxu0 %v1725
      %v1846 = vpop.f32.mrf.mxu0
      %v1847 = vadd.f32 0.0, %v1846
      %v1848 = vpop.f32.mrf.mxu0
      %1849 = vmatprep.mubr.f32.mxu0 0.0
      %1850 = vmatmul.mubr.f32.gmra.mxu0 %v1728
      %v1851 = vpop.f32.mrf.mxu0
      %v1852 = vadd.f32 0.0, %v1851
      %v1853 = vpop.f32.mrf.mxu0
      %1854 = vmatprep.mubr.f32.mxu0 0.0
      %1855 = vmatmul.mubr.f32.gmra.mxu0 %v1731
      %v1856 = vpop.f32.mrf.mxu0
      %v1857 = vadd.f32 0.0, %v1856
      %v1858 = vpop.f32.mrf.mxu0
      %1859 = vmatprep.mubr.f32.mxu0 0.0
      %1860 = vmatmul.mubr.f32.gmra.mxu0 %v1734
      %v1861 = vpop.f32.mrf.mxu0
      %v1862 = vadd.f32 0.0, %v1861
      %v1863 = vpop.f32.mrf.mxu0
      %1864 = vmatprep.mubr.f32.mxu0 0.0
      %1865 = vmatmul.mubr.f32.gmra.mxu0 %v1737
      %v1866 = vpop.f32.mrf.mxu0
      %v1867 = vadd.f32 0.0, %v1866
      %v1868 = vpop.f32.mrf.mxu0
      %1869 = vmatprep.mubr.f32.mxu0 0.0
      %1870 = vmatmul.mubr.f32.gmra.mxu0 %v1740
      %v1871 = vpop.f32.mrf.mxu0
      %v1872 = vadd.f32 0.0, %v1871
      %v1873 = vpop.f32.mrf.mxu0
      %1874 = vmatprep.mubr.f32.mxu0 0.0
      %1875 = vmatmul.mubr.f32.gmra.mxu0 %v1743
      %v1876 = vpop.f32.mrf.mxu0
      %v1877 = vadd.f32 0.0, %v1876
      %v1878 = vpop.f32.mrf.mxu0
      %1879 = vmatprep.mubr.f32.mxu0 0.0
      %1880 = vmatmul.mubr.f32.gmra.mxu0 %v1746
      %v1881 = vpop.f32.mrf.mxu0
      %v1882 = vadd.f32 0.0, %v1881
      %v1883 = vpop.f32.mrf.mxu0
      %1884 = vmatprep.mubr.f32.mxu0 0.0
      %1885 = vmatmul.mubr.f32.gmra.mxu0 %v1749
      %v1886 = vpop.f32.mrf.mxu0
      %v1887 = vadd.f32 0.0, %v1886
      %v1888 = vpop.f32.mrf.mxu0
      %1889 = vmatprep.mubr.f32.mxu0 0.0
      %1890 = vmatmul.mubr.f32.gmra.mxu0 %v1752
      %v1891 = vpop.f32.mrf.mxu0
      %v1892 = vadd.f32 0.0, %v1891
      %v1893 = vpop.f32.mrf.mxu0
      %1894 = vmatprep.mubr.f32.mxu0 0.0
      %1895 = vmatmul.mubr.f32.gmra.mxu0 %v1755
      %v1896 = vpop.f32.mrf.mxu0
      %v1897 = vadd.f32 0.0, %v1896
      %v1898 = vpop.f32.mrf.mxu0
      %1899 = vmatprep.mubr.f32.mxu0 0.0
      %1900 = vmatmul.mubr.f32.gmra.mxu0 %v1758
      %v1901 = vpop.f32.mrf.mxu0
      %v1902 = vadd.f32 0.0, %v1901
      %v1903 = vpop.f32.mrf.mxu0
      %1904 = vmatprep.mubr.f32.mxu0 0.0
      %1905 = vmatmul.mubr.f32.gmra.mxu0 %v1761
      %v1906 = vpop.f32.mrf.mxu0
      %v1907 = vadd.f32 0.0, %v1906
      %v1908 = vpop.f32.mrf.mxu0
      %1909 = vmatprep.mubr.f32.mxu0 0.0
      %1910 = vmatmul.mubr.f32.gmra.mxu0 %v1764
      %v1911 = vpop.f32.mrf.mxu0
      %v1912 = vadd.f32 0.0, %v1911
      %v1913 = vpop.f32.mrf.mxu0
      %1914 = vmatprep.mubr.f32.mxu0 0.0
      %1915 = vmatmul.mubr.f32.gmra.mxu0 %v1767
      %v1916 = vpop.f32.mrf.mxu0
      %v1917 = vadd.f32 0.0, %v1916
      %v1918 = vpop.f32.mrf.mxu0
      %1919 = vmatprep.mubr.f32.mxu0 0.0
      %1920 = vmatmul.mubr.f32.gmra.mxu0 %v1770
      %v1921 = vpop.f32.mrf.mxu0
      %v1922 = vadd.f32 0.0, %v1921
      %v1923 = vpop.f32.mrf.mxu0
      %1924 = vmatprep.mubr.f32.mxu0 0.0
      %1925 = vmatmul.mubr.f32.gmra.mxu0 %v1773
      %v1926 = vpop.f32.mrf.mxu0
      %v1927 = vadd.f32 0.0, %v1926
      %v1928 = vpop.f32.mrf.mxu0
      %1929 = vdwg.mxu0
      %v1930 = vadd.f32 %v1683, %v1842
      %v1931 = vadd.f32 %v1684, %v1847
      %v1932 = vadd.f32 %v1685, %v1852
      %v1933 = vadd.f32 %v1686, %v1857
      %v1934 = vadd.f32 %v1687, %v1862
      %v1935 = vadd.f32 %v1688, %v1867
      %v1936 = vadd.f32 %v1689, %v1872
      %v1937 = vadd.f32 %v1690, %v1877
      %v1938 = vadd.f32 %v1691, %v1882
      %v1939 = vadd.f32 %v1692, %v1887
      %v1940 = vadd.f32 %v1693, %v1892
      %v1941 = vadd.f32 %v1694, %v1897
      %v1942 = vadd.f32 %v1695, %v1902
      %v1943 = vadd.f32 %v1696, %v1907
      %v1944 = vadd.f32 %v1697, %v1912
      %v1945 = vadd.f32 %v1698, %v1917
      %v1946 = vadd.f32 %v1699, %v1922
      %v1947 = vadd.f32 %v1700, %v1927
      %v1948 = vld [vmem:[%s237 + $0x25] sm:$0xff]
      %v1949 = vld [vmem:[%s237 + $0x2d] sm:$0xff]
      %v1950 = vld [vmem:[%s237 + $0x35] sm:$0xff]
      %v1951 = vld [vmem:[%s237 + $0x3d] sm:$0xff]
      %v1952 = vld [vmem:[%s237 + $0x45] sm:$0xff]
      %v1953 = vld [vmem:[%s237 + $0x4d] sm:$0xff]
      %v1954 = vld [vmem:[%s237 + $0x55] sm:$0xff]
      %v1955 = vld [vmem:[%s237 + $0x5d] sm:$0xff]
      %v1956 = vld [vmem:[%s237 + $0x65] sm:$0xff]
      %v1957 = vld [vmem:[%s237 + $0x6d] sm:$0xff]
      %v1958 = vld [vmem:[%s237 + $0x75] sm:$0xff]
      %v1959 = vld [vmem:[%s237 + $0x7d] sm:$0xff]
      %v1960 = vld [vmem:[%s237 + $0x85] sm:$0xff]
      %v1961 = vld [vmem:[%s237 + $0x8d] sm:$0xff]
      %v1962 = vld [vmem:[%s237 + $0x95] sm:$0xff]
      %v1963 = vld [vmem:[%s237 + $0x9d] sm:$0xff]
      %v1964 = vld [vmem:[%s237 + $0xa5] sm:$0xff]
      %v1965 = vld [vmem:[%s237 + $0xad] sm:$0xff]
      %s1966 = scalar_lea.vmem %s1, 56
      %v1967 = vld [vmem:[%s1966] sm:$0xff]
      %v1969 = vsel %vm294, %v1948, 0
      %v1972 = vsel %vm294, %v1949, 0
      %v1975 = vsel %vm294, %v1950, 0
      %v1978 = vsel %vm294, %v1951, 0
      %v1981 = vsel %vm294, %v1952, 0
      %v1984 = vsel %vm294, %v1953, 0
      %v1987 = vsel %vm294, %v1954, 0
      %v1990 = vsel %vm294, %v1955, 0
      %v1993 = vsel %vm294, %v1956, 0
      %v1996 = vsel %vm294, %v1957, 0
      %v1999 = vsel %vm294, %v1958, 0
      %v2002 = vsel %vm294, %v1959, 0
      %v2005 = vsel %vm294, %v1960, 0
      %v2008 = vsel %vm294, %v1961, 0
      %v2011 = vsel %vm294, %v1962, 0
      %v2014 = vsel %vm294, %v1963, 0
      %v2017 = vsel %vm294, %v1964, 0
      %v2020 = vsel %vm294, %v1965, 0
      %2022 = vmatprep.subr.mxu0 0.0
      %2023 = vmatpush1.msra.mxu0 0.0
      %2024 = vmatprep.subr.mxu0 0.0
      %2025 = vmatpush1.msra.mxu0 0.0
      %2026 = vmatprep.subr.mxu0 0.0
      %2027 = vmatpush1.msra.mxu0 0.0
      %2028 = vmatprep.subr.mxu0 0.0
      %2029 = vmatpush1.msra.mxu0 0.0
      %2030 = vmatprep.subr.mxu0 0.0
      %2031 = vmatpush1.msra.mxu0 0.0
      %2032 = vmatprep.subr.mxu0 0.0
      %2033 = vmatpush1.msra.mxu0 0.0
      %2034 = vmatprep.subr.mxu0 0.0
      %2035 = vmatpush1.msra.mxu0 0.0
      %2036 = vmatprep.subr.mxu0 0.0
      %2037 = vmatpush1.msra.mxu0 0.0
      %2038 = vmatprep.subr.mxu0 0.0
      %2039 = vmatpush1.msra.mxu0 0.0
      %2040 = vmatprep.subr.mxu0 0.0
      %2041 = vmatpush1.msra.mxu0 0.0
      %2042 = vmatprep.subr.mxu0 0.0
      %2043 = vmatpush1.msra.mxu0 0.0
      %2044 = vmatprep.subr.mxu0 0.0
      %2045 = vmatpush1.msra.mxu0 0.0
      %2046 = vmatprep.subr.mxu0 0.0
      %2047 = vmatpush1.msra.mxu0 0.0
      %2048 = vmatprep.subr.mxu0 0.0
      %2049 = vmatpush1.msra.mxu0 0.0
      %2050 = vmatprep.subr.mxu0 0.0
      %2051 = vmatpush1.msra.mxu0 0.0
      %2052 = vmatprep.subr.mxu0 0.0
      %2053 = vmatpush1.msra.mxu0 %v1967
      %2054 = vmatprep.subr.mxu0 0.0
      %2055 = vmatpush2.msra.mxu0 0.0
      %2056 = vmatprep.subr.mxu0 0.0
      %2057 = vmatpush2.msra.mxu0 0.0
      %2058 = vmatprep.subr.mxu0 0.0
      %2059 = vmatpush2.msra.mxu0 0.0
      %2060 = vmatprep.subr.mxu0 0.0
      %2061 = vmatpush2.msra.mxu0 0.0
      %2062 = vmatprep.subr.mxu0 0.0
      %2063 = vmatpush2.msra.mxu0 0.0
      %2064 = vmatprep.subr.mxu0 0.0
      %2065 = vmatpush2.msra.mxu0 0.0
      %2066 = vmatprep.subr.mxu0 0.0
      %2067 = vmatpush2.msra.mxu0 0.0
      %2068 = vmatprep.subr.mxu0 0.0
      %2069 = vmatpush2.msra.mxu0 0.0
      %2070 = vmatprep.subr.mxu0 0.0
      %2071 = vmatpush2.msra.mxu0 0.0
      %2072 = vmatprep.subr.mxu0 0.0
      %2073 = vmatpush2.msra.mxu0 0.0
      %2074 = vmatprep.subr.mxu0 0.0
      %2075 = vmatpush2.msra.mxu0 0.0
      %2076 = vmatprep.subr.mxu0 0.0
      %2077 = vmatpush2.msra.mxu0 0.0
      %2078 = vmatprep.subr.mxu0 0.0
      %2079 = vmatpush2.msra.mxu0 0.0
      %2080 = vmatprep.subr.mxu0 0.0
      %2081 = vmatpush2.msra.mxu0 0.0
      %2082 = vmatprep.subr.mxu0 0.0
      %2083 = vmatpush2.msra.mxu0 0.0
      %2084 = vmatprep.subr.mxu0 0.0
      %2085 = vmatpush2.msra.mxu0 0.0
      %2086 = vmatprep.mubr.f32.mxu0 0.0
      %2087 = vmatmul.mubr.f32.gmra.mxu0 %v1969
      %v2088 = vpop.f32.mrf.mxu0
      %v2089 = vadd.f32 0.0, %v2088
      %v2090 = vpop.f32.mrf.mxu0
      %2091 = vmatprep.mubr.f32.mxu0 0.0
      %2092 = vmatmul.mubr.f32.gmra.mxu0 %v1972
      %v2093 = vpop.f32.mrf.mxu0
      %v2094 = vadd.f32 0.0, %v2093
      %v2095 = vpop.f32.mrf.mxu0
      %2096 = vmatprep.mubr.f32.mxu0 0.0
      %2097 = vmatmul.mubr.f32.gmra.mxu0 %v1975
      %v2098 = vpop.f32.mrf.mxu0
      %v2099 = vadd.f32 0.0, %v2098
      %v2100 = vpop.f32.mrf.mxu0
      %2101 = vmatprep.mubr.f32.mxu0 0.0
      %2102 = vmatmul.mubr.f32.gmra.mxu0 %v1978
      %v2103 = vpop.f32.mrf.mxu0
      %v2104 = vadd.f32 0.0, %v2103
      %v2105 = vpop.f32.mrf.mxu0
      %2106 = vmatprep.mubr.f32.mxu0 0.0
      %2107 = vmatmul.mubr.f32.gmra.mxu0 %v1981
      %v2108 = vpop.f32.mrf.mxu0
      %v2109 = vadd.f32 0.0, %v2108
      %v2110 = vpop.f32.mrf.mxu0
      %2111 = vmatprep.mubr.f32.mxu0 0.0
      %2112 = vmatmul.mubr.f32.gmra.mxu0 %v1984
      %v2113 = vpop.f32.mrf.mxu0
      %v2114 = vadd.f32 0.0, %v2113
      %v2115 = vpop.f32.mrf.mxu0
      %2116 = vmatprep.mubr.f32.mxu0 0.0
      %2117 = vmatmul.mubr.f32.gmra.mxu0 %v1987
      %v2118 = vpop.f32.mrf.mxu0
      %v2119 = vadd.f32 0.0, %v2118
      %v2120 = vpop.f32.mrf.mxu0
      %2121 = vmatprep.mubr.f32.mxu0 0.0
      %2122 = vmatmul.mubr.f32.gmra.mxu0 %v1990
      %v2123 = vpop.f32.mrf.mxu0
      %v2124 = vadd.f32 0.0, %v2123
      %v2125 = vpop.f32.mrf.mxu0
      %2126 = vmatprep.mubr.f32.mxu0 0.0
      %2127 = vmatmul.mubr.f32.gmra.mxu0 %v1993
      %v2128 = vpop.f32.mrf.mxu0
      %v2129 = vadd.f32 0.0, %v2128
      %v2130 = vpop.f32.mrf.mxu0
      %2131 = vmatprep.mubr.f32.mxu0 0.0
      %2132 = vmatmul.mubr.f32.gmra.mxu0 %v1996
      %v2133 = vpop.f32.mrf.mxu0
      %v2134 = vadd.f32 0.0, %v2133
      %v2135 = vpop.f32.mrf.mxu0
      %2136 = vmatprep.mubr.f32.mxu0 0.0
      %2137 = vmatmul.mubr.f32.gmra.mxu0 %v1999
      %v2138 = vpop.f32.mrf.mxu0
      %v2139 = vadd.f32 0.0, %v2138
      %v2140 = vpop.f32.mrf.mxu0
      %2141 = vmatprep.mubr.f32.mxu0 0.0
      %2142 = vmatmul.mubr.f32.gmra.mxu0 %v2002
      %v2143 = vpop.f32.mrf.mxu0
      %v2144 = vadd.f32 0.0, %v2143
      %v2145 = vpop.f32.mrf.mxu0
      %2146 = vmatprep.mubr.f32.mxu0 0.0
      %2147 = vmatmul.mubr.f32.gmra.mxu0 %v2005
      %v2148 = vpop.f32.mrf.mxu0
      %v2149 = vadd.f32 0.0, %v2148
      %v2150 = vpop.f32.mrf.mxu0
      %2151 = vmatprep.mubr.f32.mxu0 0.0
      %2152 = vmatmul.mubr.f32.gmra.mxu0 %v2008
      %v2153 = vpop.f32.mrf.mxu0
      %v2154 = vadd.f32 0.0, %v2153
      %v2155 = vpop.f32.mrf.mxu0
      %2156 = vmatprep.mubr.f32.mxu0 0.0
      %2157 = vmatmul.mubr.f32.gmra.mxu0 %v2011
      %v2158 = vpop.f32.mrf.mxu0
      %v2159 = vadd.f32 0.0, %v2158
      %v2160 = vpop.f32.mrf.mxu0
      %2161 = vmatprep.mubr.f32.mxu0 0.0
      %2162 = vmatmul.mubr.f32.gmra.mxu0 %v2014
      %v2163 = vpop.f32.mrf.mxu0
      %v2164 = vadd.f32 0.0, %v2163
      %v2165 = vpop.f32.mrf.mxu0
      %2166 = vmatprep.mubr.f32.mxu0 0.0
      %2167 = vmatmul.mubr.f32.gmra.mxu0 %v2017
      %v2168 = vpop.f32.mrf.mxu0
      %v2169 = vadd.f32 0.0, %v2168
      %v2170 = vpop.f32.mrf.mxu0
      %2171 = vmatprep.mubr.f32.mxu0 0.0
      %2172 = vmatmul.mubr.f32.gmra.mxu0 %v2020
      %v2173 = vpop.f32.mrf.mxu0
      %v2174 = vadd.f32 0.0, %v2173
      %v2175 = vpop.f32.mrf.mxu0
      %2176 = vdwg.mxu0
      %v2177 = vadd.f32 %v1930, %v2089
      %v2178 = vadd.f32 %v1931, %v2094
      %v2179 = vadd.f32 %v1932, %v2099
      %v2180 = vadd.f32 %v1933, %v2104
      %v2181 = vadd.f32 %v1934, %v2109
      %v2182 = vadd.f32 %v1935, %v2114
      %v2183 = vadd.f32 %v1936, %v2119
      %v2184 = vadd.f32 %v1937, %v2124
      %v2185 = vadd.f32 %v1938, %v2129
      %v2186 = vadd.f32 %v1939, %v2134
      %v2187 = vadd.f32 %v1940, %v2139
      %v2188 = vadd.f32 %v1941, %v2144
      %v2189 = vadd.f32 %v1942, %v2149
      %v2190 = vadd.f32 %v1943, %v2154
      %v2191 = vadd.f32 %v1944, %v2159
      %v2192 = vadd.f32 %v1945, %v2164
      %v2193 = vadd.f32 %v1946, %v2169
      %v2194 = vadd.f32 %v1947, %v2174
      %v2195 = vld [vmem:[%s237 + $0x26] sm:$0xff]
      %v2196 = vld [vmem:[%s237 + $0x2e] sm:$0xff]
      %v2197 = vld [vmem:[%s237 + $0x36] sm:$0xff]
      %v2198 = vld [vmem:[%s237 + $0x3e] sm:$0xff]
      %v2199 = vld [vmem:[%s237 + $0x46] sm:$0xff]
      %v2200 = vld [vmem:[%s237 + $0x4e] sm:$0xff]
      %v2201 = vld [vmem:[%s237 + $0x56] sm:$0xff]
      %v2202 = vld [vmem:[%s237 + $0x5e] sm:$0xff]
      %v2203 = vld [vmem:[%s237 + $0x66] sm:$0xff]
      %v2204 = vld [vmem:[%s237 + $0x6e] sm:$0xff]
      %v2205 = vld [vmem:[%s237 + $0x76] sm:$0xff]
      %v2206 = vld [vmem:[%s237 + $0x7e] sm:$0xff]
      %v2207 = vld [vmem:[%s237 + $0x86] sm:$0xff]
      %v2208 = vld [vmem:[%s237 + $0x8e] sm:$0xff]
      %v2209 = vld [vmem:[%s237 + $0x96] sm:$0xff]
      %v2210 = vld [vmem:[%s237 + $0x9e] sm:$0xff]
      %v2211 = vld [vmem:[%s237 + $0xa6] sm:$0xff]
      %v2212 = vld [vmem:[%s237 + $0xae] sm:$0xff]
      %s2213 = scalar_lea.vmem %s1, 64
      %v2214 = vld [vmem:[%s2213] sm:$0xff]
      %v2216 = vsel %vm294, %v2195, 0
      %v2219 = vsel %vm294, %v2196, 0
      %v2222 = vsel %vm294, %v2197, 0
      %v2225 = vsel %vm294, %v2198, 0
      %v2228 = vsel %vm294, %v2199, 0
      %v2231 = vsel %vm294, %v2200, 0
      %v2234 = vsel %vm294, %v2201, 0
      %v2237 = vsel %vm294, %v2202, 0
      %v2240 = vsel %vm294, %v2203, 0
      %v2243 = vsel %vm294, %v2204, 0
      %v2246 = vsel %vm294, %v2205, 0
      %v2249 = vsel %vm294, %v2206, 0
      %v2252 = vsel %vm294, %v2207, 0
      %v2255 = vsel %vm294, %v2208, 0
      %v2258 = vsel %vm294, %v2209, 0
      %v2261 = vsel %vm294, %v2210, 0
      %v2264 = vsel %vm294, %v2211, 0
      %v2267 = vsel %vm294, %v2212, 0
      %2269 = vmatprep.subr.mxu0 0.0
      %2270 = vmatpush1.msra.mxu0 0.0
      %2271 = vmatprep.subr.mxu0 0.0
      %2272 = vmatpush1.msra.mxu0 0.0
      %2273 = vmatprep.subr.mxu0 0.0
      %2274 = vmatpush1.msra.mxu0 0.0
      %2275 = vmatprep.subr.mxu0 0.0
      %2276 = vmatpush1.msra.mxu0 0.0
      %2277 = vmatprep.subr.mxu0 0.0
      %2278 = vmatpush1.msra.mxu0 0.0
      %2279 = vmatprep.subr.mxu0 0.0
      %2280 = vmatpush1.msra.mxu0 0.0
      %2281 = vmatprep.subr.mxu0 0.0
      %2282 = vmatpush1.msra.mxu0 0.0
      %2283 = vmatprep.subr.mxu0 0.0
      %2284 = vmatpush1.msra.mxu0 0.0
      %2285 = vmatprep.subr.mxu0 0.0
      %2286 = vmatpush1.msra.mxu0 0.0
      %2287 = vmatprep.subr.mxu0 0.0
      %2288 = vmatpush1.msra.mxu0 0.0
      %2289 = vmatprep.subr.mxu0 0.0
      %2290 = vmatpush1.msra.mxu0 0.0
      %2291 = vmatprep.subr.mxu0 0.0
      %2292 = vmatpush1.msra.mxu0 0.0
      %2293 = vmatprep.subr.mxu0 0.0
      %2294 = vmatpush1.msra.mxu0 0.0
      %2295 = vmatprep.subr.mxu0 0.0
      %2296 = vmatpush1.msra.mxu0 0.0
      %2297 = vmatprep.subr.mxu0 0.0
      %2298 = vmatpush1.msra.mxu0 0.0
      %2299 = vmatprep.subr.mxu0 0.0
      %2300 = vmatpush1.msra.mxu0 %v2214
      %2301 = vmatprep.subr.mxu0 0.0
      %2302 = vmatpush2.msra.mxu0 0.0
      %2303 = vmatprep.subr.mxu0 0.0
      %2304 = vmatpush2.msra.mxu0 0.0
      %2305 = vmatprep.subr.mxu0 0.0
      %2306 = vmatpush2.msra.mxu0 0.0
      %2307 = vmatprep.subr.mxu0 0.0
      %2308 = vmatpush2.msra.mxu0 0.0
      %2309 = vmatprep.subr.mxu0 0.0
      %2310 = vmatpush2.msra.mxu0 0.0
      %2311 = vmatprep.subr.mxu0 0.0
      %2312 = vmatpush2.msra.mxu0 0.0
      %2313 = vmatprep.subr.mxu0 0.0
      %2314 = vmatpush2.msra.mxu0 0.0
      %2315 = vmatprep.subr.mxu0 0.0
      %2316 = vmatpush2.msra.mxu0 0.0
      %2317 = vmatprep.subr.mxu0 0.0
      %2318 = vmatpush2.msra.mxu0 0.0
      %2319 = vmatprep.subr.mxu0 0.0
      %2320 = vmatpush2.msra.mxu0 0.0
      %2321 = vmatprep.subr.mxu0 0.0
      %2322 = vmatpush2.msra.mxu0 0.0
      %2323 = vmatprep.subr.mxu0 0.0
      %2324 = vmatpush2.msra.mxu0 0.0
      %2325 = vmatprep.subr.mxu0 0.0
      %2326 = vmatpush2.msra.mxu0 0.0
      %2327 = vmatprep.subr.mxu0 0.0
      %2328 = vmatpush2.msra.mxu0 0.0
      %2329 = vmatprep.subr.mxu0 0.0
      %2330 = vmatpush2.msra.mxu0 0.0
      %2331 = vmatprep.subr.mxu0 0.0
      %2332 = vmatpush2.msra.mxu0 0.0
      %2333 = vmatprep.mubr.f32.mxu0 0.0
      %2334 = vmatmul.mubr.f32.gmra.mxu0 %v2216
      %v2335 = vpop.f32.mrf.mxu0
      %v2336 = vadd.f32 0.0, %v2335
      %v2337 = vpop.f32.mrf.mxu0
      %2338 = vmatprep.mubr.f32.mxu0 0.0
      %2339 = vmatmul.mubr.f32.gmra.mxu0 %v2219
      %v2340 = vpop.f32.mrf.mxu0
      %v2341 = vadd.f32 0.0, %v2340
      %v2342 = vpop.f32.mrf.mxu0
      %2343 = vmatprep.mubr.f32.mxu0 0.0
      %2344 = vmatmul.mubr.f32.gmra.mxu0 %v2222
      %v2345 = vpop.f32.mrf.mxu0
      %v2346 = vadd.f32 0.0, %v2345
      %v2347 = vpop.f32.mrf.mxu0
      %2348 = vmatprep.mubr.f32.mxu0 0.0
      %2349 = vmatmul.mubr.f32.gmra.mxu0 %v2225
      %v2350 = vpop.f32.mrf.mxu0
      %v2351 = vadd.f32 0.0, %v2350
      %v2352 = vpop.f32.mrf.mxu0
      %2353 = vmatprep.mubr.f32.mxu0 0.0
      %2354 = vmatmul.mubr.f32.gmra.mxu0 %v2228
      %v2355 = vpop.f32.mrf.mxu0
      %v2356 = vadd.f32 0.0, %v2355
      %v2357 = vpop.f32.mrf.mxu0
      %2358 = vmatprep.mubr.f32.mxu0 0.0
      %2359 = vmatmul.mubr.f32.gmra.mxu0 %v2231
      %v2360 = vpop.f32.mrf.mxu0
      %v2361 = vadd.f32 0.0, %v2360
      %v2362 = vpop.f32.mrf.mxu0
      %2363 = vmatprep.mubr.f32.mxu0 0.0
      %2364 = vmatmul.mubr.f32.gmra.mxu0 %v2234
      %v2365 = vpop.f32.mrf.mxu0
      %v2366 = vadd.f32 0.0, %v2365
      %v2367 = vpop.f32.mrf.mxu0
      %2368 = vmatprep.mubr.f32.mxu0 0.0
      %2369 = vmatmul.mubr.f32.gmra.mxu0 %v2237
      %v2370 = vpop.f32.mrf.mxu0
      %v2371 = vadd.f32 0.0, %v2370
      %v2372 = vpop.f32.mrf.mxu0
      %2373 = vmatprep.mubr.f32.mxu0 0.0
      %2374 = vmatmul.mubr.f32.gmra.mxu0 %v2240
      %v2375 = vpop.f32.mrf.mxu0
      %v2376 = vadd.f32 0.0, %v2375
      %v2377 = vpop.f32.mrf.mxu0
      %2378 = vmatprep.mubr.f32.mxu0 0.0
      %2379 = vmatmul.mubr.f32.gmra.mxu0 %v2243
      %v2380 = vpop.f32.mrf.mxu0
      %v2381 = vadd.f32 0.0, %v2380
      %v2382 = vpop.f32.mrf.mxu0
      %2383 = vmatprep.mubr.f32.mxu0 0.0
      %2384 = vmatmul.mubr.f32.gmra.mxu0 %v2246
      %v2385 = vpop.f32.mrf.mxu0
      %v2386 = vadd.f32 0.0, %v2385
      %v2387 = vpop.f32.mrf.mxu0
      %2388 = vmatprep.mubr.f32.mxu0 0.0
      %2389 = vmatmul.mubr.f32.gmra.mxu0 %v2249
      %v2390 = vpop.f32.mrf.mxu0
      %v2391 = vadd.f32 0.0, %v2390
      %v2392 = vpop.f32.mrf.mxu0
      %2393 = vmatprep.mubr.f32.mxu0 0.0
      %2394 = vmatmul.mubr.f32.gmra.mxu0 %v2252
      %v2395 = vpop.f32.mrf.mxu0
      %v2396 = vadd.f32 0.0, %v2395
      %v2397 = vpop.f32.mrf.mxu0
      %2398 = vmatprep.mubr.f32.mxu0 0.0
      %2399 = vmatmul.mubr.f32.gmra.mxu0 %v2255
      %v2400 = vpop.f32.mrf.mxu0
      %v2401 = vadd.f32 0.0, %v2400
      %v2402 = vpop.f32.mrf.mxu0
      %2403 = vmatprep.mubr.f32.mxu0 0.0
      %2404 = vmatmul.mubr.f32.gmra.mxu0 %v2258
      %v2405 = vpop.f32.mrf.mxu0
      %v2406 = vadd.f32 0.0, %v2405
      %v2407 = vpop.f32.mrf.mxu0
      %2408 = vmatprep.mubr.f32.mxu0 0.0
      %2409 = vmatmul.mubr.f32.gmra.mxu0 %v2261
      %v2410 = vpop.f32.mrf.mxu0
      %v2411 = vadd.f32 0.0, %v2410
      %v2412 = vpop.f32.mrf.mxu0
      %2413 = vmatprep.mubr.f32.mxu0 0.0
      %2414 = vmatmul.mubr.f32.gmra.mxu0 %v2264
      %v2415 = vpop.f32.mrf.mxu0
      %v2416 = vadd.f32 0.0, %v2415
      %v2417 = vpop.f32.mrf.mxu0
      %2418 = vmatprep.mubr.f32.mxu0 0.0
      %2419 = vmatmul.mubr.f32.gmra.mxu0 %v2267
      %v2420 = vpop.f32.mrf.mxu0
      %v2421 = vadd.f32 0.0, %v2420
      %v2422 = vpop.f32.mrf.mxu0
      %2423 = vdwg.mxu0
      %v2424 = vadd.f32 %v2177, %v2336
      %v2425 = vadd.f32 %v2178, %v2341
      %v2426 = vadd.f32 %v2179, %v2346
      %v2427 = vadd.f32 %v2180, %v2351
      %v2428 = vadd.f32 %v2181, %v2356
      %v2429 = vadd.f32 %v2182, %v2361
      %v2430 = vadd.f32 %v2183, %v2366
      %v2431 = vadd.f32 %v2184, %v2371
      %v2432 = vadd.f32 %v2185, %v2376
      %v2433 = vadd.f32 %v2186, %v2381
      %v2434 = vadd.f32 %v2187, %v2386
      %v2435 = vadd.f32 %v2188, %v2391
      %v2436 = vadd.f32 %v2189, %v2396
      %v2437 = vadd.f32 %v2190, %v2401
      %v2438 = vadd.f32 %v2191, %v2406
      %v2439 = vadd.f32 %v2192, %v2411
      %v2440 = vadd.f32 %v2193, %v2416
      %v2441 = vadd.f32 %v2194, %v2421
      %v2442 = vld [vmem:[%s2] sm:$0x1]
      %v2444 = vlaneseq
      %v2445 = vshrl.u32 %v2444, 7
      %v2446 = vsub.s32 0, %v2445
      %v2447 = vrot.slane %v2442, %v2446
      %v2449 = vadd.f32 %v2424, %v2447
      %v2450 = vadd.f32 %v2425, %v2447
      %v2451 = vadd.f32 %v2426, %v2447
      %v2452 = vadd.f32 %v2427, %v2447
      %v2453 = vadd.f32 %v2428, %v2447
      %v2454 = vadd.f32 %v2429, %v2447
      %v2455 = vadd.f32 %v2430, %v2447
      %v2456 = vadd.f32 %v2431, %v2447
      %v2457 = vadd.f32 %v2432, %v2447
      %v2458 = vadd.f32 %v2433, %v2447
      %v2459 = vadd.f32 %v2434, %v2447
      %v2460 = vadd.f32 %v2435, %v2447
      %v2461 = vadd.f32 %v2436, %v2447
      %v2462 = vadd.f32 %v2437, %v2447
      %v2463 = vadd.f32 %v2438, %v2447
      %v2464 = vadd.f32 %v2439, %v2447
      %v2465 = vadd.f32 %v2440, %v2447
      %v2466 = vadd.f32 %v2441, %v2447
      %2467 = vst [vmem:[%s246] sm:$0xff] %v2449
      %2468 = vst [vmem:[%s246 + $0x8] sm:$0xff] %v2450
      %2469 = vst [vmem:[%s246 + $0x10] sm:$0xff] %v2451
      %2470 = vst [vmem:[%s246 + $0x18] sm:$0xff] %v2452
      %2471 = vst [vmem:[%s246 + $0x20] sm:$0xff] %v2453
      %2472 = vst [vmem:[%s246 + $0x28] sm:$0xff] %v2454
      %2473 = vst [vmem:[%s246 + $0x30] sm:$0xff] %v2455
      %2474 = vst [vmem:[%s246 + $0x38] sm:$0xff] %v2456
      %2475 = vst [vmem:[%s246 + $0x40] sm:$0xff] %v2457
      %2476 = vst [vmem:[%s246 + $0x48] sm:$0xff] %v2458
      %2477 = vst [vmem:[%s246 + $0x50] sm:$0xff] %v2459
      %2478 = vst [vmem:[%s246 + $0x58] sm:$0xff] %v2460
      %2479 = vst [vmem:[%s246 + $0x60] sm:$0xff] %v2461
      %2480 = vst [vmem:[%s246 + $0x68] sm:$0xff] %v2462
      %2481 = vst [vmem:[%s246 + $0x70] sm:$0xff] %v2463
      %2482 = vst [vmem:[%s246 + $0x78] sm:$0xff] %v2464
      %2483 = vst [vmem:[%s246 + $0x80] sm:$0xff] %v2465
      %2484 = vst [vmem:[%s246 + $0x88] sm:$0xff] %v2466
      %v2485 = vlaneseq
      %v2486 = vshrl.u32 %v2485, 7
      %v2487 = vadd.s32 %v2486, 8
      %v2488 = vadd.s32 %v2486, 16
      %v2489 = vadd.s32 %v2486, 24
      %v2490 = vadd.s32 %v2486, 32
      %v2491 = vadd.s32 %v2486, 40
      %v2492 = vadd.s32 %v2486, 48
      %v2493 = vadd.s32 %v2486, 56
      %v2494 = vadd.s32 %v2486, 64
      %v2495 = vadd.s32 %v2486, 72
      %v2496 = vadd.s32 %v2486, 80
      %v2497 = vadd.s32 %v2486, 88
      %v2498 = vadd.s32 %v2486, 96
      %v2499 = vadd.s32 %v2486, 104
      %v2500 = vadd.s32 %v2486, 112
      %v2501 = vadd.s32 %v2486, 120
      %v2502 = vadd.s32 %v2486, 128
      %v2503 = vadd.s32 %v2486, 136
      %vm2504 = vcmp.lt.s32.totalorder %v2486, 0
      %v2505 = vsub.s32 0, %v2486
      %v2506 = vsel %vm2504, %v2505, %v2486
      %v2507 = vmul.u32.u64.compose %v2506, 3817748708
      %v2508 = vextract.low.u32 %v2507
      %v2509 = vextract.high.u32 %v2507
      %v2510 = vshrl.u32 %v2509, 4
      %v2511 = vmul.u32 %v2510, 18
      %v2512 = vsub.s32 %v2506, %v2511
      %v2513 = vsub.s32 0, %v2512
      %v2514 = vsel %vm2504, %v2513, %v2512
      %vm2515 = vcmp.lt.s32.totalorder %v2487, 0
      %v2516 = vsub.s32 0, %v2487
      %v2517 = vsel %vm2515, %v2516, %v2487
      %v2518 = vmul.u32.u64.compose %v2517, 3817748708
      %v2519 = vextract.low.u32 %v2518
      %v2520 = vextract.high.u32 %v2518
      %v2521 = vshrl.u32 %v2520, 4
      %v2522 = vmul.u32 %v2521, 18
      %v2523 = vsub.s32 %v2517, %v2522
      %v2524 = vsub.s32 0, %v2523
      %v2525 = vsel %vm2515, %v2524, %v2523
      %vm2526 = vcmp.lt.s32.totalorder %v2488, 0
      %v2527 = vsub.s32 0, %v2488
      %v2528 = vsel %vm2526, %v2527, %v2488
      %v2529 = vmul.u32.u64.compose %v2528, 3817748708
      %v2530 = vextract.low.u32 %v2529
      %v2531 = vextract.high.u32 %v2529
      %v2532 = vshrl.u32 %v2531, 4
      %v2533 = vmul.u32 %v2532, 18
      %v2534 = vsub.s32 %v2528, %v2533
      %v2535 = vsub.s32 0, %v2534
      %v2536 = vsel %vm2526, %v2535, %v2534
      %vm2537 = vcmp.lt.s32.totalorder %v2489, 0
      %v2538 = vsub.s32 0, %v2489
      %v2539 = vsel %vm2537, %v2538, %v2489
      %v2540 = vmul.u32.u64.compose %v2539, 3817748708
      %v2541 = vextract.low.u32 %v2540
      %v2542 = vextract.high.u32 %v2540
      %v2543 = vshrl.u32 %v2542, 4
      %v2544 = vmul.u32 %v2543, 18
      %v2545 = vsub.s32 %v2539, %v2544
      %v2546 = vsub.s32 0, %v2545
      %v2547 = vsel %vm2537, %v2546, %v2545
      %vm2548 = vcmp.lt.s32.totalorder %v2490, 0
      %v2549 = vsub.s32 0, %v2490
      %v2550 = vsel %vm2548, %v2549, %v2490
      %v2551 = vmul.u32.u64.compose %v2550, 3817748708
      %v2552 = vextract.low.u32 %v2551
      %v2553 = vextract.high.u32 %v2551
      %v2554 = vshrl.u32 %v2553, 4
      %v2555 = vmul.u32 %v2554, 18
      %v2556 = vsub.s32 %v2550, %v2555
      %v2557 = vsub.s32 0, %v2556
      %v2558 = vsel %vm2548, %v2557, %v2556
      %vm2559 = vcmp.lt.s32.totalorder %v2491, 0
      %v2560 = vsub.s32 0, %v2491
      %v2561 = vsel %vm2559, %v2560, %v2491
      %v2562 = vmul.u32.u64.compose %v2561, 3817748708
      %v2563 = vextract.low.u32 %v2562
      %v2564 = vextract.high.u32 %v2562
      %v2565 = vshrl.u32 %v2564, 4
      %v2566 = vmul.u32 %v2565, 18
      %v2567 = vsub.s32 %v2561, %v2566
      %v2568 = vsub.s32 0, %v2567
      %v2569 = vsel %vm2559, %v2568, %v2567
      %vm2570 = vcmp.lt.s32.totalorder %v2492, 0
      %v2571 = vsub.s32 0, %v2492
      %v2572 = vsel %vm2570, %v2571, %v2492
      %v2573 = vmul.u32.u64.compose %v2572, 3817748708
      %v2574 = vextract.low.u32 %v2573
      %v2575 = vextract.high.u32 %v2573
      %v2576 = vshrl.u32 %v2575, 4
      %v2577 = vmul.u32 %v2576, 18
      %v2578 = vsub.s32 %v2572, %v2577
      %v2579 = vsub.s32 0, %v2578
      %v2580 = vsel %vm2570, %v2579, %v2578
      %vm2581 = vcmp.lt.s32.totalorder %v2493, 0
      %v2582 = vsub.s32 0, %v2493
      %v2583 = vsel %vm2581, %v2582, %v2493
      %v2584 = vmul.u32.u64.compose %v2583, 3817748708
      %v2585 = vextract.low.u32 %v2584
      %v2586 = vextract.high.u32 %v2584
      %v2587 = vshrl.u32 %v2586, 4
      %v2588 = vmul.u32 %v2587, 18
      %v2589 = vsub.s32 %v2583, %v2588
      %v2590 = vsub.s32 0, %v2589
      %v2591 = vsel %vm2581, %v2590, %v2589
      %vm2592 = vcmp.lt.s32.totalorder %v2494, 0
      %v2593 = vsub.s32 0, %v2494
      %v2594 = vsel %vm2592, %v2593, %v2494
      %v2595 = vmul.u32.u64.compose %v2594, 3817748708
      %v2596 = vextract.low.u32 %v2595
      %v2597 = vextract.high.u32 %v2595
      %v2598 = vshrl.u32 %v2597, 4
      %v2599 = vmul.u32 %v2598, 18
      %v2600 = vsub.s32 %v2594, %v2599
      %v2601 = vsub.s32 0, %v2600
      %v2602 = vsel %vm2592, %v2601, %v2600
      %vm2603 = vcmp.lt.s32.totalorder %v2495, 0
      %v2604 = vsub.s32 0, %v2495
      %v2605 = vsel %vm2603, %v2604, %v2495
      %v2606 = vmul.u32.u64.compose %v2605, 3817748708
      %v2607 = vextract.low.u32 %v2606
      %v2608 = vextract.high.u32 %v2606
      %v2609 = vshrl.u32 %v2608, 4
      %v2610 = vmul.u32 %v2609, 18
      %v2611 = vsub.s32 %v2605, %v2610
      %v2612 = vsub.s32 0, %v2611
      %v2613 = vsel %vm2603, %v2612, %v2611
      %vm2614 = vcmp.lt.s32.totalorder %v2496, 0
      %v2615 = vsub.s32 0, %v2496
      %v2616 = vsel %vm2614, %v2615, %v2496
      %v2617 = vmul.u32.u64.compose %v2616, 3817748708
      %v2618 = vextract.low.u32 %v2617
      %v2619 = vextract.high.u32 %v2617
      %v2620 = vshrl.u32 %v2619, 4
      %v2621 = vmul.u32 %v2620, 18
      %v2622 = vsub.s32 %v2616, %v2621
      %v2623 = vsub.s32 0, %v2622
      %v2624 = vsel %vm2614, %v2623, %v2622
      %vm2625 = vcmp.lt.s32.totalorder %v2497, 0
      %v2626 = vsub.s32 0, %v2497
      %v2627 = vsel %vm2625, %v2626, %v2497
      %v2628 = vmul.u32.u64.compose %v2627, 3817748708
      %v2629 = vextract.low.u32 %v2628
      %v2630 = vextract.high.u32 %v2628
      %v2631 = vshrl.u32 %v2630, 4
      %v2632 = vmul.u32 %v2631, 18
      %v2633 = vsub.s32 %v2627, %v2632
      %v2634 = vsub.s32 0, %v2633
      %v2635 = vsel %vm2625, %v2634, %v2633
      %vm2636 = vcmp.lt.s32.totalorder %v2498, 0
      %v2637 = vsub.s32 0, %v2498
      %v2638 = vsel %vm2636, %v2637, %v2498
      %v2639 = vmul.u32.u64.compose %v2638, 3817748708
      %v2640 = vextract.low.u32 %v2639
      %v2641 = vextract.high.u32 %v2639
      %v2642 = vshrl.u32 %v2641, 4
      %v2643 = vmul.u32 %v2642, 18
      %v2644 = vsub.s32 %v2638, %v2643
      %v2645 = vsub.s32 0, %v2644
      %v2646 = vsel %vm2636, %v2645, %v2644
      %vm2647 = vcmp.lt.s32.totalorder %v2499, 0
      %v2648 = vsub.s32 0, %v2499
      %v2649 = vsel %vm2647, %v2648, %v2499
      %v2650 = vmul.u32.u64.compose %v2649, 3817748708
      %v2651 = vextract.low.u32 %v2650
      %v2652 = vextract.high.u32 %v2650
      %v2653 = vshrl.u32 %v2652, 4
      %v2654 = vmul.u32 %v2653, 18
      %v2655 = vsub.s32 %v2649, %v2654
      %v2656 = vsub.s32 0, %v2655
      %v2657 = vsel %vm2647, %v2656, %v2655
      %vm2658 = vcmp.lt.s32.totalorder %v2500, 0
      %v2659 = vsub.s32 0, %v2500
      %v2660 = vsel %vm2658, %v2659, %v2500
      %v2661 = vmul.u32.u64.compose %v2660, 3817748708
      %v2662 = vextract.low.u32 %v2661
      %v2663 = vextract.high.u32 %v2661
      %v2664 = vshrl.u32 %v2663, 4
      %v2665 = vmul.u32 %v2664, 18
      %v2666 = vsub.s32 %v2660, %v2665
      %v2667 = vsub.s32 0, %v2666
      %v2668 = vsel %vm2658, %v2667, %v2666
      %vm2669 = vcmp.lt.s32.totalorder %v2501, 0
      %v2670 = vsub.s32 0, %v2501
      %v2671 = vsel %vm2669, %v2670, %v2501
      %v2672 = vmul.u32.u64.compose %v2671, 3817748708
      %v2673 = vextract.low.u32 %v2672
      %v2674 = vextract.high.u32 %v2672
      %v2675 = vshrl.u32 %v2674, 4
      %v2676 = vmul.u32 %v2675, 18
      %v2677 = vsub.s32 %v2671, %v2676
      %v2678 = vsub.s32 0, %v2677
      %v2679 = vsel %vm2669, %v2678, %v2677
      %vm2680 = vcmp.lt.s32.totalorder %v2502, 0
      %v2681 = vsub.s32 0, %v2502
      %v2682 = vsel %vm2680, %v2681, %v2502
      %v2683 = vmul.u32.u64.compose %v2682, 3817748708
      %v2684 = vextract.low.u32 %v2683
      %v2685 = vextract.high.u32 %v2683
      %v2686 = vshrl.u32 %v2685, 4
      %v2687 = vmul.u32 %v2686, 18
      %v2688 = vsub.s32 %v2682, %v2687
      %v2689 = vsub.s32 0, %v2688
      %v2690 = vsel %vm2680, %v2689, %v2688
      %vm2691 = vcmp.lt.s32.totalorder %v2503, 0
      %v2692 = vsub.s32 0, %v2503
      %v2693 = vsel %vm2691, %v2692, %v2503
      %v2694 = vmul.u32.u64.compose %v2693, 3817748708
      %v2695 = vextract.low.u32 %v2694
      %v2696 = vextract.high.u32 %v2694
      %v2697 = vshrl.u32 %v2696, 4
      %v2698 = vmul.u32 %v2697, 18
      %v2699 = vsub.s32 %v2693, %v2698
      %v2700 = vsub.s32 0, %v2699
      %v2701 = vsel %vm2691, %v2700, %v2699
      %vm2702 = vcmp.lt.s32.totalorder %v2514, 16
      %vm2703 = vcmp.lt.s32.totalorder %v2525, 16
      %vm2704 = vcmp.lt.s32.totalorder %v2536, 16
      %vm2705 = vcmp.lt.s32.totalorder %v2547, 16
      %vm2706 = vcmp.lt.s32.totalorder %v2558, 16
      %vm2707 = vcmp.lt.s32.totalorder %v2569, 16
      %vm2708 = vcmp.lt.s32.totalorder %v2580, 16
      %vm2709 = vcmp.lt.s32.totalorder %v2591, 16
      %vm2710 = vcmp.lt.s32.totalorder %v2602, 16
      %vm2711 = vcmp.lt.s32.totalorder %v2613, 16
      %vm2712 = vcmp.lt.s32.totalorder %v2624, 16
      %vm2713 = vcmp.lt.s32.totalorder %v2635, 16
      %vm2714 = vcmp.lt.s32.totalorder %v2646, 16
      %vm2715 = vcmp.lt.s32.totalorder %v2657, 16
      %vm2716 = vcmp.lt.s32.totalorder %v2668, 16
      %vm2717 = vcmp.lt.s32.totalorder %v2679, 16
      %vm2718 = vcmp.lt.s32.totalorder %v2690, 16
      %vm2719 = vcmp.lt.s32.totalorder %v2701, 16
      %v2720 = vsel %vm2702, 1, 0
      %v2721 = vsel %vm2703, 1, 0
      %v2722 = vsel %vm2704, 1, 0
      %v2723 = vsel %vm2705, 1, 0
      %v2724 = vsel %vm2706, 1, 0
      %v2725 = vsel %vm2707, 1, 0
      %v2726 = vsel %vm2708, 1, 0
      %v2727 = vsel %vm2709, 1, 0
      %v2728 = vsel %vm2710, 1, 0
      %v2729 = vsel %vm2711, 1, 0
      %v2730 = vsel %vm2712, 1, 0
      %v2731 = vsel %vm2713, 1, 0
      %v2732 = vsel %vm2714, 1, 0
      %v2733 = vsel %vm2715, 1, 0
      %v2734 = vsel %vm2716, 1, 0
      %v2735 = vsel %vm2717, 1, 0
      %v2736 = vsel %vm2718, 1, 0
      %v2737 = vsel %vm2719, 1, 0
      %vm2738 = vcmp.eq.s32.totalorder %v2720, 1
      %vm2739 = vcmp.eq.s32.totalorder %v2721, 1
      %vm2740 = vcmp.eq.s32.totalorder %v2722, 1
      %vm2741 = vcmp.eq.s32.totalorder %v2723, 1
      %vm2742 = vcmp.eq.s32.totalorder %v2724, 1
      %vm2743 = vcmp.eq.s32.totalorder %v2725, 1
      %vm2744 = vcmp.eq.s32.totalorder %v2726, 1
      %vm2745 = vcmp.eq.s32.totalorder %v2727, 1
      %vm2746 = vcmp.eq.s32.totalorder %v2728, 1
      %vm2747 = vcmp.eq.s32.totalorder %v2729, 1
      %vm2748 = vcmp.eq.s32.totalorder %v2730, 1
      %vm2749 = vcmp.eq.s32.totalorder %v2731, 1
      %vm2750 = vcmp.eq.s32.totalorder %v2732, 1
      %vm2751 = vcmp.eq.s32.totalorder %v2733, 1
      %vm2752 = vcmp.eq.s32.totalorder %v2734, 1
      %vm2753 = vcmp.eq.s32.totalorder %v2735, 1
      %vm2754 = vcmp.eq.s32.totalorder %v2736, 1
      %vm2755 = vcmp.eq.s32.totalorder %v2737, 1
      %v2756 = vsel %vm2738, %v2449, 0.0
      %v2757 = vsel %vm2739, %v2450, 0.0
      %v2758 = vsel %vm2740, %v2451, 0.0
      %v2759 = vsel %vm2741, %v2452, 0.0
      %v2760 = vsel %vm2742, %v2453, 0.0
      %v2761 = vsel %vm2743, %v2454, 0.0
      %v2762 = vsel %vm2744, %v2455, 0.0
      %v2763 = vsel %vm2745, %v2456, 0.0
      %v2764 = vsel %vm2746, %v2457, 0.0
      %v2765 = vsel %vm2747, %v2458, 0.0
      %v2766 = vsel %vm2748, %v2459, 0.0
      %v2767 = vsel %vm2749, %v2460, 0.0
      %v2768 = vsel %vm2750, %v2461, 0.0
      %v2769 = vsel %vm2751, %v2462, 0.0
      %v2770 = vsel %vm2752, %v2463, 0.0
      %v2771 = vsel %vm2753, %v2464, 0.0
      %v2772 = vsel %vm2754, %v2465, 0.0
      %v2773 = vsel %vm2755, %v2466, 0.0
      %v2774 = vadd.f32 %v2756, %v2757
      %v2775 = vadd.f32 %v2774, %v2758
      %v2776 = vadd.f32 %v2775, %v2759
      %v2777 = vadd.f32 %v2776, %v2760
      %v2778 = vadd.f32 %v2777, %v2761
      %v2779 = vadd.f32 %v2778, %v2762
      %v2780 = vadd.f32 %v2779, %v2763
      %v2781 = vadd.f32 %v2780, %v2764
      %v2782 = vadd.f32 %v2781, %v2765
      %v2783 = vadd.f32 %v2782, %v2766
      %v2784 = vadd.f32 %v2783, %v2767
      %v2785 = vadd.f32 %v2784, %v2768
      %v2786 = vadd.f32 %v2785, %v2769
      %v2787 = vadd.f32 %v2786, %v2770
      %v2788 = vadd.f32 %v2787, %v2771
      %v2789 = vadd.f32 %v2788, %v2772
      %v2790 = vadd.f32 %v2789, %v2773
      %v2791 = vrot.slane %v2790, 4
      %v2792 = vadd.f32 %v2790, %v2791
      %v2793 = vrot.slane %v2792, 2
      %v2794 = vadd.f32 %v2792, %v2793
      %v2795 = vrot.slane %v2794, 1
      %v2796 = vadd.f32 %v2794, %v2795
      %v2797 = vmul.f32 %v2756, %v2756
      %v2798 = vmul.f32 %v2757, %v2757
      %v2799 = vmul.f32 %v2758, %v2758
      %v2800 = vmul.f32 %v2759, %v2759
      %v2801 = vmul.f32 %v2760, %v2760
      %v2802 = vmul.f32 %v2761, %v2761
      %v2803 = vmul.f32 %v2762, %v2762
      %v2804 = vmul.f32 %v2763, %v2763
      %v2805 = vmul.f32 %v2764, %v2764
      %v2806 = vmul.f32 %v2765, %v2765
      %v2807 = vmul.f32 %v2766, %v2766
      %v2808 = vmul.f32 %v2767, %v2767
      %v2809 = vmul.f32 %v2768, %v2768
      %v2810 = vmul.f32 %v2769, %v2769
      %v2811 = vmul.f32 %v2770, %v2770
      %v2812 = vmul.f32 %v2771, %v2771
      %v2813 = vmul.f32 %v2772, %v2772
      %v2814 = vmul.f32 %v2773, %v2773
      %v2815 = vadd.f32 %v2797, %v2798
      %v2816 = vadd.f32 %v2815, %v2799
      %v2817 = vadd.f32 %v2816, %v2800
      %v2818 = vadd.f32 %v2817, %v2801
      %v2819 = vadd.f32 %v2818, %v2802
      %v2820 = vadd.f32 %v2819, %v2803
      %v2821 = vadd.f32 %v2820, %v2804
      %v2822 = vadd.f32 %v2821, %v2805
      %v2823 = vadd.f32 %v2822, %v2806
      %v2824 = vadd.f32 %v2823, %v2807
      %v2825 = vadd.f32 %v2824, %v2808
      %v2826 = vadd.f32 %v2825, %v2809
      %v2827 = vadd.f32 %v2826, %v2810
      %v2828 = vadd.f32 %v2827, %v2811
      %v2829 = vadd.f32 %v2828, %v2812
      %v2830 = vadd.f32 %v2829, %v2813
      %v2831 = vadd.f32 %v2830, %v2814
      %v2832 = vrot.slane %v2831, 4
      %v2833 = vadd.f32 %v2831, %v2832
      %v2834 = vrot.slane %v2833, 2
      %v2835 = vadd.f32 %v2833, %v2834
      %v2836 = vrot.slane %v2835, 1
      %v2837 = vadd.f32 %v2835, %v2836
      %vm2838 = vcmask 1040384
      %v2839 = vsel %vm2838, %v2796, %v2837
      %2840 = vst [vmem:[%s254] sm:$0x3] %v2839
      %p2841 = scmp.lt.s32.totalorder %s20, 1
      %s2842 = scalar_select %p2841, %s20, 1
      %p2843 = scmp.lt.s32.totalorder %s21, 1
      %s2844 = scalar_select %p2843, %s21, 1
      %s2845 = smul.addr %s2844, 18
      %s2846 = smul.addr %s2842, 36
      %s2847 = sadd.s32 %s2845, %s2846
      %s2848 = smul.addr %s2847, 8
      %s2849 = scalar_lea.vmem %s3, %s2848
      %p2850 = scmp.lt.s32.totalorder %s20, 1
      %s2851 = scalar_select %p2850, %s20, 1
      %p2852 = scmp.lt.s32.totalorder %s21, 1
      %s2853 = scalar_select %p2852, %s21, 1
      %s2854 = smul.addr %s2851, 2
      %s2855 = sadd.s32 %s2853, %s2854
      %s2856 = smul.addr %s2855, 2
      %s2857 = scalar_lea.vmem %s4, %s2856
      // Predicated region
      $region33: #{up_forward.4} parent=31 // pred_check
        %p2858 = pneg %p118
      $region34: #{up_forward.4} parent=31 // pred_check_branch
        %2860 = sbr.rel (%p2858) target = $region36
      $region35: #{up_forward.4} parent=31 // pred_region
        _
      $region36: #{up_forward.4} parent=31 // pred_fallthru
        _
      // Predicated region
      $region37: #{up_forward.4} parent=31 // pred_check
        %p2861 = pneg %p146
      $region38: #{up_forward.4} parent=31 // pred_check_branch
        %2863 = sbr.rel (%p2861) target = $region40
      $region39: #{up_forward.4} parent=31 // pred_region
        _
      $region40: #{up_forward.4} parent=31 // pred_fallthru
        _
    $region32: #{up_forward.4} parent=5 // pred_fallthru
      _
    %p2864 = scmp.le.s32.totalorder 2, %s11
    // Predicated region
    $region41: #{up_forward.4} parent=5 // pred_check
      %p2865 = pneg %p2864
    $region42: #{up_forward.4} parent=5 // pred_check_branch
      %2867 = sbr.rel (%p2865) target = $region44
    $region43: #{up_forward.4} parent=5 // pred_region
      %s2868 = ssub.s32 %s11, 2
      // Predicated region
      $region45: #{up_forward.4} parent=43 // pred_check
        %p2869 = pneg %p124
      $region46: #{up_forward.4} parent=43 // pred_check_branch
        %2871 = sbr.rel (%p2869) target = $region48
      $region47: #{up_forward.4} parent=43 // pred_region
        %p2872 = scmp.lt.s32.totalorder %s22, 1
        %s2873 = scalar_select %p2872, %s22, 1
        %p2874 = scmp.lt.s32.totalorder %s23, 1
        %s2875 = scalar_select %p2874, %s23, 1
        %s2876 = smul.addr %s2875, 18
        %s2877 = smul.addr %s2873, 36
        %s2878 = sadd.s32 %s2876, %s2877
        %s2879 = smul.addr %s2878, 8
        %s2880 = scalar_lea.vmem %s3, %s2879
      $region48: #{up_forward.4} parent=43 // pred_fallthru
        _
      // Predicated region
      $region49: #{up_forward.4} parent=43 // pred_check
        %p2881 = pneg %p152
      $region50: #{up_forward.4} parent=43 // pred_check_branch
        %2883 = sbr.rel (%p2881) target = $region52
      $region51: #{up_forward.4} parent=43 // pred_region
        %p2884 = scmp.lt.s32.totalorder %s22, 1
        %s2885 = scalar_select %p2884, %s22, 1
        %p2886 = scmp.lt.s32.totalorder %s23, 1
        %s2887 = scalar_select %p2886, %s23, 1
        %s2888 = smul.addr %s2885, 2
        %s2889 = sadd.s32 %s2887, %s2888
        %s2890 = smul.addr %s2889, 2
        %s2891 = scalar_lea.vmem %s4, %s2890
      $region52: #{up_forward.4} parent=43 // pred_fallthru
        _
    $region44: #{up_forward.4} parent=5 // pred_fallthru
      _
  $region6: #{up_forward.4} parent=0 // loop_footer
    %s15 = sadd.s32 1, %s11
  $region7: #{up_forward.4} parent=0 // loop_footer_branch
    %10 = sbr.rel target = $region3
  $region8: #{up_forward.4} parent=0 // loop_exit
    _

</llo_original>
